<compile_context>
chip_gen: v6e
topology: v6e:2x2x1
jax: 0.10.0
libtpu: 0.0.40
codegen_flags: <defaults>
</compile_context>

<pallas_src>
import functools

import jax
import jax.numpy as jnp
import numpy as np
from jax import lax
from jax.experimental import pallas as pl
from jax.experimental.pallas import tpu as pltpu


# ----------------------------------------------------------------------------
# Fused SMA kernel: one grid step = one batch element, everything in VMEM/vregs.
# Activations are channel-major (d, HW): channels on sublanes, pixels on lanes.
# ----------------------------------------------------------------------------
def _sma_fused_kernel(x_ref, xc_ref, wf_ref, bf_ref, w1t_ref, w2t_ref,
                      wa1_ref, ba1_ref, wa2_ref, ba2_ref,
                      wb1_ref, bb1_ref, wb2_ref, bb2_ref,
                      ws_ref, wlt_ref, bl_ref,
                      o_ref, *, H, W, d):
    HW = H * W

    # flat pixel index (0..HW-1) and x-coordinate (p mod W) along the lane axis.
    pos = lax.broadcasted_iota(jnp.int32, (1, HW), 1)
    xx = xc_ref[...]                                              # (1, HW) int32

    def shift(slab, dy, dx):
        """slab[:, y*W+x] -> slab[:, (y+dy)*W+(x+dx)], zero outside the image.

        A flat roll by dy*W+dx plus a static border mask reproduces zero-padded
        2-D shifting exactly (row wrap-arounds land in the masked region).
        Roll runs in the XLU slot; masks are cheap lane-dense selects."""
        k = dy * W + dx
        rolled = pltpu.roll(slab, (-k) % HW, 1) if k % HW != 0 else slab
        conds = []
        if dy > 0:                      # y + dy < H   <=>  p < (H-dy)*W
            conds.append(pos < (H - dy) * W)
        elif dy < 0:                    # y + dy >= 0  <=>  p >= (-dy)*W
            conds.append(pos >= (-dy) * W)
        if dx > 0:                      # x + dx < W
            conds.append(xx < W - dx)
        elif dx < 0:                    # x + dx >= 0
            conds.append(xx >= -dx)
        if not conds:
            return rolled
        m = conds[0]
        for extra in conds[1:]:
            m = jnp.logical_and(m, extra)
        return jnp.where(m, rolled, 0.0)

    # ---- conv_first: 1x1 (Cin=1) + folded BN + ReLU -> residual (d, HW)
    xv = x_ref[0]                                                 # (1, HW)
    residual = jnp.maximum(wf_ref[...] * xv + bf_ref[...], 0.0)   # (d, HW)

    # ---- ChannelAttention (CBAM): shared 2-layer MLP on [avg, max] pooled cols
    avg = jnp.mean(residual, axis=1, keepdims=True)               # (d, 1)
    mx = jnp.max(residual, axis=1, keepdims=True)                 # (d, 1)
    pooled = jnp.concatenate([avg, mx], axis=1)                   # (d, 2)
    h = jnp.maximum(jnp.dot(w1t_ref[...], pooled,
                            preferred_element_type=jnp.float32), 0.0)   # (dr, 2)
    z = jnp.dot(w2t_ref[...], h, preferred_element_type=jnp.float32)    # (d, 2)
    gate_c = jax.nn.sigmoid(z[:, 0:1] + z[:, 1:2])                # (d, 1)
    ca = residual * gate_c                                        # (d, HW)

    # ---- dilated 3x3 chains: 9 rolled taps stacked on sublanes -> one K=72 dot
    def conv3(src, w_ref, b_ref, dil, relu):
        taps = [shift(src, (ky - 1) * dil, (kx - 1) * dil)
                for ky in range(3) for kx in range(3)]
        stacked = jnp.concatenate(taps, axis=0)                   # (9*d, HW), aligned
        y = jnp.dot(w_ref[...], stacked,
                    preferred_element_type=jnp.float32) + b_ref[...]
        return jnp.maximum(y, 0.0) if relu else y

    h1a = conv3(residual, wa1_ref, ba1_ref, 1, True)              # conv1_1 first conv
    h1b = conv3(residual, wb1_ref, bb1_ref, 2, True)              # conv1_2 first conv
    x2 = conv3(h1a, wa2_ref, ba2_ref, 1, False)                   # conv1_1 second conv
    x4 = conv3(h1b, wb2_ref, bb2_ref, 2, False)                   # conv1_2 second conv
    xs = jnp.maximum(x2 + x4, 0.0)                                # (d, HW)

    # ---- SpatialAttention (CBAM): 7x7 conv over [mean_C, max_C], padding 3
    mean_c = jnp.mean(ca, axis=0, keepdims=True)                  # (1, HW)
    max_c = jnp.max(ca, axis=0, keepdims=True)                    # (1, HW)
    sm = jnp.concatenate([mean_c, max_c], axis=0)                 # (2, HW)

    acc_s = None
    for ky in range(7):
        for kx in range(7):
            slab = shift(sm, ky - 3, kx - 3)                      # (2, HW)
            t = ky * 14 + kx * 2
            contrib = ws_ref[t] * slab[0:1, :] + ws_ref[t + 1] * slab[1:2, :]
            acc_s = contrib if acc_s is None else acc_s + contrib
    gate_s = jax.nn.sigmoid(acc_s)                                # (1, HW)

    sa = ca * gate_s                                              # (d, HW)
    out = jnp.maximum(residual + sa + xs, 0.0)                    # (d, HW)

    # ---- conv_last (1x1 d->ouc + BN + ReLU): lane-dense channel-major store
    yt = jnp.dot(wlt_ref[...], out,
                 preferred_element_type=jnp.float32) + bl_ref[...]    # (ouc, HW)
    o_ref[0] = jnp.maximum(yt, 0.0)


# ----------------------------------------------------------------------------
# Wrapper: NCHW in, NCHW out.  Single pallas_call over grid=(B,).
# ----------------------------------------------------------------------------
def sma_forward(x_nchw, p):
    B, Cin, H, W = x_nchw.shape            # Cin == 1 (module hard-codes it)
    HW = H * W
    d = p['wf'].shape[-1]
    dr = p['w1'].shape[-1]
    ouc = p['wl'].shape[-1]

    x_flat = x_nchw.reshape(B, 1, HW)      # C==1 -> lane-dense (1, HW) blocks
    xcoord = (jnp.arange(HW, dtype=jnp.int32) % W).reshape(1, HW)

    def fixed(shape):
        n = len(shape)
        return pl.BlockSpec(shape, lambda b, _n=n: (0,) * _n)

    def stack_w(w):       # (3,3,d,d) HWIO -> (d, 9*d), cols ordered (tap, c_in)
        return jnp.asarray(w).reshape(9 * d, d).T

    y_flat = pl.pallas_call(
        functools.partial(_sma_fused_kernel, H=H, W=W, d=d),
        out_shape=jax.ShapeDtypeStruct((B, ouc, HW), jnp.float32),
        grid=(B,),
        in_specs=[
            pl.BlockSpec((1, 1, HW), lambda b: (b, 0, 0)),   # x (lane-dense)
            fixed((1, HW)),                                  # x-coords (p mod W)
            fixed((d, 1)), fixed((d, 1)),                    # wf, bf
            fixed((dr, d)), fixed((d, dr)),                  # channel-attn MLP (transposed)
            fixed((d, 9 * d)), fixed((d, 1)),                # wa1 stacked, ba1
            fixed((d, 9 * d)), fixed((d, 1)),                # wa2 stacked, ba2
            fixed((d, 9 * d)), fixed((d, 1)),                # wb1 stacked, bb1
            fixed((d, 9 * d)), fixed((d, 1)),                # wb2 stacked, bb2
            pl.BlockSpec(memory_space=pltpu.MemorySpace.SMEM),  # 7x7 SA taps (98,)
            fixed((ouc, d)), fixed((ouc, 1)),                # wl^T, bl
        ],
        out_specs=pl.BlockSpec((1, ouc, HW), lambda b: (b, 0, 0)),
        compiler_params=pltpu.CompilerParams(
            dimension_semantics=("parallel",)),
    )(x_flat, xcoord,
      p['wf'].reshape(1, d).T, p['bf'].reshape(d, 1),
      p['w1'].T, p['w2'].T,
      stack_w(p['wa1']), p['ba1'].reshape(d, 1),
      stack_w(p['wa2']), p['ba2'].reshape(d, 1),
      stack_w(p['wb1']), p['bb1'].reshape(d, 1),
      stack_w(p['wb2']), p['bb2'].reshape(d, 1),
      p['ws_flat'],
      p['wl'].T, p['bl'].reshape(ouc, 1))

    return y_flat.reshape(B, ouc, H, W)    # channel-major kernel output == NCHW


# ----------------------------------------------------------------------------
# Pure-JAX reference for validation
# ----------------------------------------------------------------------------
def ref_forward(x_nchw, p):
    x = jnp.transpose(x_nchw, (0, 2, 3, 1))

    def c1x1(v, w, b, relu):
        y = jnp.einsum('bhwc,co->bhwo', v, w) + b
        return jnp.maximum(y, 0.0) if relu else y

    def c3x3(v, w, b, dil, relu):
        y = lax.conv_general_dilated(v, w, (1, 1), ((dil, dil), (dil, dil)),
                                     rhs_dilation=(dil, dil),
                                     dimension_numbers=('NHWC', 'HWIO', 'NHWC')) + b
        return jnp.maximum(y, 0.0) if relu else y

    residual = c1x1(x, p['wf'], p['bf'], True)
    avg = residual.mean(axis=(1, 2))
    mx = residual.max(axis=(1, 2))
    mlp = lambda v: jnp.maximum(v @ p['w1'], 0.0) @ p['w2']
    attn = jax.nn.sigmoid(mlp(avg) + mlp(mx))
    ca = residual * attn[:, None, None, :]
    sm = jnp.concatenate([ca.mean(-1, keepdims=True),
                          ca.max(-1, keepdims=True)], axis=-1)
    sconv = lax.conv_general_dilated(sm, p['ws'], (1, 1), ((3, 3), (3, 3)),
                                     dimension_numbers=('NHWC', 'HWIO', 'NHWC'))
    sa = ca * jax.nn.sigmoid(sconv)
    x2 = c3x3(c3x3(residual, p['wa1'], p['ba1'], 1, True), p['wa2'], p['ba2'], 1, False)
    x4 = c3x3(c3x3(residual, p['wb1'], p['bb1'], 2, True), p['wb2'], p['bb2'], 2, False)
    xs = jnp.maximum(x2 + x4, 0.0)
    out = jnp.maximum(residual + sa + xs, 0.0)
    y = c1x1(out, p['wl'], p['bl'], True)
    return jnp.transpose(y, (0, 3, 1, 2))


# ----------------------------------------------------------------------------
# Deterministic parameter construction (BN folded into scale/bias)
# ----------------------------------------------------------------------------
def bn_fold(gamma, beta, mean, var, eps=1e-5):
    s = gamma / jnp.sqrt(var + eps)
    t = beta - mean * s
    return s, t


def fold_conv(w, b, bn):
    s, t = bn_fold(*bn)
    return (w * s).astype(jnp.float32), (b * s + t).astype(jnp.float32)


if __name__ == "__main__":
    B, H, W = 2, 16, 16
    inc, ouc = 1, 16          # conv_first hard-codes 1 input channel in the module
    d = ouc // 2              # 8
    dr = max(1, d // 4)       # channel-attention bottleneck

    key = jax.random.PRNGKey(0)
    ks = list(jax.random.split(key, 24))

    def rnd(i, shape, scale=0.2):
        return (jax.random.normal(ks[i], shape) * scale).astype(jnp.float32)

    def make_bn(i, c):
        kk = jax.random.split(ks[i], 4)
        gamma = (1.0 + 0.1 * jax.random.normal(kk[0], (c,))).astype(jnp.float32)
        beta = (0.1 * jax.random.normal(kk[1], (c,))).astype(jnp.float32)
        mean = (0.1 * jax.random.normal(kk[2], (c,))).astype(jnp.float32)
        var = (1.0 + 0.1 * jax.random.uniform(kk[3], (c,))).astype(jnp.float32)
        return gamma, beta, mean, var

    p = {}
    p['wf'], p['bf'] = fold_conv(rnd(0, (inc, d), 0.5), rnd(1, (d,), 0.1), make_bn(2, d))
    p['w1'] = rnd(3, (d, dr), 0.5)
    p['w2'] = rnd(4, (dr, d), 0.5)
    p['ws'] = rnd(5, (7, 7, 2, 1), 0.3)                 # HWIO 7x7 spatial-attn conv
    p['ws_flat'] = p['ws'][..., 0].reshape(-1)          # (98,) order (ky, kx, c)
    p['wa1'], p['ba1'] = fold_conv(rnd(6, (3, 3, d, d)), rnd(7, (d,), 0.1), make_bn(8, d))
    p['wa2'], p['ba2'] = fold_conv(rnd(9, (3, 3, d, d)), rnd(10, (d,), 0.1), make_bn(11, d))
    p['wb1'], p['bb1'] = fold_conv(rnd(12, (3, 3, d, d)), rnd(13, (d,), 0.1), make_bn(14, d))
    p['wb2'], p['bb2'] = fold_conv(rnd(15, (3, 3, d, d)), rnd(16, (d,), 0.1), make_bn(17, d))
    p['wl'], p['bl'] = fold_conv(rnd(18, (d, ouc), 0.3), rnd(19, (ouc,), 0.1), make_bn(20, ouc))

    x = jax.random.normal(ks[21], (B, inc, H, W), dtype=jnp.float32)   # NCHW input

    y = jax.jit(lambda v: sma_forward(v, p))(x)
    y = jax.block_until_ready(y)

    y_ref = ref_forward(x, p)
    np.testing.assert_allclose(np.asarray(y), np.asarray(y_ref), rtol=2e-3, atol=2e-3)
    assert y.shape == (B, ouc, H, W)
    print("KERNEL_OK")
</pallas_src>

<mosaic_0001>
module attributes {stable_mosaic.version = 11 : i64} {
  func.func @_sma_fused_kernel(%arg0: i32, %arg1: memref<1x1x256xf32, #tpu.memory_space<vmem>>, %arg2: memref<1x256xi32, #tpu.memory_space<vmem>>, %arg3: memref<8x1xf32, #tpu.memory_space<vmem>>, %arg4: memref<8x1xf32, #tpu.memory_space<vmem>>, %arg5: memref<2x8xf32, #tpu.memory_space<vmem>>, %arg6: memref<8x2xf32, #tpu.memory_space<vmem>>, %arg7: memref<8x72xf32, #tpu.memory_space<vmem>>, %arg8: memref<8x1xf32, #tpu.memory_space<vmem>>, %arg9: memref<8x72xf32, #tpu.memory_space<vmem>>, %arg10: memref<8x1xf32, #tpu.memory_space<vmem>>, %arg11: memref<8x72xf32, #tpu.memory_space<vmem>>, %arg12: memref<8x1xf32, #tpu.memory_space<vmem>>, %arg13: memref<8x72xf32, #tpu.memory_space<vmem>>, %arg14: memref<8x1xf32, #tpu.memory_space<vmem>>, %arg15: memref<98xf32, #tpu.memory_space<smem>>, %arg16: memref<16x8xf32, #tpu.memory_space<vmem>>, %arg17: memref<16x1xf32, #tpu.memory_space<vmem>>, %arg18: memref<1x16x256xf32, #tpu.memory_space<vmem>>) attributes {dimension_semantics = [#tpu.dimension_semantics<parallel>], iteration_bounds = array<i64: 2>, scalar_prefetch = 0 : i64, scratch_operands = 0 : i64, tpu.core_type = #tpu.core_type<tc>, window_params = [{transform_indices = @transform_0, window_bounds = array<i64: 1, 1, 256>}, {pipeline_mode = #tpu.pipeline_mode<synchronous>, transform_indices = @transform_1, window_bounds = array<i64: 1, 256>}, {pipeline_mode = #tpu.pipeline_mode<synchronous>, transform_indices = @transform_2, window_bounds = array<i64: 8, 1>}, {pipeline_mode = #tpu.pipeline_mode<synchronous>, transform_indices = @transform_3, window_bounds = array<i64: 8, 1>}, {pipeline_mode = #tpu.pipeline_mode<synchronous>, transform_indices = @transform_4, window_bounds = array<i64: 2, 8>}, {pipeline_mode = #tpu.pipeline_mode<synchronous>, transform_indices = @transform_5, window_bounds = array<i64: 8, 2>}, {pipeline_mode = #tpu.pipeline_mode<synchronous>, transform_indices = @transform_6, window_bounds = array<i64: 8, 72>}, {pipeline_mode = #tpu.pipeline_mode<synchronous>, transform_indices = @transform_7, window_bounds = array<i64: 8, 1>}, {pipeline_mode = #tpu.pipeline_mode<synchronous>, transform_indices = @transform_8, window_bounds = array<i64: 8, 72>}, {pipeline_mode = #tpu.pipeline_mode<synchronous>, transform_indices = @transform_9, window_bounds = array<i64: 8, 1>}, {pipeline_mode = #tpu.pipeline_mode<synchronous>, transform_indices = @transform_10, window_bounds = array<i64: 8, 72>}, {pipeline_mode = #tpu.pipeline_mode<synchronous>, transform_indices = @transform_11, window_bounds = array<i64: 8, 1>}, {pipeline_mode = #tpu.pipeline_mode<synchronous>, transform_indices = @transform_12, window_bounds = array<i64: 8, 72>}, {pipeline_mode = #tpu.pipeline_mode<synchronous>, transform_indices = @transform_13, window_bounds = array<i64: 8, 1>}, {transform_indices = @transform_14, window_bounds = array<i64: 98>}, {pipeline_mode = #tpu.pipeline_mode<synchronous>, transform_indices = @transform_15, window_bounds = array<i64: 16, 8>}, {pipeline_mode = #tpu.pipeline_mode<synchronous>, transform_indices = @transform_16, window_bounds = array<i64: 16, 1>}, {transform_indices = @transform_17, window_bounds = array<i64: 1, 16, 256>}]} {
    %0 = tpu.iota {dimensions = array<i32: 1>} : vector<1x256xi32>
    %c0 = arith.constant 0 : index
    %c0_0 = arith.constant 0 : index
    %1 = vector.load %arg2[%c0, %c0_0] : memref<1x256xi32, #tpu.memory_space<vmem>>, vector<1x256xi32>
    %c0_1 = arith.constant 0 : index
    %c0_2 = arith.constant 0 : index
    %c0_3 = arith.constant 0 : index
    %2 = vector.load %arg1[%c0_1, %c0_2, %c0_3] : memref<1x1x256xf32, #tpu.memory_space<vmem>>, vector<1x1x256xf32>
    %3 = vector.shape_cast %2 : vector<1x1x256xf32> to vector<1x256xf32>
    %c0_4 = arith.constant 0 : index
    %c0_5 = arith.constant 0 : index
    %4 = vector.load %arg3[%c0_4, %c0_5] : memref<8x1xf32, #tpu.memory_space<vmem>>, vector<8x1xf32>
    %5 = vector.broadcast %4 : vector<8x1xf32> to vector<8x256xf32>
    %6 = vector.broadcast %3 : vector<1x256xf32> to vector<8x256xf32>
    %7 = arith.mulf %5, %6 : vector<8x256xf32>
    %c0_6 = arith.constant 0 : index
    %c0_7 = arith.constant 0 : index
    %8 = vector.load %arg4[%c0_6, %c0_7] : memref<8x1xf32, #tpu.memory_space<vmem>>, vector<8x1xf32>
    %9 = vector.broadcast %8 : vector<8x1xf32> to vector<8x256xf32>
    %10 = arith.addf %7, %9 : vector<8x256xf32>
    %cst = arith.constant 0.000000e+00 : f32
    %11 = vector.broadcast %cst : f32 to vector<8x256xf32>
    %12 = arith.maximumf %10, %11 : vector<8x256xf32>
    %cst_8 = arith.constant dense<0.000000e+00> : vector<8xf32>
    %13 = vector.multi_reduction <add>, %12, %cst_8 [1] : vector<8x256xf32> to vector<8xf32>
    %14 = vector.shape_cast %13 : vector<8xf32> to vector<8x1xf32>
    %cst_9 = arith.constant 2.560000e+02 : f32
    %15 = vector.broadcast %cst_9 : f32 to vector<8x1xf32>
    %16 = arith.divf %14, %15 : vector<8x1xf32>
    %cst_10 = arith.constant dense<0xFF800000> : vector<8xf32>
    %17 = vector.multi_reduction <maximumf>, %12, %cst_10 [1] : vector<8x256xf32> to vector<8xf32>
    %18 = vector.shape_cast %17 : vector<8xf32> to vector<8x1xf32>
    %19 = tpu.concatenate %16, %18 in 1 : vector<8x1xf32>, vector<8x1xf32> -> vector<8x2xf32>
    %c0_11 = arith.constant 0 : index
    %c0_12 = arith.constant 0 : index
    %20 = vector.load %arg5[%c0_11, %c0_12] : memref<2x8xf32, #tpu.memory_space<vmem>>, vector<2x8xf32>
    %cst_13 = arith.constant dense<0.000000e+00> : vector<2x2xf32>
    %21 = tpu.matmul %20, %19, %cst_13 {dimension_numbers = #tpu.dot_dimension_numbers<[1], [0], [0], [1], [0, 0, 1, 1], [], []>} : vector<2x8xf32>, vector<8x2xf32>, vector<2x2xf32> -> vector<2x2xf32>
    %cst_14 = arith.constant 0.000000e+00 : f32
    %22 = vector.broadcast %cst_14 : f32 to vector<2x2xf32>
    %23 = arith.maximumf %21, %22 : vector<2x2xf32>
    %c0_15 = arith.constant 0 : index
    %c0_16 = arith.constant 0 : index
    %24 = vector.load %arg6[%c0_15, %c0_16] : memref<8x2xf32, #tpu.memory_space<vmem>>, vector<8x2xf32>
    %cst_17 = arith.constant dense<0.000000e+00> : vector<8x2xf32>
    %25 = tpu.matmul %24, %23, %cst_17 {dimension_numbers = #tpu.dot_dimension_numbers<[1], [0], [0], [1], [0, 0, 1, 1], [], []>} : vector<8x2xf32>, vector<2x2xf32>, vector<8x2xf32> -> vector<8x2xf32>
    %26 = vector.extract_strided_slice %25 {offsets = [0, 0], sizes = [8, 1], strides = [1, 1]} : vector<8x2xf32> to vector<8x1xf32>
    %27 = vector.extract_strided_slice %25 {offsets = [0, 1], sizes = [8, 1], strides = [1, 1]} : vector<8x2xf32> to vector<8x1xf32>
    %28 = arith.addf %26, %27 : vector<8x1xf32>
    %29 = arith.negf %28 : vector<8x1xf32>
    %30 = math.exp %29 : vector<8x1xf32>
    %cst_18 = arith.constant 1.000000e+00 : f32
    %31 = vector.broadcast %cst_18 : f32 to vector<8x1xf32>
    %32 = arith.addf %31, %30 : vector<8x1xf32>
    %33 = arith.divf %31, %32 : vector<8x1xf32>
    %34 = vector.broadcast %33 : vector<8x1xf32> to vector<8x256xf32>
    %35 = arith.mulf %12, %34 : vector<8x256xf32>
    %c17_i32 = arith.constant 17 : i32
    %36 = tpu.dynamic_rotate %12 by %c17_i32 dim 1 : vector<8x256xf32>, i32 -> vector<8x256xf32>
    %c16_i32 = arith.constant 16 : i32
    %37 = vector.broadcast %c16_i32 : i32 to vector<1x256xi32>
    %38 = arith.cmpi sge, %0, %37 : vector<1x256xi32>
    %c1_i32 = arith.constant 1 : i32
    %39 = vector.broadcast %c1_i32 : i32 to vector<1x256xi32>
    %40 = arith.cmpi sge, %1, %39 : vector<1x256xi32>
    %41 = arith.andi %38, %40 : vector<1x256xi1>
    %cst_19 = arith.constant 0.000000e+00 : f32
    %42 = vector.shape_cast %41 : vector<1x256xi1> to vector<1x256xi1>
    %43 = vector.broadcast %42 : vector<1x256xi1> to vector<8x256xi1>
    %44 = vector.broadcast %cst_19 : f32 to vector<8x256xf32>
    %45 = arith.select %43, %36, %44 : vector<8x256xi1>, vector<8x256xf32>
    %c16_i32_20 = arith.constant 16 : i32
    %46 = tpu.dynamic_rotate %12 by %c16_i32_20 dim 1 : vector<8x256xf32>, i32 -> vector<8x256xf32>
    %c16_i32_21 = arith.constant 16 : i32
    %47 = vector.broadcast %c16_i32_21 : i32 to vector<1x256xi32>
    %48 = arith.cmpi sge, %0, %47 : vector<1x256xi32>
    %cst_22 = arith.constant 0.000000e+00 : f32
    %49 = vector.shape_cast %48 : vector<1x256xi1> to vector<1x256xi1>
    %50 = vector.broadcast %49 : vector<1x256xi1> to vector<8x256xi1>
    %51 = vector.broadcast %cst_22 : f32 to vector<8x256xf32>
    %52 = arith.select %50, %46, %51 : vector<8x256xi1>, vector<8x256xf32>
    %c15_i32 = arith.constant 15 : i32
    %53 = tpu.dynamic_rotate %12 by %c15_i32 dim 1 : vector<8x256xf32>, i32 -> vector<8x256xf32>
    %c16_i32_23 = arith.constant 16 : i32
    %54 = vector.broadcast %c16_i32_23 : i32 to vector<1x256xi32>
    %55 = arith.cmpi sge, %0, %54 : vector<1x256xi32>
    %c15_i32_24 = arith.constant 15 : i32
    %56 = vector.broadcast %c15_i32_24 : i32 to vector<1x256xi32>
    %57 = arith.cmpi slt, %1, %56 : vector<1x256xi32>
    %58 = arith.andi %55, %57 : vector<1x256xi1>
    %cst_25 = arith.constant 0.000000e+00 : f32
    %59 = vector.shape_cast %58 : vector<1x256xi1> to vector<1x256xi1>
    %60 = vector.broadcast %59 : vector<1x256xi1> to vector<8x256xi1>
    %61 = vector.broadcast %cst_25 : f32 to vector<8x256xf32>
    %62 = arith.select %60, %53, %61 : vector<8x256xi1>, vector<8x256xf32>
    %c1_i32_26 = arith.constant 1 : i32
    %63 = tpu.dynamic_rotate %12 by %c1_i32_26 dim 1 : vector<8x256xf32>, i32 -> vector<8x256xf32>
    %c1_i32_27 = arith.constant 1 : i32
    %64 = vector.broadcast %c1_i32_27 : i32 to vector<1x256xi32>
    %65 = arith.cmpi sge, %1, %64 : vector<1x256xi32>
    %cst_28 = arith.constant 0.000000e+00 : f32
    %66 = vector.shape_cast %65 : vector<1x256xi1> to vector<1x256xi1>
    %67 = vector.broadcast %66 : vector<1x256xi1> to vector<8x256xi1>
    %68 = vector.broadcast %cst_28 : f32 to vector<8x256xf32>
    %69 = arith.select %67, %63, %68 : vector<8x256xi1>, vector<8x256xf32>
    %c255_i32 = arith.constant 255 : i32
    %70 = tpu.dynamic_rotate %12 by %c255_i32 dim 1 : vector<8x256xf32>, i32 -> vector<8x256xf32>
    %c15_i32_29 = arith.constant 15 : i32
    %71 = vector.broadcast %c15_i32_29 : i32 to vector<1x256xi32>
    %72 = arith.cmpi slt, %1, %71 : vector<1x256xi32>
    %cst_30 = arith.constant 0.000000e+00 : f32
    %73 = vector.shape_cast %72 : vector<1x256xi1> to vector<1x256xi1>
    %74 = vector.broadcast %73 : vector<1x256xi1> to vector<8x256xi1>
    %75 = vector.broadcast %cst_30 : f32 to vector<8x256xf32>
    %76 = arith.select %74, %70, %75 : vector<8x256xi1>, vector<8x256xf32>
    %c241_i32 = arith.constant 241 : i32
    %77 = tpu.dynamic_rotate %12 by %c241_i32 dim 1 : vector<8x256xf32>, i32 -> vector<8x256xf32>
    %c240_i32 = arith.constant 240 : i32
    %78 = vector.broadcast %c240_i32 : i32 to vector<1x256xi32>
    %79 = arith.cmpi slt, %0, %78 : vector<1x256xi32>
    %c1_i32_31 = arith.constant 1 : i32
    %80 = vector.broadcast %c1_i32_31 : i32 to vector<1x256xi32>
    %81 = arith.cmpi sge, %1, %80 : vector<1x256xi32>
    %82 = arith.andi %79, %81 : vector<1x256xi1>
    %cst_32 = arith.constant 0.000000e+00 : f32
    %83 = vector.shape_cast %82 : vector<1x256xi1> to vector<1x256xi1>
    %84 = vector.broadcast %83 : vector<1x256xi1> to vector<8x256xi1>
    %85 = vector.broadcast %cst_32 : f32 to vector<8x256xf32>
    %86 = arith.select %84, %77, %85 : vector<8x256xi1>, vector<8x256xf32>
    %c240_i32_33 = arith.constant 240 : i32
    %87 = tpu.dynamic_rotate %12 by %c240_i32_33 dim 1 : vector<8x256xf32>, i32 -> vector<8x256xf32>
    %c240_i32_34 = arith.constant 240 : i32
    %88 = vector.broadcast %c240_i32_34 : i32 to vector<1x256xi32>
    %89 = arith.cmpi slt, %0, %88 : vector<1x256xi32>
    %cst_35 = arith.constant 0.000000e+00 : f32
    %90 = vector.shape_cast %89 : vector<1x256xi1> to vector<1x256xi1>
    %91 = vector.broadcast %90 : vector<1x256xi1> to vector<8x256xi1>
    %92 = vector.broadcast %cst_35 : f32 to vector<8x256xf32>
    %93 = arith.select %91, %87, %92 : vector<8x256xi1>, vector<8x256xf32>
    %c239_i32 = arith.constant 239 : i32
    %94 = tpu.dynamic_rotate %12 by %c239_i32 dim 1 : vector<8x256xf32>, i32 -> vector<8x256xf32>
    %c240_i32_36 = arith.constant 240 : i32
    %95 = vector.broadcast %c240_i32_36 : i32 to vector<1x256xi32>
    %96 = arith.cmpi slt, %0, %95 : vector<1x256xi32>
    %c15_i32_37 = arith.constant 15 : i32
    %97 = vector.broadcast %c15_i32_37 : i32 to vector<1x256xi32>
    %98 = arith.cmpi slt, %1, %97 : vector<1x256xi32>
    %99 = arith.andi %96, %98 : vector<1x256xi1>
    %cst_38 = arith.constant 0.000000e+00 : f32
    %100 = vector.shape_cast %99 : vector<1x256xi1> to vector<1x256xi1>
    %101 = vector.broadcast %100 : vector<1x256xi1> to vector<8x256xi1>
    %102 = vector.broadcast %cst_38 : f32 to vector<8x256xf32>
    %103 = arith.select %101, %94, %102 : vector<8x256xi1>, vector<8x256xf32>
    %104 = tpu.concatenate %45, %52, %62, %69, %12, %76, %86, %93, %103 in 0 : vector<8x256xf32>, vector<8x256xf32>, vector<8x256xf32>, vector<8x256xf32>, vector<8x256xf32>, vector<8x256xf32>, vector<8x256xf32>, vector<8x256xf32>, vector<8x256xf32> -> vector<72x256xf32>
    %c0_39 = arith.constant 0 : index
    %c0_40 = arith.constant 0 : index
    %105 = vector.load %arg7[%c0_39, %c0_40] : memref<8x72xf32, #tpu.memory_space<vmem>>, vector<8x72xf32>
    %cst_41 = arith.constant dense<0.000000e+00> : vector<8x256xf32>
    %106 = tpu.matmul %105, %104, %cst_41 {dimension_numbers = #tpu.dot_dimension_numbers<[1], [0], [0], [1], [0, 0, 1, 1], [], []>} : vector<8x72xf32>, vector<72x256xf32>, vector<8x256xf32> -> vector<8x256xf32>
    %c0_42 = arith.constant 0 : index
    %c0_43 = arith.constant 0 : index
    %107 = vector.load %arg8[%c0_42, %c0_43] : memref<8x1xf32, #tpu.memory_space<vmem>>, vector<8x1xf32>
    %108 = vector.broadcast %107 : vector<8x1xf32> to vector<8x256xf32>
    %109 = arith.addf %106, %108 : vector<8x256xf32>
    %cst_44 = arith.constant 0.000000e+00 : f32
    %110 = vector.broadcast %cst_44 : f32 to vector<8x256xf32>
    %111 = arith.maximumf %109, %110 : vector<8x256xf32>
    %c34_i32 = arith.constant 34 : i32
    %112 = tpu.dynamic_rotate %12 by %c34_i32 dim 1 : vector<8x256xf32>, i32 -> vector<8x256xf32>
    %c32_i32 = arith.constant 32 : i32
    %113 = vector.broadcast %c32_i32 : i32 to vector<1x256xi32>
    %114 = arith.cmpi sge, %0, %113 : vector<1x256xi32>
    %c2_i32 = arith.constant 2 : i32
    %115 = vector.broadcast %c2_i32 : i32 to vector<1x256xi32>
    %116 = arith.cmpi sge, %1, %115 : vector<1x256xi32>
    %117 = arith.andi %114, %116 : vector<1x256xi1>
    %cst_45 = arith.constant 0.000000e+00 : f32
    %118 = vector.shape_cast %117 : vector<1x256xi1> to vector<1x256xi1>
    %119 = vector.broadcast %118 : vector<1x256xi1> to vector<8x256xi1>
    %120 = vector.broadcast %cst_45 : f32 to vector<8x256xf32>
    %121 = arith.select %119, %112, %120 : vector<8x256xi1>, vector<8x256xf32>
    %c32_i32_46 = arith.constant 32 : i32
    %122 = tpu.dynamic_rotate %12 by %c32_i32_46 dim 1 : vector<8x256xf32>, i32 -> vector<8x256xf32>
    %c32_i32_47 = arith.constant 32 : i32
    %123 = vector.broadcast %c32_i32_47 : i32 to vector<1x256xi32>
    %124 = arith.cmpi sge, %0, %123 : vector<1x256xi32>
    %cst_48 = arith.constant 0.000000e+00 : f32
    %125 = vector.shape_cast %124 : vector<1x256xi1> to vector<1x256xi1>
    %126 = vector.broadcast %125 : vector<1x256xi1> to vector<8x256xi1>
    %127 = vector.broadcast %cst_48 : f32 to vector<8x256xf32>
    %128 = arith.select %126, %122, %127 : vector<8x256xi1>, vector<8x256xf32>
    %c30_i32 = arith.constant 30 : i32
    %129 = tpu.dynamic_rotate %12 by %c30_i32 dim 1 : vector<8x256xf32>, i32 -> vector<8x256xf32>
    %c32_i32_49 = arith.constant 32 : i32
    %130 = vector.broadcast %c32_i32_49 : i32 to vector<1x256xi32>
    %131 = arith.cmpi sge, %0, %130 : vector<1x256xi32>
    %c14_i32 = arith.constant 14 : i32
    %132 = vector.broadcast %c14_i32 : i32 to vector<1x256xi32>
    %133 = arith.cmpi slt, %1, %132 : vector<1x256xi32>
    %134 = arith.andi %131, %133 : vector<1x256xi1>
    %cst_50 = arith.constant 0.000000e+00 : f32
    %135 = vector.shape_cast %134 : vector<1x256xi1> to vector<1x256xi1>
    %136 = vector.broadcast %135 : vector<1x256xi1> to vector<8x256xi1>
    %137 = vector.broadcast %cst_50 : f32 to vector<8x256xf32>
    %138 = arith.select %136, %129, %137 : vector<8x256xi1>, vector<8x256xf32>
    %c2_i32_51 = arith.constant 2 : i32
    %139 = tpu.dynamic_rotate %12 by %c2_i32_51 dim 1 : vector<8x256xf32>, i32 -> vector<8x256xf32>
    %c2_i32_52 = arith.constant 2 : i32
    %140 = vector.broadcast %c2_i32_52 : i32 to vector<1x256xi32>
    %141 = arith.cmpi sge, %1, %140 : vector<1x256xi32>
    %cst_53 = arith.constant 0.000000e+00 : f32
    %142 = vector.shape_cast %141 : vector<1x256xi1> to vector<1x256xi1>
    %143 = vector.broadcast %142 : vector<1x256xi1> to vector<8x256xi1>
    %144 = vector.broadcast %cst_53 : f32 to vector<8x256xf32>
    %145 = arith.select %143, %139, %144 : vector<8x256xi1>, vector<8x256xf32>
    %c254_i32 = arith.constant 254 : i32
    %146 = tpu.dynamic_rotate %12 by %c254_i32 dim 1 : vector<8x256xf32>, i32 -> vector<8x256xf32>
    %c14_i32_54 = arith.constant 14 : i32
    %147 = vector.broadcast %c14_i32_54 : i32 to vector<1x256xi32>
    %148 = arith.cmpi slt, %1, %147 : vector<1x256xi32>
    %cst_55 = arith.constant 0.000000e+00 : f32
    %149 = vector.shape_cast %148 : vector<1x256xi1> to vector<1x256xi1>
    %150 = vector.broadcast %149 : vector<1x256xi1> to vector<8x256xi1>
    %151 = vector.broadcast %cst_55 : f32 to vector<8x256xf32>
    %152 = arith.select %150, %146, %151 : vector<8x256xi1>, vector<8x256xf32>
    %c226_i32 = arith.constant 226 : i32
    %153 = tpu.dynamic_rotate %12 by %c226_i32 dim 1 : vector<8x256xf32>, i32 -> vector<8x256xf32>
    %c224_i32 = arith.constant 224 : i32
    %154 = vector.broadcast %c224_i32 : i32 to vector<1x256xi32>
    %155 = arith.cmpi slt, %0, %154 : vector<1x256xi32>
    %c2_i32_56 = arith.constant 2 : i32
    %156 = vector.broadcast %c2_i32_56 : i32 to vector<1x256xi32>
    %157 = arith.cmpi sge, %1, %156 : vector<1x256xi32>
    %158 = arith.andi %155, %157 : vector<1x256xi1>
    %cst_57 = arith.constant 0.000000e+00 : f32
    %159 = vector.shape_cast %158 : vector<1x256xi1> to vector<1x256xi1>
    %160 = vector.broadcast %159 : vector<1x256xi1> to vector<8x256xi1>
    %161 = vector.broadcast %cst_57 : f32 to vector<8x256xf32>
    %162 = arith.select %160, %153, %161 : vector<8x256xi1>, vector<8x256xf32>
    %c224_i32_58 = arith.constant 224 : i32
    %163 = tpu.dynamic_rotate %12 by %c224_i32_58 dim 1 : vector<8x256xf32>, i32 -> vector<8x256xf32>
    %c224_i32_59 = arith.constant 224 : i32
    %164 = vector.broadcast %c224_i32_59 : i32 to vector<1x256xi32>
    %165 = arith.cmpi slt, %0, %164 : vector<1x256xi32>
    %cst_60 = arith.constant 0.000000e+00 : f32
    %166 = vector.shape_cast %165 : vector<1x256xi1> to vector<1x256xi1>
    %167 = vector.broadcast %166 : vector<1x256xi1> to vector<8x256xi1>
    %168 = vector.broadcast %cst_60 : f32 to vector<8x256xf32>
    %169 = arith.select %167, %163, %168 : vector<8x256xi1>, vector<8x256xf32>
    %c222_i32 = arith.constant 222 : i32
    %170 = tpu.dynamic_rotate %12 by %c222_i32 dim 1 : vector<8x256xf32>, i32 -> vector<8x256xf32>
    %c224_i32_61 = arith.constant 224 : i32
    %171 = vector.broadcast %c224_i32_61 : i32 to vector<1x256xi32>
    %172 = arith.cmpi slt, %0, %171 : vector<1x256xi32>
    %c14_i32_62 = arith.constant 14 : i32
    %173 = vector.broadcast %c14_i32_62 : i32 to vector<1x256xi32>
    %174 = arith.cmpi slt, %1, %173 : vector<1x256xi32>
    %175 = arith.andi %172, %174 : vector<1x256xi1>
    %cst_63 = arith.constant 0.000000e+00 : f32
    %176 = vector.shape_cast %175 : vector<1x256xi1> to vector<1x256xi1>
    %177 = vector.broadcast %176 : vector<1x256xi1> to vector<8x256xi1>
    %178 = vector.broadcast %cst_63 : f32 to vector<8x256xf32>
    %179 = arith.select %177, %170, %178 : vector<8x256xi1>, vector<8x256xf32>
    %180 = tpu.concatenate %121, %128, %138, %145, %12, %152, %162, %169, %179 in 0 : vector<8x256xf32>, vector<8x256xf32>, vector<8x256xf32>, vector<8x256xf32>, vector<8x256xf32>, vector<8x256xf32>, vector<8x256xf32>, vector<8x256xf32>, vector<8x256xf32> -> vector<72x256xf32>
    %c0_64 = arith.constant 0 : index
    %c0_65 = arith.constant 0 : index
    %181 = vector.load %arg11[%c0_64, %c0_65] : memref<8x72xf32, #tpu.memory_space<vmem>>, vector<8x72xf32>
    %cst_66 = arith.constant dense<0.000000e+00> : vector<8x256xf32>
    %182 = tpu.matmul %181, %180, %cst_66 {dimension_numbers = #tpu.dot_dimension_numbers<[1], [0], [0], [1], [0, 0, 1, 1], [], []>} : vector<8x72xf32>, vector<72x256xf32>, vector<8x256xf32> -> vector<8x256xf32>
    %c0_67 = arith.constant 0 : index
    %c0_68 = arith.constant 0 : index
    %183 = vector.load %arg12[%c0_67, %c0_68] : memref<8x1xf32, #tpu.memory_space<vmem>>, vector<8x1xf32>
    %184 = vector.broadcast %183 : vector<8x1xf32> to vector<8x256xf32>
    %185 = arith.addf %182, %184 : vector<8x256xf32>
    %cst_69 = arith.constant 0.000000e+00 : f32
    %186 = vector.broadcast %cst_69 : f32 to vector<8x256xf32>
    %187 = arith.maximumf %185, %186 : vector<8x256xf32>
    %c17_i32_70 = arith.constant 17 : i32
    %188 = tpu.dynamic_rotate %111 by %c17_i32_70 dim 1 : vector<8x256xf32>, i32 -> vector<8x256xf32>
    %c16_i32_71 = arith.constant 16 : i32
    %189 = vector.broadcast %c16_i32_71 : i32 to vector<1x256xi32>
    %190 = arith.cmpi sge, %0, %189 : vector<1x256xi32>
    %c1_i32_72 = arith.constant 1 : i32
    %191 = vector.broadcast %c1_i32_72 : i32 to vector<1x256xi32>
    %192 = arith.cmpi sge, %1, %191 : vector<1x256xi32>
    %193 = arith.andi %190, %192 : vector<1x256xi1>
    %cst_73 = arith.constant 0.000000e+00 : f32
    %194 = vector.shape_cast %193 : vector<1x256xi1> to vector<1x256xi1>
    %195 = vector.broadcast %194 : vector<1x256xi1> to vector<8x256xi1>
    %196 = vector.broadcast %cst_73 : f32 to vector<8x256xf32>
    %197 = arith.select %195, %188, %196 : vector<8x256xi1>, vector<8x256xf32>
    %c16_i32_74 = arith.constant 16 : i32
    %198 = tpu.dynamic_rotate %111 by %c16_i32_74 dim 1 : vector<8x256xf32>, i32 -> vector<8x256xf32>
    %c16_i32_75 = arith.constant 16 : i32
    %199 = vector.broadcast %c16_i32_75 : i32 to vector<1x256xi32>
    %200 = arith.cmpi sge, %0, %199 : vector<1x256xi32>
    %cst_76 = arith.constant 0.000000e+00 : f32
    %201 = vector.shape_cast %200 : vector<1x256xi1> to vector<1x256xi1>
    %202 = vector.broadcast %201 : vector<1x256xi1> to vector<8x256xi1>
    %203 = vector.broadcast %cst_76 : f32 to vector<8x256xf32>
    %204 = arith.select %202, %198, %203 : vector<8x256xi1>, vector<8x256xf32>
    %c15_i32_77 = arith.constant 15 : i32
    %205 = tpu.dynamic_rotate %111 by %c15_i32_77 dim 1 : vector<8x256xf32>, i32 -> vector<8x256xf32>
    %c16_i32_78 = arith.constant 16 : i32
    %206 = vector.broadcast %c16_i32_78 : i32 to vector<1x256xi32>
    %207 = arith.cmpi sge, %0, %206 : vector<1x256xi32>
    %c15_i32_79 = arith.constant 15 : i32
    %208 = vector.broadcast %c15_i32_79 : i32 to vector<1x256xi32>
    %209 = arith.cmpi slt, %1, %208 : vector<1x256xi32>
    %210 = arith.andi %207, %209 : vector<1x256xi1>
    %cst_80 = arith.constant 0.000000e+00 : f32
    %211 = vector.shape_cast %210 : vector<1x256xi1> to vector<1x256xi1>
    %212 = vector.broadcast %211 : vector<1x256xi1> to vector<8x256xi1>
    %213 = vector.broadcast %cst_80 : f32 to vector<8x256xf32>
    %214 = arith.select %212, %205, %213 : vector<8x256xi1>, vector<8x256xf32>
    %c1_i32_81 = arith.constant 1 : i32
    %215 = tpu.dynamic_rotate %111 by %c1_i32_81 dim 1 : vector<8x256xf32>, i32 -> vector<8x256xf32>
    %c1_i32_82 = arith.constant 1 : i32
    %216 = vector.broadcast %c1_i32_82 : i32 to vector<1x256xi32>
    %217 = arith.cmpi sge, %1, %216 : vector<1x256xi32>
    %cst_83 = arith.constant 0.000000e+00 : f32
    %218 = vector.shape_cast %217 : vector<1x256xi1> to vector<1x256xi1>
    %219 = vector.broadcast %218 : vector<1x256xi1> to vector<8x256xi1>
    %220 = vector.broadcast %cst_83 : f32 to vector<8x256xf32>
    %221 = arith.select %219, %215, %220 : vector<8x256xi1>, vector<8x256xf32>
    %c255_i32_84 = arith.constant 255 : i32
    %222 = tpu.dynamic_rotate %111 by %c255_i32_84 dim 1 : vector<8x256xf32>, i32 -> vector<8x256xf32>
    %c15_i32_85 = arith.constant 15 : i32
    %223 = vector.broadcast %c15_i32_85 : i32 to vector<1x256xi32>
    %224 = arith.cmpi slt, %1, %223 : vector<1x256xi32>
    %cst_86 = arith.constant 0.000000e+00 : f32
    %225 = vector.shape_cast %224 : vector<1x256xi1> to vector<1x256xi1>
    %226 = vector.broadcast %225 : vector<1x256xi1> to vector<8x256xi1>
    %227 = vector.broadcast %cst_86 : f32 to vector<8x256xf32>
    %228 = arith.select %226, %222, %227 : vector<8x256xi1>, vector<8x256xf32>
    %c241_i32_87 = arith.constant 241 : i32
    %229 = tpu.dynamic_rotate %111 by %c241_i32_87 dim 1 : vector<8x256xf32>, i32 -> vector<8x256xf32>
    %c240_i32_88 = arith.constant 240 : i32
    %230 = vector.broadcast %c240_i32_88 : i32 to vector<1x256xi32>
    %231 = arith.cmpi slt, %0, %230 : vector<1x256xi32>
    %c1_i32_89 = arith.constant 1 : i32
    %232 = vector.broadcast %c1_i32_89 : i32 to vector<1x256xi32>
    %233 = arith.cmpi sge, %1, %232 : vector<1x256xi32>
    %234 = arith.andi %231, %233 : vector<1x256xi1>
    %cst_90 = arith.constant 0.000000e+00 : f32
    %235 = vector.shape_cast %234 : vector<1x256xi1> to vector<1x256xi1>
    %236 = vector.broadcast %235 : vector<1x256xi1> to vector<8x256xi1>
    %237 = vector.broadcast %cst_90 : f32 to vector<8x256xf32>
    %238 = arith.select %236, %229, %237 : vector<8x256xi1>, vector<8x256xf32>
    %c240_i32_91 = arith.constant 240 : i32
    %239 = tpu.dynamic_rotate %111 by %c240_i32_91 dim 1 : vector<8x256xf32>, i32 -> vector<8x256xf32>
    %c240_i32_92 = arith.constant 240 : i32
    %240 = vector.broadcast %c240_i32_92 : i32 to vector<1x256xi32>
    %241 = arith.cmpi slt, %0, %240 : vector<1x256xi32>
    %cst_93 = arith.constant 0.000000e+00 : f32
    %242 = vector.shape_cast %241 : vector<1x256xi1> to vector<1x256xi1>
    %243 = vector.broadcast %242 : vector<1x256xi1> to vector<8x256xi1>
    %244 = vector.broadcast %cst_93 : f32 to vector<8x256xf32>
    %245 = arith.select %243, %239, %244 : vector<8x256xi1>, vector<8x256xf32>
    %c239_i32_94 = arith.constant 239 : i32
    %246 = tpu.dynamic_rotate %111 by %c239_i32_94 dim 1 : vector<8x256xf32>, i32 -> vector<8x256xf32>
    %c240_i32_95 = arith.constant 240 : i32
    %247 = vector.broadcast %c240_i32_95 : i32 to vector<1x256xi32>
    %248 = arith.cmpi slt, %0, %247 : vector<1x256xi32>
    %c15_i32_96 = arith.constant 15 : i32
    %249 = vector.broadcast %c15_i32_96 : i32 to vector<1x256xi32>
    %250 = arith.cmpi slt, %1, %249 : vector<1x256xi32>
    %251 = arith.andi %248, %250 : vector<1x256xi1>
    %cst_97 = arith.constant 0.000000e+00 : f32
    %252 = vector.shape_cast %251 : vector<1x256xi1> to vector<1x256xi1>
    %253 = vector.broadcast %252 : vector<1x256xi1> to vector<8x256xi1>
    %254 = vector.broadcast %cst_97 : f32 to vector<8x256xf32>
    %255 = arith.select %253, %246, %254 : vector<8x256xi1>, vector<8x256xf32>
    %256 = tpu.concatenate %197, %204, %214, %221, %111, %228, %238, %245, %255 in 0 : vector<8x256xf32>, vector<8x256xf32>, vector<8x256xf32>, vector<8x256xf32>, vector<8x256xf32>, vector<8x256xf32>, vector<8x256xf32>, vector<8x256xf32>, vector<8x256xf32> -> vector<72x256xf32>
    %c0_98 = arith.constant 0 : index
    %c0_99 = arith.constant 0 : index
    %257 = vector.load %arg9[%c0_98, %c0_99] : memref<8x72xf32, #tpu.memory_space<vmem>>, vector<8x72xf32>
    %cst_100 = arith.constant dense<0.000000e+00> : vector<8x256xf32>
    %258 = tpu.matmul %257, %256, %cst_100 {dimension_numbers = #tpu.dot_dimension_numbers<[1], [0], [0], [1], [0, 0, 1, 1], [], []>} : vector<8x72xf32>, vector<72x256xf32>, vector<8x256xf32> -> vector<8x256xf32>
    %c0_101 = arith.constant 0 : index
    %c0_102 = arith.constant 0 : index
    %259 = vector.load %arg10[%c0_101, %c0_102] : memref<8x1xf32, #tpu.memory_space<vmem>>, vector<8x1xf32>
    %260 = vector.broadcast %259 : vector<8x1xf32> to vector<8x256xf32>
    %261 = arith.addf %258, %260 : vector<8x256xf32>
    %c34_i32_103 = arith.constant 34 : i32
    %262 = tpu.dynamic_rotate %187 by %c34_i32_103 dim 1 : vector<8x256xf32>, i32 -> vector<8x256xf32>
    %c32_i32_104 = arith.constant 32 : i32
    %263 = vector.broadcast %c32_i32_104 : i32 to vector<1x256xi32>
    %264 = arith.cmpi sge, %0, %263 : vector<1x256xi32>
    %c2_i32_105 = arith.constant 2 : i32
    %265 = vector.broadcast %c2_i32_105 : i32 to vector<1x256xi32>
    %266 = arith.cmpi sge, %1, %265 : vector<1x256xi32>
    %267 = arith.andi %264, %266 : vector<1x256xi1>
    %cst_106 = arith.constant 0.000000e+00 : f32
    %268 = vector.shape_cast %267 : vector<1x256xi1> to vector<1x256xi1>
    %269 = vector.broadcast %268 : vector<1x256xi1> to vector<8x256xi1>
    %270 = vector.broadcast %cst_106 : f32 to vector<8x256xf32>
    %271 = arith.select %269, %262, %270 : vector<8x256xi1>, vector<8x256xf32>
    %c32_i32_107 = arith.constant 32 : i32
    %272 = tpu.dynamic_rotate %187 by %c32_i32_107 dim 1 : vector<8x256xf32>, i32 -> vector<8x256xf32>
    %c32_i32_108 = arith.constant 32 : i32
    %273 = vector.broadcast %c32_i32_108 : i32 to vector<1x256xi32>
    %274 = arith.cmpi sge, %0, %273 : vector<1x256xi32>
    %cst_109 = arith.constant 0.000000e+00 : f32
    %275 = vector.shape_cast %274 : vector<1x256xi1> to vector<1x256xi1>
    %276 = vector.broadcast %275 : vector<1x256xi1> to vector<8x256xi1>
    %277 = vector.broadcast %cst_109 : f32 to vector<8x256xf32>
    %278 = arith.select %276, %272, %277 : vector<8x256xi1>, vector<8x256xf32>
    %c30_i32_110 = arith.constant 30 : i32
    %279 = tpu.dynamic_rotate %187 by %c30_i32_110 dim 1 : vector<8x256xf32>, i32 -> vector<8x256xf32>
    %c32_i32_111 = arith.constant 32 : i32
    %280 = vector.broadcast %c32_i32_111 : i32 to vector<1x256xi32>
    %281 = arith.cmpi sge, %0, %280 : vector<1x256xi32>
    %c14_i32_112 = arith.constant 14 : i32
    %282 = vector.broadcast %c14_i32_112 : i32 to vector<1x256xi32>
    %283 = arith.cmpi slt, %1, %282 : vector<1x256xi32>
    %284 = arith.andi %281, %283 : vector<1x256xi1>
    %cst_113 = arith.constant 0.000000e+00 : f32
    %285 = vector.shape_cast %284 : vector<1x256xi1> to vector<1x256xi1>
    %286 = vector.broadcast %285 : vector<1x256xi1> to vector<8x256xi1>
    %287 = vector.broadcast %cst_113 : f32 to vector<8x256xf32>
    %288 = arith.select %286, %279, %287 : vector<8x256xi1>, vector<8x256xf32>
    %c2_i32_114 = arith.constant 2 : i32
    %289 = tpu.dynamic_rotate %187 by %c2_i32_114 dim 1 : vector<8x256xf32>, i32 -> vector<8x256xf32>
    %c2_i32_115 = arith.constant 2 : i32
    %290 = vector.broadcast %c2_i32_115 : i32 to vector<1x256xi32>
    %291 = arith.cmpi sge, %1, %290 : vector<1x256xi32>
    %cst_116 = arith.constant 0.000000e+00 : f32
    %292 = vector.shape_cast %291 : vector<1x256xi1> to vector<1x256xi1>
    %293 = vector.broadcast %292 : vector<1x256xi1> to vector<8x256xi1>
    %294 = vector.broadcast %cst_116 : f32 to vector<8x256xf32>
    %295 = arith.select %293, %289, %294 : vector<8x256xi1>, vector<8x256xf32>
    %c254_i32_117 = arith.constant 254 : i32
    %296 = tpu.dynamic_rotate %187 by %c254_i32_117 dim 1 : vector<8x256xf32>, i32 -> vector<8x256xf32>
    %c14_i32_118 = arith.constant 14 : i32
    %297 = vector.broadcast %c14_i32_118 : i32 to vector<1x256xi32>
    %298 = arith.cmpi slt, %1, %297 : vector<1x256xi32>
    %cst_119 = arith.constant 0.000000e+00 : f32
    %299 = vector.shape_cast %298 : vector<1x256xi1> to vector<1x256xi1>
    %300 = vector.broadcast %299 : vector<1x256xi1> to vector<8x256xi1>
    %301 = vector.broadcast %cst_119 : f32 to vector<8x256xf32>
    %302 = arith.select %300, %296, %301 : vector<8x256xi1>, vector<8x256xf32>
    %c226_i32_120 = arith.constant 226 : i32
    %303 = tpu.dynamic_rotate %187 by %c226_i32_120 dim 1 : vector<8x256xf32>, i32 -> vector<8x256xf32>
    %c224_i32_121 = arith.constant 224 : i32
    %304 = vector.broadcast %c224_i32_121 : i32 to vector<1x256xi32>
    %305 = arith.cmpi slt, %0, %304 : vector<1x256xi32>
    %c2_i32_122 = arith.constant 2 : i32
    %306 = vector.broadcast %c2_i32_122 : i32 to vector<1x256xi32>
    %307 = arith.cmpi sge, %1, %306 : vector<1x256xi32>
    %308 = arith.andi %305, %307 : vector<1x256xi1>
    %cst_123 = arith.constant 0.000000e+00 : f32
    %309 = vector.shape_cast %308 : vector<1x256xi1> to vector<1x256xi1>
    %310 = vector.broadcast %309 : vector<1x256xi1> to vector<8x256xi1>
    %311 = vector.broadcast %cst_123 : f32 to vector<8x256xf32>
    %312 = arith.select %310, %303, %311 : vector<8x256xi1>, vector<8x256xf32>
    %c224_i32_124 = arith.constant 224 : i32
    %313 = tpu.dynamic_rotate %187 by %c224_i32_124 dim 1 : vector<8x256xf32>, i32 -> vector<8x256xf32>
    %c224_i32_125 = arith.constant 224 : i32
    %314 = vector.broadcast %c224_i32_125 : i32 to vector<1x256xi32>
    %315 = arith.cmpi slt, %0, %314 : vector<1x256xi32>
    %cst_126 = arith.constant 0.000000e+00 : f32
    %316 = vector.shape_cast %315 : vector<1x256xi1> to vector<1x256xi1>
    %317 = vector.broadcast %316 : vector<1x256xi1> to vector<8x256xi1>
    %318 = vector.broadcast %cst_126 : f32 to vector<8x256xf32>
    %319 = arith.select %317, %313, %318 : vector<8x256xi1>, vector<8x256xf32>
    %c222_i32_127 = arith.constant 222 : i32
    %320 = tpu.dynamic_rotate %187 by %c222_i32_127 dim 1 : vector<8x256xf32>, i32 -> vector<8x256xf32>
    %c224_i32_128 = arith.constant 224 : i32
    %321 = vector.broadcast %c224_i32_128 : i32 to vector<1x256xi32>
    %322 = arith.cmpi slt, %0, %321 : vector<1x256xi32>
    %c14_i32_129 = arith.constant 14 : i32
    %323 = vector.broadcast %c14_i32_129 : i32 to vector<1x256xi32>
    %324 = arith.cmpi slt, %1, %323 : vector<1x256xi32>
    %325 = arith.andi %322, %324 : vector<1x256xi1>
    %cst_130 = arith.constant 0.000000e+00 : f32
    %326 = vector.shape_cast %325 : vector<1x256xi1> to vector<1x256xi1>
    %327 = vector.broadcast %326 : vector<1x256xi1> to vector<8x256xi1>
    %328 = vector.broadcast %cst_130 : f32 to vector<8x256xf32>
    %329 = arith.select %327, %320, %328 : vector<8x256xi1>, vector<8x256xf32>
    %330 = tpu.concatenate %271, %278, %288, %295, %187, %302, %312, %319, %329 in 0 : vector<8x256xf32>, vector<8x256xf32>, vector<8x256xf32>, vector<8x256xf32>, vector<8x256xf32>, vector<8x256xf32>, vector<8x256xf32>, vector<8x256xf32>, vector<8x256xf32> -> vector<72x256xf32>
    %c0_131 = arith.constant 0 : index
    %c0_132 = arith.constant 0 : index
    %331 = vector.load %arg13[%c0_131, %c0_132] : memref<8x72xf32, #tpu.memory_space<vmem>>, vector<8x72xf32>
    %cst_133 = arith.constant dense<0.000000e+00> : vector<8x256xf32>
    %332 = tpu.matmul %331, %330, %cst_133 {dimension_numbers = #tpu.dot_dimension_numbers<[1], [0], [0], [1], [0, 0, 1, 1], [], []>} : vector<8x72xf32>, vector<72x256xf32>, vector<8x256xf32> -> vector<8x256xf32>
    %c0_134 = arith.constant 0 : index
    %c0_135 = arith.constant 0 : index
    %333 = vector.load %arg14[%c0_134, %c0_135] : memref<8x1xf32, #tpu.memory_space<vmem>>, vector<8x1xf32>
    %334 = vector.broadcast %333 : vector<8x1xf32> to vector<8x256xf32>
    %335 = arith.addf %332, %334 : vector<8x256xf32>
    %336 = arith.addf %261, %335 : vector<8x256xf32>
    %cst_136 = arith.constant 0.000000e+00 : f32
    %337 = vector.broadcast %cst_136 : f32 to vector<8x256xf32>
    %338 = arith.maximumf %336, %337 : vector<8x256xf32>
    %cst_137 = arith.constant dense<0.000000e+00> : vector<256xf32>
    %339 = vector.multi_reduction <add>, %35, %cst_137 [0] : vector<8x256xf32> to vector<256xf32>
    %340 = vector.shape_cast %339 : vector<256xf32> to vector<1x256xf32>
    %cst_138 = arith.constant 8.000000e+00 : f32
    %341 = vector.broadcast %cst_138 : f32 to vector<1x256xf32>
    %342 = arith.divf %340, %341 : vector<1x256xf32>
    %cst_139 = arith.constant dense<0xFF800000> : vector<256xf32>
    %343 = vector.multi_reduction <maximumf>, %35, %cst_139 [0] : vector<8x256xf32> to vector<256xf32>
    %344 = vector.shape_cast %343 : vector<256xf32> to vector<1x256xf32>
    %345 = tpu.concatenate %342, %344 in 0 : vector<1x256xf32>, vector<1x256xf32> -> vector<2x256xf32>
    %c51_i32 = arith.constant 51 : i32
    %346 = tpu.dynamic_rotate %345 by %c51_i32 dim 1 : vector<2x256xf32>, i32 -> vector<2x256xf32>
    %c48_i32 = arith.constant 48 : i32
    %347 = vector.broadcast %c48_i32 : i32 to vector<1x256xi32>
    %348 = arith.cmpi sge, %0, %347 : vector<1x256xi32>
    %c3_i32 = arith.constant 3 : i32
    %349 = vector.broadcast %c3_i32 : i32 to vector<1x256xi32>
    %350 = arith.cmpi sge, %1, %349 : vector<1x256xi32>
    %351 = arith.andi %348, %350 : vector<1x256xi1>
    %cst_140 = arith.constant 0.000000e+00 : f32
    %352 = vector.shape_cast %351 : vector<1x256xi1> to vector<1x256xi1>
    %353 = vector.broadcast %352 : vector<1x256xi1> to vector<2x256xi1>
    %354 = vector.broadcast %cst_140 : f32 to vector<2x256xf32>
    %355 = arith.select %353, %346, %354 : vector<2x256xi1>, vector<2x256xf32>
    %c0_141 = arith.constant 0 : index
    %356 = memref.load %arg15[%c0_141] : memref<98xf32, #tpu.memory_space<smem>>
    %357 = vector.extract_strided_slice %355 {offsets = [0, 0], sizes = [1, 256], strides = [1, 1]} : vector<2x256xf32> to vector<1x256xf32>
    %358 = vector.broadcast %356 : f32 to vector<1x256xf32>
    %359 = arith.mulf %358, %357 : vector<1x256xf32>
    %c1 = arith.constant 1 : index
    %360 = memref.load %arg15[%c1] : memref<98xf32, #tpu.memory_space<smem>>
    %361 = vector.extract_strided_slice %355 {offsets = [1, 0], sizes = [1, 256], strides = [1, 1]} : vector<2x256xf32> to vector<1x256xf32>
    %362 = vector.broadcast %360 : f32 to vector<1x256xf32>
    %363 = arith.mulf %362, %361 : vector<1x256xf32>
    %364 = arith.addf %359, %363 : vector<1x256xf32>
    %c50_i32 = arith.constant 50 : i32
    %365 = tpu.dynamic_rotate %345 by %c50_i32 dim 1 : vector<2x256xf32>, i32 -> vector<2x256xf32>
    %c48_i32_142 = arith.constant 48 : i32
    %366 = vector.broadcast %c48_i32_142 : i32 to vector<1x256xi32>
    %367 = arith.cmpi sge, %0, %366 : vector<1x256xi32>
    %c2_i32_143 = arith.constant 2 : i32
    %368 = vector.broadcast %c2_i32_143 : i32 to vector<1x256xi32>
    %369 = arith.cmpi sge, %1, %368 : vector<1x256xi32>
    %370 = arith.andi %367, %369 : vector<1x256xi1>
    %cst_144 = arith.constant 0.000000e+00 : f32
    %371 = vector.shape_cast %370 : vector<1x256xi1> to vector<1x256xi1>
    %372 = vector.broadcast %371 : vector<1x256xi1> to vector<2x256xi1>
    %373 = vector.broadcast %cst_144 : f32 to vector<2x256xf32>
    %374 = arith.select %372, %365, %373 : vector<2x256xi1>, vector<2x256xf32>
    %c2 = arith.constant 2 : index
    %375 = memref.load %arg15[%c2] : memref<98xf32, #tpu.memory_space<smem>>
    %376 = vector.extract_strided_slice %374 {offsets = [0, 0], sizes = [1, 256], strides = [1, 1]} : vector<2x256xf32> to vector<1x256xf32>
    %377 = vector.broadcast %375 : f32 to vector<1x256xf32>
    %378 = arith.mulf %377, %376 : vector<1x256xf32>
    %c3 = arith.constant 3 : index
    %379 = memref.load %arg15[%c3] : memref<98xf32, #tpu.memory_space<smem>>
    %380 = vector.extract_strided_slice %374 {offsets = [1, 0], sizes = [1, 256], strides = [1, 1]} : vector<2x256xf32> to vector<1x256xf32>
    %381 = vector.broadcast %379 : f32 to vector<1x256xf32>
    %382 = arith.mulf %381, %380 : vector<1x256xf32>
    %383 = arith.addf %378, %382 : vector<1x256xf32>
    %384 = arith.addf %364, %383 : vector<1x256xf32>
    %c49_i32 = arith.constant 49 : i32
    %385 = tpu.dynamic_rotate %345 by %c49_i32 dim 1 : vector<2x256xf32>, i32 -> vector<2x256xf32>
    %c48_i32_145 = arith.constant 48 : i32
    %386 = vector.broadcast %c48_i32_145 : i32 to vector<1x256xi32>
    %387 = arith.cmpi sge, %0, %386 : vector<1x256xi32>
    %c1_i32_146 = arith.constant 1 : i32
    %388 = vector.broadcast %c1_i32_146 : i32 to vector<1x256xi32>
    %389 = arith.cmpi sge, %1, %388 : vector<1x256xi32>
    %390 = arith.andi %387, %389 : vector<1x256xi1>
    %cst_147 = arith.constant 0.000000e+00 : f32
    %391 = vector.shape_cast %390 : vector<1x256xi1> to vector<1x256xi1>
    %392 = vector.broadcast %391 : vector<1x256xi1> to vector<2x256xi1>
    %393 = vector.broadcast %cst_147 : f32 to vector<2x256xf32>
    %394 = arith.select %392, %385, %393 : vector<2x256xi1>, vector<2x256xf32>
    %c4 = arith.constant 4 : index
    %395 = memref.load %arg15[%c4] : memref<98xf32, #tpu.memory_space<smem>>
    %396 = vector.extract_strided_slice %394 {offsets = [0, 0], sizes = [1, 256], strides = [1, 1]} : vector<2x256xf32> to vector<1x256xf32>
    %397 = vector.broadcast %395 : f32 to vector<1x256xf32>
    %398 = arith.mulf %397, %396 : vector<1x256xf32>
    %c5 = arith.constant 5 : index
    %399 = memref.load %arg15[%c5] : memref<98xf32, #tpu.memory_space<smem>>
    %400 = vector.extract_strided_slice %394 {offsets = [1, 0], sizes = [1, 256], strides = [1, 1]} : vector<2x256xf32> to vector<1x256xf32>
    %401 = vector.broadcast %399 : f32 to vector<1x256xf32>
    %402 = arith.mulf %401, %400 : vector<1x256xf32>
    %403 = arith.addf %398, %402 : vector<1x256xf32>
    %404 = arith.addf %384, %403 : vector<1x256xf32>
    %c48_i32_148 = arith.constant 48 : i32
    %405 = tpu.dynamic_rotate %345 by %c48_i32_148 dim 1 : vector<2x256xf32>, i32 -> vector<2x256xf32>
    %c48_i32_149 = arith.constant 48 : i32
    %406 = vector.broadcast %c48_i32_149 : i32 to vector<1x256xi32>
    %407 = arith.cmpi sge, %0, %406 : vector<1x256xi32>
    %cst_150 = arith.constant 0.000000e+00 : f32
    %408 = vector.shape_cast %407 : vector<1x256xi1> to vector<1x256xi1>
    %409 = vector.broadcast %408 : vector<1x256xi1> to vector<2x256xi1>
    %410 = vector.broadcast %cst_150 : f32 to vector<2x256xf32>
    %411 = arith.select %409, %405, %410 : vector<2x256xi1>, vector<2x256xf32>
    %c6 = arith.constant 6 : index
    %412 = memref.load %arg15[%c6] : memref<98xf32, #tpu.memory_space<smem>>
    %413 = vector.extract_strided_slice %411 {offsets = [0, 0], sizes = [1, 256], strides = [1, 1]} : vector<2x256xf32> to vector<1x256xf32>
    %414 = vector.broadcast %412 : f32 to vector<1x256xf32>
    %415 = arith.mulf %414, %413 : vector<1x256xf32>
    %c7 = arith.constant 7 : index
    %416 = memref.load %arg15[%c7] : memref<98xf32, #tpu.memory_space<smem>>
    %417 = vector.extract_strided_slice %411 {offsets = [1, 0], sizes = [1, 256], strides = [1, 1]} : vector<2x256xf32> to vector<1x256xf32>
    %418 = vector.broadcast %416 : f32 to vector<1x256xf32>
    %419 = arith.mulf %418, %417 : vector<1x256xf32>
    %420 = arith.addf %415, %419 : vector<1x256xf32>
    %421 = arith.addf %404, %420 : vector<1x256xf32>
    %c47_i32 = arith.constant 47 : i32
    %422 = tpu.dynamic_rotate %345 by %c47_i32 dim 1 : vector<2x256xf32>, i32 -> vector<2x256xf32>
    %c48_i32_151 = arith.constant 48 : i32
    %423 = vector.broadcast %c48_i32_151 : i32 to vector<1x256xi32>
    %424 = arith.cmpi sge, %0, %423 : vector<1x256xi32>
    %c15_i32_152 = arith.constant 15 : i32
    %425 = vector.broadcast %c15_i32_152 : i32 to vector<1x256xi32>
    %426 = arith.cmpi slt, %1, %425 : vector<1x256xi32>
    %427 = arith.andi %424, %426 : vector<1x256xi1>
    %cst_153 = arith.constant 0.000000e+00 : f32
    %428 = vector.shape_cast %427 : vector<1x256xi1> to vector<1x256xi1>
    %429 = vector.broadcast %428 : vector<1x256xi1> to vector<2x256xi1>
    %430 = vector.broadcast %cst_153 : f32 to vector<2x256xf32>
    %431 = arith.select %429, %422, %430 : vector<2x256xi1>, vector<2x256xf32>
    %c8 = arith.constant 8 : index
    %432 = memref.load %arg15[%c8] : memref<98xf32, #tpu.memory_space<smem>>
    %433 = vector.extract_strided_slice %431 {offsets = [0, 0], sizes = [1, 256], strides = [1, 1]} : vector<2x256xf32> to vector<1x256xf32>
    %434 = vector.broadcast %432 : f32 to vector<1x256xf32>
    %435 = arith.mulf %434, %433 : vector<1x256xf32>
    %c9 = arith.constant 9 : index
    %436 = memref.load %arg15[%c9] : memref<98xf32, #tpu.memory_space<smem>>
    %437 = vector.extract_strided_slice %431 {offsets = [1, 0], sizes = [1, 256], strides = [1, 1]} : vector<2x256xf32> to vector<1x256xf32>
    %438 = vector.broadcast %436 : f32 to vector<1x256xf32>
    %439 = arith.mulf %438, %437 : vector<1x256xf32>
    %440 = arith.addf %435, %439 : vector<1x256xf32>
    %441 = arith.addf %421, %440 : vector<1x256xf32>
    %c46_i32 = arith.constant 46 : i32
    %442 = tpu.dynamic_rotate %345 by %c46_i32 dim 1 : vector<2x256xf32>, i32 -> vector<2x256xf32>
    %c48_i32_154 = arith.constant 48 : i32
    %443 = vector.broadcast %c48_i32_154 : i32 to vector<1x256xi32>
    %444 = arith.cmpi sge, %0, %443 : vector<1x256xi32>
    %c14_i32_155 = arith.constant 14 : i32
    %445 = vector.broadcast %c14_i32_155 : i32 to vector<1x256xi32>
    %446 = arith.cmpi slt, %1, %445 : vector<1x256xi32>
    %447 = arith.andi %444, %446 : vector<1x256xi1>
    %cst_156 = arith.constant 0.000000e+00 : f32
    %448 = vector.shape_cast %447 : vector<1x256xi1> to vector<1x256xi1>
    %449 = vector.broadcast %448 : vector<1x256xi1> to vector<2x256xi1>
    %450 = vector.broadcast %cst_156 : f32 to vector<2x256xf32>
    %451 = arith.select %449, %442, %450 : vector<2x256xi1>, vector<2x256xf32>
    %c10 = arith.constant 10 : index
    %452 = memref.load %arg15[%c10] : memref<98xf32, #tpu.memory_space<smem>>
    %453 = vector.extract_strided_slice %451 {offsets = [0, 0], sizes = [1, 256], strides = [1, 1]} : vector<2x256xf32> to vector<1x256xf32>
    %454 = vector.broadcast %452 : f32 to vector<1x256xf32>
    %455 = arith.mulf %454, %453 : vector<1x256xf32>
    %c11 = arith.constant 11 : index
    %456 = memref.load %arg15[%c11] : memref<98xf32, #tpu.memory_space<smem>>
    %457 = vector.extract_strided_slice %451 {offsets = [1, 0], sizes = [1, 256], strides = [1, 1]} : vector<2x256xf32> to vector<1x256xf32>
    %458 = vector.broadcast %456 : f32 to vector<1x256xf32>
    %459 = arith.mulf %458, %457 : vector<1x256xf32>
    %460 = arith.addf %455, %459 : vector<1x256xf32>
    %461 = arith.addf %441, %460 : vector<1x256xf32>
    %c45_i32 = arith.constant 45 : i32
    %462 = tpu.dynamic_rotate %345 by %c45_i32 dim 1 : vector<2x256xf32>, i32 -> vector<2x256xf32>
    %c48_i32_157 = arith.constant 48 : i32
    %463 = vector.broadcast %c48_i32_157 : i32 to vector<1x256xi32>
    %464 = arith.cmpi sge, %0, %463 : vector<1x256xi32>
    %c13_i32 = arith.constant 13 : i32
    %465 = vector.broadcast %c13_i32 : i32 to vector<1x256xi32>
    %466 = arith.cmpi slt, %1, %465 : vector<1x256xi32>
    %467 = arith.andi %464, %466 : vector<1x256xi1>
    %cst_158 = arith.constant 0.000000e+00 : f32
    %468 = vector.shape_cast %467 : vector<1x256xi1> to vector<1x256xi1>
    %469 = vector.broadcast %468 : vector<1x256xi1> to vector<2x256xi1>
    %470 = vector.broadcast %cst_158 : f32 to vector<2x256xf32>
    %471 = arith.select %469, %462, %470 : vector<2x256xi1>, vector<2x256xf32>
    %c12 = arith.constant 12 : index
    %472 = memref.load %arg15[%c12] : memref<98xf32, #tpu.memory_space<smem>>
    %473 = vector.extract_strided_slice %471 {offsets = [0, 0], sizes = [1, 256], strides = [1, 1]} : vector<2x256xf32> to vector<1x256xf32>
    %474 = vector.broadcast %472 : f32 to vector<1x256xf32>
    %475 = arith.mulf %474, %473 : vector<1x256xf32>
    %c13 = arith.constant 13 : index
    %476 = memref.load %arg15[%c13] : memref<98xf32, #tpu.memory_space<smem>>
    %477 = vector.extract_strided_slice %471 {offsets = [1, 0], sizes = [1, 256], strides = [1, 1]} : vector<2x256xf32> to vector<1x256xf32>
    %478 = vector.broadcast %476 : f32 to vector<1x256xf32>
    %479 = arith.mulf %478, %477 : vector<1x256xf32>
    %480 = arith.addf %475, %479 : vector<1x256xf32>
    %481 = arith.addf %461, %480 : vector<1x256xf32>
    %c35_i32 = arith.constant 35 : i32
    %482 = tpu.dynamic_rotate %345 by %c35_i32 dim 1 : vector<2x256xf32>, i32 -> vector<2x256xf32>
    %c32_i32_159 = arith.constant 32 : i32
    %483 = vector.broadcast %c32_i32_159 : i32 to vector<1x256xi32>
    %484 = arith.cmpi sge, %0, %483 : vector<1x256xi32>
    %c3_i32_160 = arith.constant 3 : i32
    %485 = vector.broadcast %c3_i32_160 : i32 to vector<1x256xi32>
    %486 = arith.cmpi sge, %1, %485 : vector<1x256xi32>
    %487 = arith.andi %484, %486 : vector<1x256xi1>
    %cst_161 = arith.constant 0.000000e+00 : f32
    %488 = vector.shape_cast %487 : vector<1x256xi1> to vector<1x256xi1>
    %489 = vector.broadcast %488 : vector<1x256xi1> to vector<2x256xi1>
    %490 = vector.broadcast %cst_161 : f32 to vector<2x256xf32>
    %491 = arith.select %489, %482, %490 : vector<2x256xi1>, vector<2x256xf32>
    %c14 = arith.constant 14 : index
    %492 = memref.load %arg15[%c14] : memref<98xf32, #tpu.memory_space<smem>>
    %493 = vector.extract_strided_slice %491 {offsets = [0, 0], sizes = [1, 256], strides = [1, 1]} : vector<2x256xf32> to vector<1x256xf32>
    %494 = vector.broadcast %492 : f32 to vector<1x256xf32>
    %495 = arith.mulf %494, %493 : vector<1x256xf32>
    %c15 = arith.constant 15 : index
    %496 = memref.load %arg15[%c15] : memref<98xf32, #tpu.memory_space<smem>>
    %497 = vector.extract_strided_slice %491 {offsets = [1, 0], sizes = [1, 256], strides = [1, 1]} : vector<2x256xf32> to vector<1x256xf32>
    %498 = vector.broadcast %496 : f32 to vector<1x256xf32>
    %499 = arith.mulf %498, %497 : vector<1x256xf32>
    %500 = arith.addf %495, %499 : vector<1x256xf32>
    %501 = arith.addf %481, %500 : vector<1x256xf32>
    %c34_i32_162 = arith.constant 34 : i32
    %502 = tpu.dynamic_rotate %345 by %c34_i32_162 dim 1 : vector<2x256xf32>, i32 -> vector<2x256xf32>
    %c32_i32_163 = arith.constant 32 : i32
    %503 = vector.broadcast %c32_i32_163 : i32 to vector<1x256xi32>
    %504 = arith.cmpi sge, %0, %503 : vector<1x256xi32>
    %c2_i32_164 = arith.constant 2 : i32
    %505 = vector.broadcast %c2_i32_164 : i32 to vector<1x256xi32>
    %506 = arith.cmpi sge, %1, %505 : vector<1x256xi32>
    %507 = arith.andi %504, %506 : vector<1x256xi1>
    %cst_165 = arith.constant 0.000000e+00 : f32
    %508 = vector.shape_cast %507 : vector<1x256xi1> to vector<1x256xi1>
    %509 = vector.broadcast %508 : vector<1x256xi1> to vector<2x256xi1>
    %510 = vector.broadcast %cst_165 : f32 to vector<2x256xf32>
    %511 = arith.select %509, %502, %510 : vector<2x256xi1>, vector<2x256xf32>
    %c16 = arith.constant 16 : index
    %512 = memref.load %arg15[%c16] : memref<98xf32, #tpu.memory_space<smem>>
    %513 = vector.extract_strided_slice %511 {offsets = [0, 0], sizes = [1, 256], strides = [1, 1]} : vector<2x256xf32> to vector<1x256xf32>
    %514 = vector.broadcast %512 : f32 to vector<1x256xf32>
    %515 = arith.mulf %514, %513 : vector<1x256xf32>
    %c17 = arith.constant 17 : index
    %516 = memref.load %arg15[%c17] : memref<98xf32, #tpu.memory_space<smem>>
    %517 = vector.extract_strided_slice %511 {offsets = [1, 0], sizes = [1, 256], strides = [1, 1]} : vector<2x256xf32> to vector<1x256xf32>
    %518 = vector.broadcast %516 : f32 to vector<1x256xf32>
    %519 = arith.mulf %518, %517 : vector<1x256xf32>
    %520 = arith.addf %515, %519 : vector<1x256xf32>
    %521 = arith.addf %501, %520 : vector<1x256xf32>
    %c33_i32 = arith.constant 33 : i32
    %522 = tpu.dynamic_rotate %345 by %c33_i32 dim 1 : vector<2x256xf32>, i32 -> vector<2x256xf32>
    %c32_i32_166 = arith.constant 32 : i32
    %523 = vector.broadcast %c32_i32_166 : i32 to vector<1x256xi32>
    %524 = arith.cmpi sge, %0, %523 : vector<1x256xi32>
    %c1_i32_167 = arith.constant 1 : i32
    %525 = vector.broadcast %c1_i32_167 : i32 to vector<1x256xi32>
    %526 = arith.cmpi sge, %1, %525 : vector<1x256xi32>
    %527 = arith.andi %524, %526 : vector<1x256xi1>
    %cst_168 = arith.constant 0.000000e+00 : f32
    %528 = vector.shape_cast %527 : vector<1x256xi1> to vector<1x256xi1>
    %529 = vector.broadcast %528 : vector<1x256xi1> to vector<2x256xi1>
    %530 = vector.broadcast %cst_168 : f32 to vector<2x256xf32>
    %531 = arith.select %529, %522, %530 : vector<2x256xi1>, vector<2x256xf32>
    %c18 = arith.constant 18 : index
    %532 = memref.load %arg15[%c18] : memref<98xf32, #tpu.memory_space<smem>>
    %533 = vector.extract_strided_slice %531 {offsets = [0, 0], sizes = [1, 256], strides = [1, 1]} : vector<2x256xf32> to vector<1x256xf32>
    %534 = vector.broadcast %532 : f32 to vector<1x256xf32>
    %535 = arith.mulf %534, %533 : vector<1x256xf32>
    %c19 = arith.constant 19 : index
    %536 = memref.load %arg15[%c19] : memref<98xf32, #tpu.memory_space<smem>>
    %537 = vector.extract_strided_slice %531 {offsets = [1, 0], sizes = [1, 256], strides = [1, 1]} : vector<2x256xf32> to vector<1x256xf32>
    %538 = vector.broadcast %536 : f32 to vector<1x256xf32>
    %539 = arith.mulf %538, %537 : vector<1x256xf32>
    %540 = arith.addf %535, %539 : vector<1x256xf32>
    %541 = arith.addf %521, %540 : vector<1x256xf32>
    %c32_i32_169 = arith.constant 32 : i32
    %542 = tpu.dynamic_rotate %345 by %c32_i32_169 dim 1 : vector<2x256xf32>, i32 -> vector<2x256xf32>
    %c32_i32_170 = arith.constant 32 : i32
    %543 = vector.broadcast %c32_i32_170 : i32 to vector<1x256xi32>
    %544 = arith.cmpi sge, %0, %543 : vector<1x256xi32>
    %cst_171 = arith.constant 0.000000e+00 : f32
    %545 = vector.shape_cast %544 : vector<1x256xi1> to vector<1x256xi1>
    %546 = vector.broadcast %545 : vector<1x256xi1> to vector<2x256xi1>
    %547 = vector.broadcast %cst_171 : f32 to vector<2x256xf32>
    %548 = arith.select %546, %542, %547 : vector<2x256xi1>, vector<2x256xf32>
    %c20 = arith.constant 20 : index
    %549 = memref.load %arg15[%c20] : memref<98xf32, #tpu.memory_space<smem>>
    %550 = vector.extract_strided_slice %548 {offsets = [0, 0], sizes = [1, 256], strides = [1, 1]} : vector<2x256xf32> to vector<1x256xf32>
    %551 = vector.broadcast %549 : f32 to vector<1x256xf32>
    %552 = arith.mulf %551, %550 : vector<1x256xf32>
    %c21 = arith.constant 21 : index
    %553 = memref.load %arg15[%c21] : memref<98xf32, #tpu.memory_space<smem>>
    %554 = vector.extract_strided_slice %548 {offsets = [1, 0], sizes = [1, 256], strides = [1, 1]} : vector<2x256xf32> to vector<1x256xf32>
    %555 = vector.broadcast %553 : f32 to vector<1x256xf32>
    %556 = arith.mulf %555, %554 : vector<1x256xf32>
    %557 = arith.addf %552, %556 : vector<1x256xf32>
    %558 = arith.addf %541, %557 : vector<1x256xf32>
    %c31_i32 = arith.constant 31 : i32
    %559 = tpu.dynamic_rotate %345 by %c31_i32 dim 1 : vector<2x256xf32>, i32 -> vector<2x256xf32>
    %c32_i32_172 = arith.constant 32 : i32
    %560 = vector.broadcast %c32_i32_172 : i32 to vector<1x256xi32>
    %561 = arith.cmpi sge, %0, %560 : vector<1x256xi32>
    %c15_i32_173 = arith.constant 15 : i32
    %562 = vector.broadcast %c15_i32_173 : i32 to vector<1x256xi32>
    %563 = arith.cmpi slt, %1, %562 : vector<1x256xi32>
    %564 = arith.andi %561, %563 : vector<1x256xi1>
    %cst_174 = arith.constant 0.000000e+00 : f32
    %565 = vector.shape_cast %564 : vector<1x256xi1> to vector<1x256xi1>
    %566 = vector.broadcast %565 : vector<1x256xi1> to vector<2x256xi1>
    %567 = vector.broadcast %cst_174 : f32 to vector<2x256xf32>
    %568 = arith.select %566, %559, %567 : vector<2x256xi1>, vector<2x256xf32>
    %c22 = arith.constant 22 : index
    %569 = memref.load %arg15[%c22] : memref<98xf32, #tpu.memory_space<smem>>
    %570 = vector.extract_strided_slice %568 {offsets = [0, 0], sizes = [1, 256], strides = [1, 1]} : vector<2x256xf32> to vector<1x256xf32>
    %571 = vector.broadcast %569 : f32 to vector<1x256xf32>
    %572 = arith.mulf %571, %570 : vector<1x256xf32>
    %c23 = arith.constant 23 : index
    %573 = memref.load %arg15[%c23] : memref<98xf32, #tpu.memory_space<smem>>
    %574 = vector.extract_strided_slice %568 {offsets = [1, 0], sizes = [1, 256], strides = [1, 1]} : vector<2x256xf32> to vector<1x256xf32>
    %575 = vector.broadcast %573 : f32 to vector<1x256xf32>
    %576 = arith.mulf %575, %574 : vector<1x256xf32>
    %577 = arith.addf %572, %576 : vector<1x256xf32>
    %578 = arith.addf %558, %577 : vector<1x256xf32>
    %c30_i32_175 = arith.constant 30 : i32
    %579 = tpu.dynamic_rotate %345 by %c30_i32_175 dim 1 : vector<2x256xf32>, i32 -> vector<2x256xf32>
    %c32_i32_176 = arith.constant 32 : i32
    %580 = vector.broadcast %c32_i32_176 : i32 to vector<1x256xi32>
    %581 = arith.cmpi sge, %0, %580 : vector<1x256xi32>
    %c14_i32_177 = arith.constant 14 : i32
    %582 = vector.broadcast %c14_i32_177 : i32 to vector<1x256xi32>
    %583 = arith.cmpi slt, %1, %582 : vector<1x256xi32>
    %584 = arith.andi %581, %583 : vector<1x256xi1>
    %cst_178 = arith.constant 0.000000e+00 : f32
    %585 = vector.shape_cast %584 : vector<1x256xi1> to vector<1x256xi1>
    %586 = vector.broadcast %585 : vector<1x256xi1> to vector<2x256xi1>
    %587 = vector.broadcast %cst_178 : f32 to vector<2x256xf32>
    %588 = arith.select %586, %579, %587 : vector<2x256xi1>, vector<2x256xf32>
    %c24 = arith.constant 24 : index
    %589 = memref.load %arg15[%c24] : memref<98xf32, #tpu.memory_space<smem>>
    %590 = vector.extract_strided_slice %588 {offsets = [0, 0], sizes = [1, 256], strides = [1, 1]} : vector<2x256xf32> to vector<1x256xf32>
    %591 = vector.broadcast %589 : f32 to vector<1x256xf32>
    %592 = arith.mulf %591, %590 : vector<1x256xf32>
    %c25 = arith.constant 25 : index
    %593 = memref.load %arg15[%c25] : memref<98xf32, #tpu.memory_space<smem>>
    %594 = vector.extract_strided_slice %588 {offsets = [1, 0], sizes = [1, 256], strides = [1, 1]} : vector<2x256xf32> to vector<1x256xf32>
    %595 = vector.broadcast %593 : f32 to vector<1x256xf32>
    %596 = arith.mulf %595, %594 : vector<1x256xf32>
    %597 = arith.addf %592, %596 : vector<1x256xf32>
    %598 = arith.addf %578, %597 : vector<1x256xf32>
    %c29_i32 = arith.constant 29 : i32
    %599 = tpu.dynamic_rotate %345 by %c29_i32 dim 1 : vector<2x256xf32>, i32 -> vector<2x256xf32>
    %c32_i32_179 = arith.constant 32 : i32
    %600 = vector.broadcast %c32_i32_179 : i32 to vector<1x256xi32>
    %601 = arith.cmpi sge, %0, %600 : vector<1x256xi32>
    %c13_i32_180 = arith.constant 13 : i32
    %602 = vector.broadcast %c13_i32_180 : i32 to vector<1x256xi32>
    %603 = arith.cmpi slt, %1, %602 : vector<1x256xi32>
    %604 = arith.andi %601, %603 : vector<1x256xi1>
    %cst_181 = arith.constant 0.000000e+00 : f32
    %605 = vector.shape_cast %604 : vector<1x256xi1> to vector<1x256xi1>
    %606 = vector.broadcast %605 : vector<1x256xi1> to vector<2x256xi1>
    %607 = vector.broadcast %cst_181 : f32 to vector<2x256xf32>
    %608 = arith.select %606, %599, %607 : vector<2x256xi1>, vector<2x256xf32>
    %c26 = arith.constant 26 : index
    %609 = memref.load %arg15[%c26] : memref<98xf32, #tpu.memory_space<smem>>
    %610 = vector.extract_strided_slice %608 {offsets = [0, 0], sizes = [1, 256], strides = [1, 1]} : vector<2x256xf32> to vector<1x256xf32>
    %611 = vector.broadcast %609 : f32 to vector<1x256xf32>
    %612 = arith.mulf %611, %610 : vector<1x256xf32>
    %c27 = arith.constant 27 : index
    %613 = memref.load %arg15[%c27] : memref<98xf32, #tpu.memory_space<smem>>
    %614 = vector.extract_strided_slice %608 {offsets = [1, 0], sizes = [1, 256], strides = [1, 1]} : vector<2x256xf32> to vector<1x256xf32>
    %615 = vector.broadcast %613 : f32 to vector<1x256xf32>
    %616 = arith.mulf %615, %614 : vector<1x256xf32>
    %617 = arith.addf %612, %616 : vector<1x256xf32>
    %618 = arith.addf %598, %617 : vector<1x256xf32>
    %c19_i32 = arith.constant 19 : i32
    %619 = tpu.dynamic_rotate %345 by %c19_i32 dim 1 : vector<2x256xf32>, i32 -> vector<2x256xf32>
    %c16_i32_182 = arith.constant 16 : i32
    %620 = vector.broadcast %c16_i32_182 : i32 to vector<1x256xi32>
    %621 = arith.cmpi sge, %0, %620 : vector<1x256xi32>
    %c3_i32_183 = arith.constant 3 : i32
    %622 = vector.broadcast %c3_i32_183 : i32 to vector<1x256xi32>
    %623 = arith.cmpi sge, %1, %622 : vector<1x256xi32>
    %624 = arith.andi %621, %623 : vector<1x256xi1>
    %cst_184 = arith.constant 0.000000e+00 : f32
    %625 = vector.shape_cast %624 : vector<1x256xi1> to vector<1x256xi1>
    %626 = vector.broadcast %625 : vector<1x256xi1> to vector<2x256xi1>
    %627 = vector.broadcast %cst_184 : f32 to vector<2x256xf32>
    %628 = arith.select %626, %619, %627 : vector<2x256xi1>, vector<2x256xf32>
    %c28 = arith.constant 28 : index
    %629 = memref.load %arg15[%c28] : memref<98xf32, #tpu.memory_space<smem>>
    %630 = vector.extract_strided_slice %628 {offsets = [0, 0], sizes = [1, 256], strides = [1, 1]} : vector<2x256xf32> to vector<1x256xf32>
    %631 = vector.broadcast %629 : f32 to vector<1x256xf32>
    %632 = arith.mulf %631, %630 : vector<1x256xf32>
    %c29 = arith.constant 29 : index
    %633 = memref.load %arg15[%c29] : memref<98xf32, #tpu.memory_space<smem>>
    %634 = vector.extract_strided_slice %628 {offsets = [1, 0], sizes = [1, 256], strides = [1, 1]} : vector<2x256xf32> to vector<1x256xf32>
    %635 = vector.broadcast %633 : f32 to vector<1x256xf32>
    %636 = arith.mulf %635, %634 : vector<1x256xf32>
    %637 = arith.addf %632, %636 : vector<1x256xf32>
    %638 = arith.addf %618, %637 : vector<1x256xf32>
    %c18_i32 = arith.constant 18 : i32
    %639 = tpu.dynamic_rotate %345 by %c18_i32 dim 1 : vector<2x256xf32>, i32 -> vector<2x256xf32>
    %c16_i32_185 = arith.constant 16 : i32
    %640 = vector.broadcast %c16_i32_185 : i32 to vector<1x256xi32>
    %641 = arith.cmpi sge, %0, %640 : vector<1x256xi32>
    %c2_i32_186 = arith.constant 2 : i32
    %642 = vector.broadcast %c2_i32_186 : i32 to vector<1x256xi32>
    %643 = arith.cmpi sge, %1, %642 : vector<1x256xi32>
    %644 = arith.andi %641, %643 : vector<1x256xi1>
    %cst_187 = arith.constant 0.000000e+00 : f32
    %645 = vector.shape_cast %644 : vector<1x256xi1> to vector<1x256xi1>
    %646 = vector.broadcast %645 : vector<1x256xi1> to vector<2x256xi1>
    %647 = vector.broadcast %cst_187 : f32 to vector<2x256xf32>
    %648 = arith.select %646, %639, %647 : vector<2x256xi1>, vector<2x256xf32>
    %c30 = arith.constant 30 : index
    %649 = memref.load %arg15[%c30] : memref<98xf32, #tpu.memory_space<smem>>
    %650 = vector.extract_strided_slice %648 {offsets = [0, 0], sizes = [1, 256], strides = [1, 1]} : vector<2x256xf32> to vector<1x256xf32>
    %651 = vector.broadcast %649 : f32 to vector<1x256xf32>
    %652 = arith.mulf %651, %650 : vector<1x256xf32>
    %c31 = arith.constant 31 : index
    %653 = memref.load %arg15[%c31] : memref<98xf32, #tpu.memory_space<smem>>
    %654 = vector.extract_strided_slice %648 {offsets = [1, 0], sizes = [1, 256], strides = [1, 1]} : vector<2x256xf32> to vector<1x256xf32>
    %655 = vector.broadcast %653 : f32 to vector<1x256xf32>
    %656 = arith.mulf %655, %654 : vector<1x256xf32>
    %657 = arith.addf %652, %656 : vector<1x256xf32>
    %658 = arith.addf %638, %657 : vector<1x256xf32>
    %c17_i32_188 = arith.constant 17 : i32
    %659 = tpu.dynamic_rotate %345 by %c17_i32_188 dim 1 : vector<2x256xf32>, i32 -> vector<2x256xf32>
    %c16_i32_189 = arith.constant 16 : i32
    %660 = vector.broadcast %c16_i32_189 : i32 to vector<1x256xi32>
    %661 = arith.cmpi sge, %0, %660 : vector<1x256xi32>
    %c1_i32_190 = arith.constant 1 : i32
    %662 = vector.broadcast %c1_i32_190 : i32 to vector<1x256xi32>
    %663 = arith.cmpi sge, %1, %662 : vector<1x256xi32>
    %664 = arith.andi %661, %663 : vector<1x256xi1>
    %cst_191 = arith.constant 0.000000e+00 : f32
    %665 = vector.shape_cast %664 : vector<1x256xi1> to vector<1x256xi1>
    %666 = vector.broadcast %665 : vector<1x256xi1> to vector<2x256xi1>
    %667 = vector.broadcast %cst_191 : f32 to vector<2x256xf32>
    %668 = arith.select %666, %659, %667 : vector<2x256xi1>, vector<2x256xf32>
    %c32 = arith.constant 32 : index
    %669 = memref.load %arg15[%c32] : memref<98xf32, #tpu.memory_space<smem>>
    %670 = vector.extract_strided_slice %668 {offsets = [0, 0], sizes = [1, 256], strides = [1, 1]} : vector<2x256xf32> to vector<1x256xf32>
    %671 = vector.broadcast %669 : f32 to vector<1x256xf32>
    %672 = arith.mulf %671, %670 : vector<1x256xf32>
    %c33 = arith.constant 33 : index
    %673 = memref.load %arg15[%c33] : memref<98xf32, #tpu.memory_space<smem>>
    %674 = vector.extract_strided_slice %668 {offsets = [1, 0], sizes = [1, 256], strides = [1, 1]} : vector<2x256xf32> to vector<1x256xf32>
    %675 = vector.broadcast %673 : f32 to vector<1x256xf32>
    %676 = arith.mulf %675, %674 : vector<1x256xf32>
    %677 = arith.addf %672, %676 : vector<1x256xf32>
    %678 = arith.addf %658, %677 : vector<1x256xf32>
    %c16_i32_192 = arith.constant 16 : i32
    %679 = tpu.dynamic_rotate %345 by %c16_i32_192 dim 1 : vector<2x256xf32>, i32 -> vector<2x256xf32>
    %c16_i32_193 = arith.constant 16 : i32
    %680 = vector.broadcast %c16_i32_193 : i32 to vector<1x256xi32>
    %681 = arith.cmpi sge, %0, %680 : vector<1x256xi32>
    %cst_194 = arith.constant 0.000000e+00 : f32
    %682 = vector.shape_cast %681 : vector<1x256xi1> to vector<1x256xi1>
    %683 = vector.broadcast %682 : vector<1x256xi1> to vector<2x256xi1>
    %684 = vector.broadcast %cst_194 : f32 to vector<2x256xf32>
    %685 = arith.select %683, %679, %684 : vector<2x256xi1>, vector<2x256xf32>
    %c34 = arith.constant 34 : index
    %686 = memref.load %arg15[%c34] : memref<98xf32, #tpu.memory_space<smem>>
    %687 = vector.extract_strided_slice %685 {offsets = [0, 0], sizes = [1, 256], strides = [1, 1]} : vector<2x256xf32> to vector<1x256xf32>
    %688 = vector.broadcast %686 : f32 to vector<1x256xf32>
    %689 = arith.mulf %688, %687 : vector<1x256xf32>
    %c35 = arith.constant 35 : index
    %690 = memref.load %arg15[%c35] : memref<98xf32, #tpu.memory_space<smem>>
    %691 = vector.extract_strided_slice %685 {offsets = [1, 0], sizes = [1, 256], strides = [1, 1]} : vector<2x256xf32> to vector<1x256xf32>
    %692 = vector.broadcast %690 : f32 to vector<1x256xf32>
    %693 = arith.mulf %692, %691 : vector<1x256xf32>
    %694 = arith.addf %689, %693 : vector<1x256xf32>
    %695 = arith.addf %678, %694 : vector<1x256xf32>
    %c15_i32_195 = arith.constant 15 : i32
    %696 = tpu.dynamic_rotate %345 by %c15_i32_195 dim 1 : vector<2x256xf32>, i32 -> vector<2x256xf32>
    %c16_i32_196 = arith.constant 16 : i32
    %697 = vector.broadcast %c16_i32_196 : i32 to vector<1x256xi32>
    %698 = arith.cmpi sge, %0, %697 : vector<1x256xi32>
    %c15_i32_197 = arith.constant 15 : i32
    %699 = vector.broadcast %c15_i32_197 : i32 to vector<1x256xi32>
    %700 = arith.cmpi slt, %1, %699 : vector<1x256xi32>
    %701 = arith.andi %698, %700 : vector<1x256xi1>
    %cst_198 = arith.constant 0.000000e+00 : f32
    %702 = vector.shape_cast %701 : vector<1x256xi1> to vector<1x256xi1>
    %703 = vector.broadcast %702 : vector<1x256xi1> to vector<2x256xi1>
    %704 = vector.broadcast %cst_198 : f32 to vector<2x256xf32>
    %705 = arith.select %703, %696, %704 : vector<2x256xi1>, vector<2x256xf32>
    %c36 = arith.constant 36 : index
    %706 = memref.load %arg15[%c36] : memref<98xf32, #tpu.memory_space<smem>>
    %707 = vector.extract_strided_slice %705 {offsets = [0, 0], sizes = [1, 256], strides = [1, 1]} : vector<2x256xf32> to vector<1x256xf32>
    %708 = vector.broadcast %706 : f32 to vector<1x256xf32>
    %709 = arith.mulf %708, %707 : vector<1x256xf32>
    %c37 = arith.constant 37 : index
    %710 = memref.load %arg15[%c37] : memref<98xf32, #tpu.memory_space<smem>>
    %711 = vector.extract_strided_slice %705 {offsets = [1, 0], sizes = [1, 256], strides = [1, 1]} : vector<2x256xf32> to vector<1x256xf32>
    %712 = vector.broadcast %710 : f32 to vector<1x256xf32>
    %713 = arith.mulf %712, %711 : vector<1x256xf32>
    %714 = arith.addf %709, %713 : vector<1x256xf32>
    %715 = arith.addf %695, %714 : vector<1x256xf32>
    %c14_i32_199 = arith.constant 14 : i32
    %716 = tpu.dynamic_rotate %345 by %c14_i32_199 dim 1 : vector<2x256xf32>, i32 -> vector<2x256xf32>
    %c16_i32_200 = arith.constant 16 : i32
    %717 = vector.broadcast %c16_i32_200 : i32 to vector<1x256xi32>
    %718 = arith.cmpi sge, %0, %717 : vector<1x256xi32>
    %c14_i32_201 = arith.constant 14 : i32
    %719 = vector.broadcast %c14_i32_201 : i32 to vector<1x256xi32>
    %720 = arith.cmpi slt, %1, %719 : vector<1x256xi32>
    %721 = arith.andi %718, %720 : vector<1x256xi1>
    %cst_202 = arith.constant 0.000000e+00 : f32
    %722 = vector.shape_cast %721 : vector<1x256xi1> to vector<1x256xi1>
    %723 = vector.broadcast %722 : vector<1x256xi1> to vector<2x256xi1>
    %724 = vector.broadcast %cst_202 : f32 to vector<2x256xf32>
    %725 = arith.select %723, %716, %724 : vector<2x256xi1>, vector<2x256xf32>
    %c38 = arith.constant 38 : index
    %726 = memref.load %arg15[%c38] : memref<98xf32, #tpu.memory_space<smem>>
    %727 = vector.extract_strided_slice %725 {offsets = [0, 0], sizes = [1, 256], strides = [1, 1]} : vector<2x256xf32> to vector<1x256xf32>
    %728 = vector.broadcast %726 : f32 to vector<1x256xf32>
    %729 = arith.mulf %728, %727 : vector<1x256xf32>
    %c39 = arith.constant 39 : index
    %730 = memref.load %arg15[%c39] : memref<98xf32, #tpu.memory_space<smem>>
    %731 = vector.extract_strided_slice %725 {offsets = [1, 0], sizes = [1, 256], strides = [1, 1]} : vector<2x256xf32> to vector<1x256xf32>
    %732 = vector.broadcast %730 : f32 to vector<1x256xf32>
    %733 = arith.mulf %732, %731 : vector<1x256xf32>
    %734 = arith.addf %729, %733 : vector<1x256xf32>
    %735 = arith.addf %715, %734 : vector<1x256xf32>
    %c13_i32_203 = arith.constant 13 : i32
    %736 = tpu.dynamic_rotate %345 by %c13_i32_203 dim 1 : vector<2x256xf32>, i32 -> vector<2x256xf32>
    %c16_i32_204 = arith.constant 16 : i32
    %737 = vector.broadcast %c16_i32_204 : i32 to vector<1x256xi32>
    %738 = arith.cmpi sge, %0, %737 : vector<1x256xi32>
    %c13_i32_205 = arith.constant 13 : i32
    %739 = vector.broadcast %c13_i32_205 : i32 to vector<1x256xi32>
    %740 = arith.cmpi slt, %1, %739 : vector<1x256xi32>
    %741 = arith.andi %738, %740 : vector<1x256xi1>
    %cst_206 = arith.constant 0.000000e+00 : f32
    %742 = vector.shape_cast %741 : vector<1x256xi1> to vector<1x256xi1>
    %743 = vector.broadcast %742 : vector<1x256xi1> to vector<2x256xi1>
    %744 = vector.broadcast %cst_206 : f32 to vector<2x256xf32>
    %745 = arith.select %743, %736, %744 : vector<2x256xi1>, vector<2x256xf32>
    %c40 = arith.constant 40 : index
    %746 = memref.load %arg15[%c40] : memref<98xf32, #tpu.memory_space<smem>>
    %747 = vector.extract_strided_slice %745 {offsets = [0, 0], sizes = [1, 256], strides = [1, 1]} : vector<2x256xf32> to vector<1x256xf32>
    %748 = vector.broadcast %746 : f32 to vector<1x256xf32>
    %749 = arith.mulf %748, %747 : vector<1x256xf32>
    %c41 = arith.constant 41 : index
    %750 = memref.load %arg15[%c41] : memref<98xf32, #tpu.memory_space<smem>>
    %751 = vector.extract_strided_slice %745 {offsets = [1, 0], sizes = [1, 256], strides = [1, 1]} : vector<2x256xf32> to vector<1x256xf32>
    %752 = vector.broadcast %750 : f32 to vector<1x256xf32>
    %753 = arith.mulf %752, %751 : vector<1x256xf32>
    %754 = arith.addf %749, %753 : vector<1x256xf32>
    %755 = arith.addf %735, %754 : vector<1x256xf32>
    %c3_i32_207 = arith.constant 3 : i32
    %756 = tpu.dynamic_rotate %345 by %c3_i32_207 dim 1 : vector<2x256xf32>, i32 -> vector<2x256xf32>
    %c3_i32_208 = arith.constant 3 : i32
    %757 = vector.broadcast %c3_i32_208 : i32 to vector<1x256xi32>
    %758 = arith.cmpi sge, %1, %757 : vector<1x256xi32>
    %cst_209 = arith.constant 0.000000e+00 : f32
    %759 = vector.shape_cast %758 : vector<1x256xi1> to vector<1x256xi1>
    %760 = vector.broadcast %759 : vector<1x256xi1> to vector<2x256xi1>
    %761 = vector.broadcast %cst_209 : f32 to vector<2x256xf32>
    %762 = arith.select %760, %756, %761 : vector<2x256xi1>, vector<2x256xf32>
    %c42 = arith.constant 42 : index
    %763 = memref.load %arg15[%c42] : memref<98xf32, #tpu.memory_space<smem>>
    %764 = vector.extract_strided_slice %762 {offsets = [0, 0], sizes = [1, 256], strides = [1, 1]} : vector<2x256xf32> to vector<1x256xf32>
    %765 = vector.broadcast %763 : f32 to vector<1x256xf32>
    %766 = arith.mulf %765, %764 : vector<1x256xf32>
    %c43 = arith.constant 43 : index
    %767 = memref.load %arg15[%c43] : memref<98xf32, #tpu.memory_space<smem>>
    %768 = vector.extract_strided_slice %762 {offsets = [1, 0], sizes = [1, 256], strides = [1, 1]} : vector<2x256xf32> to vector<1x256xf32>
    %769 = vector.broadcast %767 : f32 to vector<1x256xf32>
    %770 = arith.mulf %769, %768 : vector<1x256xf32>
    %771 = arith.addf %766, %770 : vector<1x256xf32>
    %772 = arith.addf %755, %771 : vector<1x256xf32>
    %c2_i32_210 = arith.constant 2 : i32
    %773 = tpu.dynamic_rotate %345 by %c2_i32_210 dim 1 : vector<2x256xf32>, i32 -> vector<2x256xf32>
    %c2_i32_211 = arith.constant 2 : i32
    %774 = vector.broadcast %c2_i32_211 : i32 to vector<1x256xi32>
    %775 = arith.cmpi sge, %1, %774 : vector<1x256xi32>
    %cst_212 = arith.constant 0.000000e+00 : f32
    %776 = vector.shape_cast %775 : vector<1x256xi1> to vector<1x256xi1>
    %777 = vector.broadcast %776 : vector<1x256xi1> to vector<2x256xi1>
    %778 = vector.broadcast %cst_212 : f32 to vector<2x256xf32>
    %779 = arith.select %777, %773, %778 : vector<2x256xi1>, vector<2x256xf32>
    %c44 = arith.constant 44 : index
    %780 = memref.load %arg15[%c44] : memref<98xf32, #tpu.memory_space<smem>>
    %781 = vector.extract_strided_slice %779 {offsets = [0, 0], sizes = [1, 256], strides = [1, 1]} : vector<2x256xf32> to vector<1x256xf32>
    %782 = vector.broadcast %780 : f32 to vector<1x256xf32>
    %783 = arith.mulf %782, %781 : vector<1x256xf32>
    %c45 = arith.constant 45 : index
    %784 = memref.load %arg15[%c45] : memref<98xf32, #tpu.memory_space<smem>>
    %785 = vector.extract_strided_slice %779 {offsets = [1, 0], sizes = [1, 256], strides = [1, 1]} : vector<2x256xf32> to vector<1x256xf32>
    %786 = vector.broadcast %784 : f32 to vector<1x256xf32>
    %787 = arith.mulf %786, %785 : vector<1x256xf32>
    %788 = arith.addf %783, %787 : vector<1x256xf32>
    %789 = arith.addf %772, %788 : vector<1x256xf32>
    %c1_i32_213 = arith.constant 1 : i32
    %790 = tpu.dynamic_rotate %345 by %c1_i32_213 dim 1 : vector<2x256xf32>, i32 -> vector<2x256xf32>
    %c1_i32_214 = arith.constant 1 : i32
    %791 = vector.broadcast %c1_i32_214 : i32 to vector<1x256xi32>
    %792 = arith.cmpi sge, %1, %791 : vector<1x256xi32>
    %cst_215 = arith.constant 0.000000e+00 : f32
    %793 = vector.shape_cast %792 : vector<1x256xi1> to vector<1x256xi1>
    %794 = vector.broadcast %793 : vector<1x256xi1> to vector<2x256xi1>
    %795 = vector.broadcast %cst_215 : f32 to vector<2x256xf32>
    %796 = arith.select %794, %790, %795 : vector<2x256xi1>, vector<2x256xf32>
    %c46 = arith.constant 46 : index
    %797 = memref.load %arg15[%c46] : memref<98xf32, #tpu.memory_space<smem>>
    %798 = vector.extract_strided_slice %796 {offsets = [0, 0], sizes = [1, 256], strides = [1, 1]} : vector<2x256xf32> to vector<1x256xf32>
    %799 = vector.broadcast %797 : f32 to vector<1x256xf32>
    %800 = arith.mulf %799, %798 : vector<1x256xf32>
    %c47 = arith.constant 47 : index
    %801 = memref.load %arg15[%c47] : memref<98xf32, #tpu.memory_space<smem>>
    %802 = vector.extract_strided_slice %796 {offsets = [1, 0], sizes = [1, 256], strides = [1, 1]} : vector<2x256xf32> to vector<1x256xf32>
    %803 = vector.broadcast %801 : f32 to vector<1x256xf32>
    %804 = arith.mulf %803, %802 : vector<1x256xf32>
    %805 = arith.addf %800, %804 : vector<1x256xf32>
    %806 = arith.addf %789, %805 : vector<1x256xf32>
    %c48 = arith.constant 48 : index
    %807 = memref.load %arg15[%c48] : memref<98xf32, #tpu.memory_space<smem>>
    %808 = vector.extract_strided_slice %345 {offsets = [0, 0], sizes = [1, 256], strides = [1, 1]} : vector<2x256xf32> to vector<1x256xf32>
    %809 = vector.broadcast %807 : f32 to vector<1x256xf32>
    %810 = arith.mulf %809, %808 : vector<1x256xf32>
    %c49 = arith.constant 49 : index
    %811 = memref.load %arg15[%c49] : memref<98xf32, #tpu.memory_space<smem>>
    %812 = vector.extract_strided_slice %345 {offsets = [1, 0], sizes = [1, 256], strides = [1, 1]} : vector<2x256xf32> to vector<1x256xf32>
    %813 = vector.broadcast %811 : f32 to vector<1x256xf32>
    %814 = arith.mulf %813, %812 : vector<1x256xf32>
    %815 = arith.addf %810, %814 : vector<1x256xf32>
    %816 = arith.addf %806, %815 : vector<1x256xf32>
    %c255_i32_216 = arith.constant 255 : i32
    %817 = tpu.dynamic_rotate %345 by %c255_i32_216 dim 1 : vector<2x256xf32>, i32 -> vector<2x256xf32>
    %c15_i32_217 = arith.constant 15 : i32
    %818 = vector.broadcast %c15_i32_217 : i32 to vector<1x256xi32>
    %819 = arith.cmpi slt, %1, %818 : vector<1x256xi32>
    %cst_218 = arith.constant 0.000000e+00 : f32
    %820 = vector.shape_cast %819 : vector<1x256xi1> to vector<1x256xi1>
    %821 = vector.broadcast %820 : vector<1x256xi1> to vector<2x256xi1>
    %822 = vector.broadcast %cst_218 : f32 to vector<2x256xf32>
    %823 = arith.select %821, %817, %822 : vector<2x256xi1>, vector<2x256xf32>
    %c50 = arith.constant 50 : index
    %824 = memref.load %arg15[%c50] : memref<98xf32, #tpu.memory_space<smem>>
    %825 = vector.extract_strided_slice %823 {offsets = [0, 0], sizes = [1, 256], strides = [1, 1]} : vector<2x256xf32> to vector<1x256xf32>
    %826 = vector.broadcast %824 : f32 to vector<1x256xf32>
    %827 = arith.mulf %826, %825 : vector<1x256xf32>
    %c51 = arith.constant 51 : index
    %828 = memref.load %arg15[%c51] : memref<98xf32, #tpu.memory_space<smem>>
    %829 = vector.extract_strided_slice %823 {offsets = [1, 0], sizes = [1, 256], strides = [1, 1]} : vector<2x256xf32> to vector<1x256xf32>
    %830 = vector.broadcast %828 : f32 to vector<1x256xf32>
    %831 = arith.mulf %830, %829 : vector<1x256xf32>
    %832 = arith.addf %827, %831 : vector<1x256xf32>
    %833 = arith.addf %816, %832 : vector<1x256xf32>
    %c254_i32_219 = arith.constant 254 : i32
    %834 = tpu.dynamic_rotate %345 by %c254_i32_219 dim 1 : vector<2x256xf32>, i32 -> vector<2x256xf32>
    %c14_i32_220 = arith.constant 14 : i32
    %835 = vector.broadcast %c14_i32_220 : i32 to vector<1x256xi32>
    %836 = arith.cmpi slt, %1, %835 : vector<1x256xi32>
    %cst_221 = arith.constant 0.000000e+00 : f32
    %837 = vector.shape_cast %836 : vector<1x256xi1> to vector<1x256xi1>
    %838 = vector.broadcast %837 : vector<1x256xi1> to vector<2x256xi1>
    %839 = vector.broadcast %cst_221 : f32 to vector<2x256xf32>
    %840 = arith.select %838, %834, %839 : vector<2x256xi1>, vector<2x256xf32>
    %c52 = arith.constant 52 : index
    %841 = memref.load %arg15[%c52] : memref<98xf32, #tpu.memory_space<smem>>
    %842 = vector.extract_strided_slice %840 {offsets = [0, 0], sizes = [1, 256], strides = [1, 1]} : vector<2x256xf32> to vector<1x256xf32>
    %843 = vector.broadcast %841 : f32 to vector<1x256xf32>
    %844 = arith.mulf %843, %842 : vector<1x256xf32>
    %c53 = arith.constant 53 : index
    %845 = memref.load %arg15[%c53] : memref<98xf32, #tpu.memory_space<smem>>
    %846 = vector.extract_strided_slice %840 {offsets = [1, 0], sizes = [1, 256], strides = [1, 1]} : vector<2x256xf32> to vector<1x256xf32>
    %847 = vector.broadcast %845 : f32 to vector<1x256xf32>
    %848 = arith.mulf %847, %846 : vector<1x256xf32>
    %849 = arith.addf %844, %848 : vector<1x256xf32>
    %850 = arith.addf %833, %849 : vector<1x256xf32>
    %c253_i32 = arith.constant 253 : i32
    %851 = tpu.dynamic_rotate %345 by %c253_i32 dim 1 : vector<2x256xf32>, i32 -> vector<2x256xf32>
    %c13_i32_222 = arith.constant 13 : i32
    %852 = vector.broadcast %c13_i32_222 : i32 to vector<1x256xi32>
    %853 = arith.cmpi slt, %1, %852 : vector<1x256xi32>
    %cst_223 = arith.constant 0.000000e+00 : f32
    %854 = vector.shape_cast %853 : vector<1x256xi1> to vector<1x256xi1>
    %855 = vector.broadcast %854 : vector<1x256xi1> to vector<2x256xi1>
    %856 = vector.broadcast %cst_223 : f32 to vector<2x256xf32>
    %857 = arith.select %855, %851, %856 : vector<2x256xi1>, vector<2x256xf32>
    %c54 = arith.constant 54 : index
    %858 = memref.load %arg15[%c54] : memref<98xf32, #tpu.memory_space<smem>>
    %859 = vector.extract_strided_slice %857 {offsets = [0, 0], sizes = [1, 256], strides = [1, 1]} : vector<2x256xf32> to vector<1x256xf32>
    %860 = vector.broadcast %858 : f32 to vector<1x256xf32>
    %861 = arith.mulf %860, %859 : vector<1x256xf32>
    %c55 = arith.constant 55 : index
    %862 = memref.load %arg15[%c55] : memref<98xf32, #tpu.memory_space<smem>>
    %863 = vector.extract_strided_slice %857 {offsets = [1, 0], sizes = [1, 256], strides = [1, 1]} : vector<2x256xf32> to vector<1x256xf32>
    %864 = vector.broadcast %862 : f32 to vector<1x256xf32>
    %865 = arith.mulf %864, %863 : vector<1x256xf32>
    %866 = arith.addf %861, %865 : vector<1x256xf32>
    %867 = arith.addf %850, %866 : vector<1x256xf32>
    %c243_i32 = arith.constant 243 : i32
    %868 = tpu.dynamic_rotate %345 by %c243_i32 dim 1 : vector<2x256xf32>, i32 -> vector<2x256xf32>
    %c240_i32_224 = arith.constant 240 : i32
    %869 = vector.broadcast %c240_i32_224 : i32 to vector<1x256xi32>
    %870 = arith.cmpi slt, %0, %869 : vector<1x256xi32>
    %c3_i32_225 = arith.constant 3 : i32
    %871 = vector.broadcast %c3_i32_225 : i32 to vector<1x256xi32>
    %872 = arith.cmpi sge, %1, %871 : vector<1x256xi32>
    %873 = arith.andi %870, %872 : vector<1x256xi1>
    %cst_226 = arith.constant 0.000000e+00 : f32
    %874 = vector.shape_cast %873 : vector<1x256xi1> to vector<1x256xi1>
    %875 = vector.broadcast %874 : vector<1x256xi1> to vector<2x256xi1>
    %876 = vector.broadcast %cst_226 : f32 to vector<2x256xf32>
    %877 = arith.select %875, %868, %876 : vector<2x256xi1>, vector<2x256xf32>
    %c56 = arith.constant 56 : index
    %878 = memref.load %arg15[%c56] : memref<98xf32, #tpu.memory_space<smem>>
    %879 = vector.extract_strided_slice %877 {offsets = [0, 0], sizes = [1, 256], strides = [1, 1]} : vector<2x256xf32> to vector<1x256xf32>
    %880 = vector.broadcast %878 : f32 to vector<1x256xf32>
    %881 = arith.mulf %880, %879 : vector<1x256xf32>
    %c57 = arith.constant 57 : index
    %882 = memref.load %arg15[%c57] : memref<98xf32, #tpu.memory_space<smem>>
    %883 = vector.extract_strided_slice %877 {offsets = [1, 0], sizes = [1, 256], strides = [1, 1]} : vector<2x256xf32> to vector<1x256xf32>
    %884 = vector.broadcast %882 : f32 to vector<1x256xf32>
    %885 = arith.mulf %884, %883 : vector<1x256xf32>
    %886 = arith.addf %881, %885 : vector<1x256xf32>
    %887 = arith.addf %867, %886 : vector<1x256xf32>
    %c242_i32 = arith.constant 242 : i32
    %888 = tpu.dynamic_rotate %345 by %c242_i32 dim 1 : vector<2x256xf32>, i32 -> vector<2x256xf32>
    %c240_i32_227 = arith.constant 240 : i32
    %889 = vector.broadcast %c240_i32_227 : i32 to vector<1x256xi32>
    %890 = arith.cmpi slt, %0, %889 : vector<1x256xi32>
    %c2_i32_228 = arith.constant 2 : i32
    %891 = vector.broadcast %c2_i32_228 : i32 to vector<1x256xi32>
    %892 = arith.cmpi sge, %1, %891 : vector<1x256xi32>
    %893 = arith.andi %890, %892 : vector<1x256xi1>
    %cst_229 = arith.constant 0.000000e+00 : f32
    %894 = vector.shape_cast %893 : vector<1x256xi1> to vector<1x256xi1>
    %895 = vector.broadcast %894 : vector<1x256xi1> to vector<2x256xi1>
    %896 = vector.broadcast %cst_229 : f32 to vector<2x256xf32>
    %897 = arith.select %895, %888, %896 : vector<2x256xi1>, vector<2x256xf32>
    %c58 = arith.constant 58 : index
    %898 = memref.load %arg15[%c58] : memref<98xf32, #tpu.memory_space<smem>>
    %899 = vector.extract_strided_slice %897 {offsets = [0, 0], sizes = [1, 256], strides = [1, 1]} : vector<2x256xf32> to vector<1x256xf32>
    %900 = vector.broadcast %898 : f32 to vector<1x256xf32>
    %901 = arith.mulf %900, %899 : vector<1x256xf32>
    %c59 = arith.constant 59 : index
    %902 = memref.load %arg15[%c59] : memref<98xf32, #tpu.memory_space<smem>>
    %903 = vector.extract_strided_slice %897 {offsets = [1, 0], sizes = [1, 256], strides = [1, 1]} : vector<2x256xf32> to vector<1x256xf32>
    %904 = vector.broadcast %902 : f32 to vector<1x256xf32>
    %905 = arith.mulf %904, %903 : vector<1x256xf32>
    %906 = arith.addf %901, %905 : vector<1x256xf32>
    %907 = arith.addf %887, %906 : vector<1x256xf32>
    %c241_i32_230 = arith.constant 241 : i32
    %908 = tpu.dynamic_rotate %345 by %c241_i32_230 dim 1 : vector<2x256xf32>, i32 -> vector<2x256xf32>
    %c240_i32_231 = arith.constant 240 : i32
    %909 = vector.broadcast %c240_i32_231 : i32 to vector<1x256xi32>
    %910 = arith.cmpi slt, %0, %909 : vector<1x256xi32>
    %c1_i32_232 = arith.constant 1 : i32
    %911 = vector.broadcast %c1_i32_232 : i32 to vector<1x256xi32>
    %912 = arith.cmpi sge, %1, %911 : vector<1x256xi32>
    %913 = arith.andi %910, %912 : vector<1x256xi1>
    %cst_233 = arith.constant 0.000000e+00 : f32
    %914 = vector.shape_cast %913 : vector<1x256xi1> to vector<1x256xi1>
    %915 = vector.broadcast %914 : vector<1x256xi1> to vector<2x256xi1>
    %916 = vector.broadcast %cst_233 : f32 to vector<2x256xf32>
    %917 = arith.select %915, %908, %916 : vector<2x256xi1>, vector<2x256xf32>
    %c60 = arith.constant 60 : index
    %918 = memref.load %arg15[%c60] : memref<98xf32, #tpu.memory_space<smem>>
    %919 = vector.extract_strided_slice %917 {offsets = [0, 0], sizes = [1, 256], strides = [1, 1]} : vector<2x256xf32> to vector<1x256xf32>
    %920 = vector.broadcast %918 : f32 to vector<1x256xf32>
    %921 = arith.mulf %920, %919 : vector<1x256xf32>
    %c61 = arith.constant 61 : index
    %922 = memref.load %arg15[%c61] : memref<98xf32, #tpu.memory_space<smem>>
    %923 = vector.extract_strided_slice %917 {offsets = [1, 0], sizes = [1, 256], strides = [1, 1]} : vector<2x256xf32> to vector<1x256xf32>
    %924 = vector.broadcast %922 : f32 to vector<1x256xf32>
    %925 = arith.mulf %924, %923 : vector<1x256xf32>
    %926 = arith.addf %921, %925 : vector<1x256xf32>
    %927 = arith.addf %907, %926 : vector<1x256xf32>
    %c240_i32_234 = arith.constant 240 : i32
    %928 = tpu.dynamic_rotate %345 by %c240_i32_234 dim 1 : vector<2x256xf32>, i32 -> vector<2x256xf32>
    %c240_i32_235 = arith.constant 240 : i32
    %929 = vector.broadcast %c240_i32_235 : i32 to vector<1x256xi32>
    %930 = arith.cmpi slt, %0, %929 : vector<1x256xi32>
    %cst_236 = arith.constant 0.000000e+00 : f32
    %931 = vector.shape_cast %930 : vector<1x256xi1> to vector<1x256xi1>
    %932 = vector.broadcast %931 : vector<1x256xi1> to vector<2x256xi1>
    %933 = vector.broadcast %cst_236 : f32 to vector<2x256xf32>
    %934 = arith.select %932, %928, %933 : vector<2x256xi1>, vector<2x256xf32>
    %c62 = arith.constant 62 : index
    %935 = memref.load %arg15[%c62] : memref<98xf32, #tpu.memory_space<smem>>
    %936 = vector.extract_strided_slice %934 {offsets = [0, 0], sizes = [1, 256], strides = [1, 1]} : vector<2x256xf32> to vector<1x256xf32>
    %937 = vector.broadcast %935 : f32 to vector<1x256xf32>
    %938 = arith.mulf %937, %936 : vector<1x256xf32>
    %c63 = arith.constant 63 : index
    %939 = memref.load %arg15[%c63] : memref<98xf32, #tpu.memory_space<smem>>
    %940 = vector.extract_strided_slice %934 {offsets = [1, 0], sizes = [1, 256], strides = [1, 1]} : vector<2x256xf32> to vector<1x256xf32>
    %941 = vector.broadcast %939 : f32 to vector<1x256xf32>
    %942 = arith.mulf %941, %940 : vector<1x256xf32>
    %943 = arith.addf %938, %942 : vector<1x256xf32>
    %944 = arith.addf %927, %943 : vector<1x256xf32>
    %c239_i32_237 = arith.constant 239 : i32
    %945 = tpu.dynamic_rotate %345 by %c239_i32_237 dim 1 : vector<2x256xf32>, i32 -> vector<2x256xf32>
    %c240_i32_238 = arith.constant 240 : i32
    %946 = vector.broadcast %c240_i32_238 : i32 to vector<1x256xi32>
    %947 = arith.cmpi slt, %0, %946 : vector<1x256xi32>
    %c15_i32_239 = arith.constant 15 : i32
    %948 = vector.broadcast %c15_i32_239 : i32 to vector<1x256xi32>
    %949 = arith.cmpi slt, %1, %948 : vector<1x256xi32>
    %950 = arith.andi %947, %949 : vector<1x256xi1>
    %cst_240 = arith.constant 0.000000e+00 : f32
    %951 = vector.shape_cast %950 : vector<1x256xi1> to vector<1x256xi1>
    %952 = vector.broadcast %951 : vector<1x256xi1> to vector<2x256xi1>
    %953 = vector.broadcast %cst_240 : f32 to vector<2x256xf32>
    %954 = arith.select %952, %945, %953 : vector<2x256xi1>, vector<2x256xf32>
    %c64 = arith.constant 64 : index
    %955 = memref.load %arg15[%c64] : memref<98xf32, #tpu.memory_space<smem>>
    %956 = vector.extract_strided_slice %954 {offsets = [0, 0], sizes = [1, 256], strides = [1, 1]} : vector<2x256xf32> to vector<1x256xf32>
    %957 = vector.broadcast %955 : f32 to vector<1x256xf32>
    %958 = arith.mulf %957, %956 : vector<1x256xf32>
    %c65 = arith.constant 65 : index
    %959 = memref.load %arg15[%c65] : memref<98xf32, #tpu.memory_space<smem>>
    %960 = vector.extract_strided_slice %954 {offsets = [1, 0], sizes = [1, 256], strides = [1, 1]} : vector<2x256xf32> to vector<1x256xf32>
    %961 = vector.broadcast %959 : f32 to vector<1x256xf32>
    %962 = arith.mulf %961, %960 : vector<1x256xf32>
    %963 = arith.addf %958, %962 : vector<1x256xf32>
    %964 = arith.addf %944, %963 : vector<1x256xf32>
    %c238_i32 = arith.constant 238 : i32
    %965 = tpu.dynamic_rotate %345 by %c238_i32 dim 1 : vector<2x256xf32>, i32 -> vector<2x256xf32>
    %c240_i32_241 = arith.constant 240 : i32
    %966 = vector.broadcast %c240_i32_241 : i32 to vector<1x256xi32>
    %967 = arith.cmpi slt, %0, %966 : vector<1x256xi32>
    %c14_i32_242 = arith.constant 14 : i32
    %968 = vector.broadcast %c14_i32_242 : i32 to vector<1x256xi32>
    %969 = arith.cmpi slt, %1, %968 : vector<1x256xi32>
    %970 = arith.andi %967, %969 : vector<1x256xi1>
    %cst_243 = arith.constant 0.000000e+00 : f32
    %971 = vector.shape_cast %970 : vector<1x256xi1> to vector<1x256xi1>
    %972 = vector.broadcast %971 : vector<1x256xi1> to vector<2x256xi1>
    %973 = vector.broadcast %cst_243 : f32 to vector<2x256xf32>
    %974 = arith.select %972, %965, %973 : vector<2x256xi1>, vector<2x256xf32>
    %c66 = arith.constant 66 : index
    %975 = memref.load %arg15[%c66] : memref<98xf32, #tpu.memory_space<smem>>
    %976 = vector.extract_strided_slice %974 {offsets = [0, 0], sizes = [1, 256], strides = [1, 1]} : vector<2x256xf32> to vector<1x256xf32>
    %977 = vector.broadcast %975 : f32 to vector<1x256xf32>
    %978 = arith.mulf %977, %976 : vector<1x256xf32>
    %c67 = arith.constant 67 : index
    %979 = memref.load %arg15[%c67] : memref<98xf32, #tpu.memory_space<smem>>
    %980 = vector.extract_strided_slice %974 {offsets = [1, 0], sizes = [1, 256], strides = [1, 1]} : vector<2x256xf32> to vector<1x256xf32>
    %981 = vector.broadcast %979 : f32 to vector<1x256xf32>
    %982 = arith.mulf %981, %980 : vector<1x256xf32>
    %983 = arith.addf %978, %982 : vector<1x256xf32>
    %984 = arith.addf %964, %983 : vector<1x256xf32>
    %c237_i32 = arith.constant 237 : i32
    %985 = tpu.dynamic_rotate %345 by %c237_i32 dim 1 : vector<2x256xf32>, i32 -> vector<2x256xf32>
    %c240_i32_244 = arith.constant 240 : i32
    %986 = vector.broadcast %c240_i32_244 : i32 to vector<1x256xi32>
    %987 = arith.cmpi slt, %0, %986 : vector<1x256xi32>
    %c13_i32_245 = arith.constant 13 : i32
    %988 = vector.broadcast %c13_i32_245 : i32 to vector<1x256xi32>
    %989 = arith.cmpi slt, %1, %988 : vector<1x256xi32>
    %990 = arith.andi %987, %989 : vector<1x256xi1>
    %cst_246 = arith.constant 0.000000e+00 : f32
    %991 = vector.shape_cast %990 : vector<1x256xi1> to vector<1x256xi1>
    %992 = vector.broadcast %991 : vector<1x256xi1> to vector<2x256xi1>
    %993 = vector.broadcast %cst_246 : f32 to vector<2x256xf32>
    %994 = arith.select %992, %985, %993 : vector<2x256xi1>, vector<2x256xf32>
    %c68 = arith.constant 68 : index
    %995 = memref.load %arg15[%c68] : memref<98xf32, #tpu.memory_space<smem>>
    %996 = vector.extract_strided_slice %994 {offsets = [0, 0], sizes = [1, 256], strides = [1, 1]} : vector<2x256xf32> to vector<1x256xf32>
    %997 = vector.broadcast %995 : f32 to vector<1x256xf32>
    %998 = arith.mulf %997, %996 : vector<1x256xf32>
    %c69 = arith.constant 69 : index
    %999 = memref.load %arg15[%c69] : memref<98xf32, #tpu.memory_space<smem>>
    %1000 = vector.extract_strided_slice %994 {offsets = [1, 0], sizes = [1, 256], strides = [1, 1]} : vector<2x256xf32> to vector<1x256xf32>
    %1001 = vector.broadcast %999 : f32 to vector<1x256xf32>
    %1002 = arith.mulf %1001, %1000 : vector<1x256xf32>
    %1003 = arith.addf %998, %1002 : vector<1x256xf32>
    %1004 = arith.addf %984, %1003 : vector<1x256xf32>
    %c227_i32 = arith.constant 227 : i32
    %1005 = tpu.dynamic_rotate %345 by %c227_i32 dim 1 : vector<2x256xf32>, i32 -> vector<2x256xf32>
    %c224_i32_247 = arith.constant 224 : i32
    %1006 = vector.broadcast %c224_i32_247 : i32 to vector<1x256xi32>
    %1007 = arith.cmpi slt, %0, %1006 : vector<1x256xi32>
    %c3_i32_248 = arith.constant 3 : i32
    %1008 = vector.broadcast %c3_i32_248 : i32 to vector<1x256xi32>
    %1009 = arith.cmpi sge, %1, %1008 : vector<1x256xi32>
    %1010 = arith.andi %1007, %1009 : vector<1x256xi1>
    %cst_249 = arith.constant 0.000000e+00 : f32
    %1011 = vector.shape_cast %1010 : vector<1x256xi1> to vector<1x256xi1>
    %1012 = vector.broadcast %1011 : vector<1x256xi1> to vector<2x256xi1>
    %1013 = vector.broadcast %cst_249 : f32 to vector<2x256xf32>
    %1014 = arith.select %1012, %1005, %1013 : vector<2x256xi1>, vector<2x256xf32>
    %c70 = arith.constant 70 : index
    %1015 = memref.load %arg15[%c70] : memref<98xf32, #tpu.memory_space<smem>>
    %1016 = vector.extract_strided_slice %1014 {offsets = [0, 0], sizes = [1, 256], strides = [1, 1]} : vector<2x256xf32> to vector<1x256xf32>
    %1017 = vector.broadcast %1015 : f32 to vector<1x256xf32>
    %1018 = arith.mulf %1017, %1016 : vector<1x256xf32>
    %c71 = arith.constant 71 : index
    %1019 = memref.load %arg15[%c71] : memref<98xf32, #tpu.memory_space<smem>>
    %1020 = vector.extract_strided_slice %1014 {offsets = [1, 0], sizes = [1, 256], strides = [1, 1]} : vector<2x256xf32> to vector<1x256xf32>
    %1021 = vector.broadcast %1019 : f32 to vector<1x256xf32>
    %1022 = arith.mulf %1021, %1020 : vector<1x256xf32>
    %1023 = arith.addf %1018, %1022 : vector<1x256xf32>
    %1024 = arith.addf %1004, %1023 : vector<1x256xf32>
    %c226_i32_250 = arith.constant 226 : i32
    %1025 = tpu.dynamic_rotate %345 by %c226_i32_250 dim 1 : vector<2x256xf32>, i32 -> vector<2x256xf32>
    %c224_i32_251 = arith.constant 224 : i32
    %1026 = vector.broadcast %c224_i32_251 : i32 to vector<1x256xi32>
    %1027 = arith.cmpi slt, %0, %1026 : vector<1x256xi32>
    %c2_i32_252 = arith.constant 2 : i32
    %1028 = vector.broadcast %c2_i32_252 : i32 to vector<1x256xi32>
    %1029 = arith.cmpi sge, %1, %1028 : vector<1x256xi32>
    %1030 = arith.andi %1027, %1029 : vector<1x256xi1>
    %cst_253 = arith.constant 0.000000e+00 : f32
    %1031 = vector.shape_cast %1030 : vector<1x256xi1> to vector<1x256xi1>
    %1032 = vector.broadcast %1031 : vector<1x256xi1> to vector<2x256xi1>
    %1033 = vector.broadcast %cst_253 : f32 to vector<2x256xf32>
    %1034 = arith.select %1032, %1025, %1033 : vector<2x256xi1>, vector<2x256xf32>
    %c72 = arith.constant 72 : index
    %1035 = memref.load %arg15[%c72] : memref<98xf32, #tpu.memory_space<smem>>
    %1036 = vector.extract_strided_slice %1034 {offsets = [0, 0], sizes = [1, 256], strides = [1, 1]} : vector<2x256xf32> to vector<1x256xf32>
    %1037 = vector.broadcast %1035 : f32 to vector<1x256xf32>
    %1038 = arith.mulf %1037, %1036 : vector<1x256xf32>
    %c73 = arith.constant 73 : index
    %1039 = memref.load %arg15[%c73] : memref<98xf32, #tpu.memory_space<smem>>
    %1040 = vector.extract_strided_slice %1034 {offsets = [1, 0], sizes = [1, 256], strides = [1, 1]} : vector<2x256xf32> to vector<1x256xf32>
    %1041 = vector.broadcast %1039 : f32 to vector<1x256xf32>
    %1042 = arith.mulf %1041, %1040 : vector<1x256xf32>
    %1043 = arith.addf %1038, %1042 : vector<1x256xf32>
    %1044 = arith.addf %1024, %1043 : vector<1x256xf32>
    %c225_i32 = arith.constant 225 : i32
    %1045 = tpu.dynamic_rotate %345 by %c225_i32 dim 1 : vector<2x256xf32>, i32 -> vector<2x256xf32>
    %c224_i32_254 = arith.constant 224 : i32
    %1046 = vector.broadcast %c224_i32_254 : i32 to vector<1x256xi32>
    %1047 = arith.cmpi slt, %0, %1046 : vector<1x256xi32>
    %c1_i32_255 = arith.constant 1 : i32
    %1048 = vector.broadcast %c1_i32_255 : i32 to vector<1x256xi32>
    %1049 = arith.cmpi sge, %1, %1048 : vector<1x256xi32>
    %1050 = arith.andi %1047, %1049 : vector<1x256xi1>
    %cst_256 = arith.constant 0.000000e+00 : f32
    %1051 = vector.shape_cast %1050 : vector<1x256xi1> to vector<1x256xi1>
    %1052 = vector.broadcast %1051 : vector<1x256xi1> to vector<2x256xi1>
    %1053 = vector.broadcast %cst_256 : f32 to vector<2x256xf32>
    %1054 = arith.select %1052, %1045, %1053 : vector<2x256xi1>, vector<2x256xf32>
    %c74 = arith.constant 74 : index
    %1055 = memref.load %arg15[%c74] : memref<98xf32, #tpu.memory_space<smem>>
    %1056 = vector.extract_strided_slice %1054 {offsets = [0, 0], sizes = [1, 256], strides = [1, 1]} : vector<2x256xf32> to vector<1x256xf32>
    %1057 = vector.broadcast %1055 : f32 to vector<1x256xf32>
    %1058 = arith.mulf %1057, %1056 : vector<1x256xf32>
    %c75 = arith.constant 75 : index
    %1059 = memref.load %arg15[%c75] : memref<98xf32, #tpu.memory_space<smem>>
    %1060 = vector.extract_strided_slice %1054 {offsets = [1, 0], sizes = [1, 256], strides = [1, 1]} : vector<2x256xf32> to vector<1x256xf32>
    %1061 = vector.broadcast %1059 : f32 to vector<1x256xf32>
    %1062 = arith.mulf %1061, %1060 : vector<1x256xf32>
    %1063 = arith.addf %1058, %1062 : vector<1x256xf32>
    %1064 = arith.addf %1044, %1063 : vector<1x256xf32>
    %c224_i32_257 = arith.constant 224 : i32
    %1065 = tpu.dynamic_rotate %345 by %c224_i32_257 dim 1 : vector<2x256xf32>, i32 -> vector<2x256xf32>
    %c224_i32_258 = arith.constant 224 : i32
    %1066 = vector.broadcast %c224_i32_258 : i32 to vector<1x256xi32>
    %1067 = arith.cmpi slt, %0, %1066 : vector<1x256xi32>
    %cst_259 = arith.constant 0.000000e+00 : f32
    %1068 = vector.shape_cast %1067 : vector<1x256xi1> to vector<1x256xi1>
    %1069 = vector.broadcast %1068 : vector<1x256xi1> to vector<2x256xi1>
    %1070 = vector.broadcast %cst_259 : f32 to vector<2x256xf32>
    %1071 = arith.select %1069, %1065, %1070 : vector<2x256xi1>, vector<2x256xf32>
    %c76 = arith.constant 76 : index
    %1072 = memref.load %arg15[%c76] : memref<98xf32, #tpu.memory_space<smem>>
    %1073 = vector.extract_strided_slice %1071 {offsets = [0, 0], sizes = [1, 256], strides = [1, 1]} : vector<2x256xf32> to vector<1x256xf32>
    %1074 = vector.broadcast %1072 : f32 to vector<1x256xf32>
    %1075 = arith.mulf %1074, %1073 : vector<1x256xf32>
    %c77 = arith.constant 77 : index
    %1076 = memref.load %arg15[%c77] : memref<98xf32, #tpu.memory_space<smem>>
    %1077 = vector.extract_strided_slice %1071 {offsets = [1, 0], sizes = [1, 256], strides = [1, 1]} : vector<2x256xf32> to vector<1x256xf32>
    %1078 = vector.broadcast %1076 : f32 to vector<1x256xf32>
    %1079 = arith.mulf %1078, %1077 : vector<1x256xf32>
    %1080 = arith.addf %1075, %1079 : vector<1x256xf32>
    %1081 = arith.addf %1064, %1080 : vector<1x256xf32>
    %c223_i32 = arith.constant 223 : i32
    %1082 = tpu.dynamic_rotate %345 by %c223_i32 dim 1 : vector<2x256xf32>, i32 -> vector<2x256xf32>
    %c224_i32_260 = arith.constant 224 : i32
    %1083 = vector.broadcast %c224_i32_260 : i32 to vector<1x256xi32>
    %1084 = arith.cmpi slt, %0, %1083 : vector<1x256xi32>
    %c15_i32_261 = arith.constant 15 : i32
    %1085 = vector.broadcast %c15_i32_261 : i32 to vector<1x256xi32>
    %1086 = arith.cmpi slt, %1, %1085 : vector<1x256xi32>
    %1087 = arith.andi %1084, %1086 : vector<1x256xi1>
    %cst_262 = arith.constant 0.000000e+00 : f32
    %1088 = vector.shape_cast %1087 : vector<1x256xi1> to vector<1x256xi1>
    %1089 = vector.broadcast %1088 : vector<1x256xi1> to vector<2x256xi1>
    %1090 = vector.broadcast %cst_262 : f32 to vector<2x256xf32>
    %1091 = arith.select %1089, %1082, %1090 : vector<2x256xi1>, vector<2x256xf32>
    %c78 = arith.constant 78 : index
    %1092 = memref.load %arg15[%c78] : memref<98xf32, #tpu.memory_space<smem>>
    %1093 = vector.extract_strided_slice %1091 {offsets = [0, 0], sizes = [1, 256], strides = [1, 1]} : vector<2x256xf32> to vector<1x256xf32>
    %1094 = vector.broadcast %1092 : f32 to vector<1x256xf32>
    %1095 = arith.mulf %1094, %1093 : vector<1x256xf32>
    %c79 = arith.constant 79 : index
    %1096 = memref.load %arg15[%c79] : memref<98xf32, #tpu.memory_space<smem>>
    %1097 = vector.extract_strided_slice %1091 {offsets = [1, 0], sizes = [1, 256], strides = [1, 1]} : vector<2x256xf32> to vector<1x256xf32>
    %1098 = vector.broadcast %1096 : f32 to vector<1x256xf32>
    %1099 = arith.mulf %1098, %1097 : vector<1x256xf32>
    %1100 = arith.addf %1095, %1099 : vector<1x256xf32>
    %1101 = arith.addf %1081, %1100 : vector<1x256xf32>
    %c222_i32_263 = arith.constant 222 : i32
    %1102 = tpu.dynamic_rotate %345 by %c222_i32_263 dim 1 : vector<2x256xf32>, i32 -> vector<2x256xf32>
    %c224_i32_264 = arith.constant 224 : i32
    %1103 = vector.broadcast %c224_i32_264 : i32 to vector<1x256xi32>
    %1104 = arith.cmpi slt, %0, %1103 : vector<1x256xi32>
    %c14_i32_265 = arith.constant 14 : i32
    %1105 = vector.broadcast %c14_i32_265 : i32 to vector<1x256xi32>
    %1106 = arith.cmpi slt, %1, %1105 : vector<1x256xi32>
    %1107 = arith.andi %1104, %1106 : vector<1x256xi1>
    %cst_266 = arith.constant 0.000000e+00 : f32
    %1108 = vector.shape_cast %1107 : vector<1x256xi1> to vector<1x256xi1>
    %1109 = vector.broadcast %1108 : vector<1x256xi1> to vector<2x256xi1>
    %1110 = vector.broadcast %cst_266 : f32 to vector<2x256xf32>
    %1111 = arith.select %1109, %1102, %1110 : vector<2x256xi1>, vector<2x256xf32>
    %c80 = arith.constant 80 : index
    %1112 = memref.load %arg15[%c80] : memref<98xf32, #tpu.memory_space<smem>>
    %1113 = vector.extract_strided_slice %1111 {offsets = [0, 0], sizes = [1, 256], strides = [1, 1]} : vector<2x256xf32> to vector<1x256xf32>
    %1114 = vector.broadcast %1112 : f32 to vector<1x256xf32>
    %1115 = arith.mulf %1114, %1113 : vector<1x256xf32>
    %c81 = arith.constant 81 : index
    %1116 = memref.load %arg15[%c81] : memref<98xf32, #tpu.memory_space<smem>>
    %1117 = vector.extract_strided_slice %1111 {offsets = [1, 0], sizes = [1, 256], strides = [1, 1]} : vector<2x256xf32> to vector<1x256xf32>
    %1118 = vector.broadcast %1116 : f32 to vector<1x256xf32>
    %1119 = arith.mulf %1118, %1117 : vector<1x256xf32>
    %1120 = arith.addf %1115, %1119 : vector<1x256xf32>
    %1121 = arith.addf %1101, %1120 : vector<1x256xf32>
    %c221_i32 = arith.constant 221 : i32
    %1122 = tpu.dynamic_rotate %345 by %c221_i32 dim 1 : vector<2x256xf32>, i32 -> vector<2x256xf32>
    %c224_i32_267 = arith.constant 224 : i32
    %1123 = vector.broadcast %c224_i32_267 : i32 to vector<1x256xi32>
    %1124 = arith.cmpi slt, %0, %1123 : vector<1x256xi32>
    %c13_i32_268 = arith.constant 13 : i32
    %1125 = vector.broadcast %c13_i32_268 : i32 to vector<1x256xi32>
    %1126 = arith.cmpi slt, %1, %1125 : vector<1x256xi32>
    %1127 = arith.andi %1124, %1126 : vector<1x256xi1>
    %cst_269 = arith.constant 0.000000e+00 : f32
    %1128 = vector.shape_cast %1127 : vector<1x256xi1> to vector<1x256xi1>
    %1129 = vector.broadcast %1128 : vector<1x256xi1> to vector<2x256xi1>
    %1130 = vector.broadcast %cst_269 : f32 to vector<2x256xf32>
    %1131 = arith.select %1129, %1122, %1130 : vector<2x256xi1>, vector<2x256xf32>
    %c82 = arith.constant 82 : index
    %1132 = memref.load %arg15[%c82] : memref<98xf32, #tpu.memory_space<smem>>
    %1133 = vector.extract_strided_slice %1131 {offsets = [0, 0], sizes = [1, 256], strides = [1, 1]} : vector<2x256xf32> to vector<1x256xf32>
    %1134 = vector.broadcast %1132 : f32 to vector<1x256xf32>
    %1135 = arith.mulf %1134, %1133 : vector<1x256xf32>
    %c83 = arith.constant 83 : index
    %1136 = memref.load %arg15[%c83] : memref<98xf32, #tpu.memory_space<smem>>
    %1137 = vector.extract_strided_slice %1131 {offsets = [1, 0], sizes = [1, 256], strides = [1, 1]} : vector<2x256xf32> to vector<1x256xf32>
    %1138 = vector.broadcast %1136 : f32 to vector<1x256xf32>
    %1139 = arith.mulf %1138, %1137 : vector<1x256xf32>
    %1140 = arith.addf %1135, %1139 : vector<1x256xf32>
    %1141 = arith.addf %1121, %1140 : vector<1x256xf32>
    %c211_i32 = arith.constant 211 : i32
    %1142 = tpu.dynamic_rotate %345 by %c211_i32 dim 1 : vector<2x256xf32>, i32 -> vector<2x256xf32>
    %c208_i32 = arith.constant 208 : i32
    %1143 = vector.broadcast %c208_i32 : i32 to vector<1x256xi32>
    %1144 = arith.cmpi slt, %0, %1143 : vector<1x256xi32>
    %c3_i32_270 = arith.constant 3 : i32
    %1145 = vector.broadcast %c3_i32_270 : i32 to vector<1x256xi32>
    %1146 = arith.cmpi sge, %1, %1145 : vector<1x256xi32>
    %1147 = arith.andi %1144, %1146 : vector<1x256xi1>
    %cst_271 = arith.constant 0.000000e+00 : f32
    %1148 = vector.shape_cast %1147 : vector<1x256xi1> to vector<1x256xi1>
    %1149 = vector.broadcast %1148 : vector<1x256xi1> to vector<2x256xi1>
    %1150 = vector.broadcast %cst_271 : f32 to vector<2x256xf32>
    %1151 = arith.select %1149, %1142, %1150 : vector<2x256xi1>, vector<2x256xf32>
    %c84 = arith.constant 84 : index
    %1152 = memref.load %arg15[%c84] : memref<98xf32, #tpu.memory_space<smem>>
    %1153 = vector.extract_strided_slice %1151 {offsets = [0, 0], sizes = [1, 256], strides = [1, 1]} : vector<2x256xf32> to vector<1x256xf32>
    %1154 = vector.broadcast %1152 : f32 to vector<1x256xf32>
    %1155 = arith.mulf %1154, %1153 : vector<1x256xf32>
    %c85 = arith.constant 85 : index
    %1156 = memref.load %arg15[%c85] : memref<98xf32, #tpu.memory_space<smem>>
    %1157 = vector.extract_strided_slice %1151 {offsets = [1, 0], sizes = [1, 256], strides = [1, 1]} : vector<2x256xf32> to vector<1x256xf32>
    %1158 = vector.broadcast %1156 : f32 to vector<1x256xf32>
    %1159 = arith.mulf %1158, %1157 : vector<1x256xf32>
    %1160 = arith.addf %1155, %1159 : vector<1x256xf32>
    %1161 = arith.addf %1141, %1160 : vector<1x256xf32>
    %c210_i32 = arith.constant 210 : i32
    %1162 = tpu.dynamic_rotate %345 by %c210_i32 dim 1 : vector<2x256xf32>, i32 -> vector<2x256xf32>
    %c208_i32_272 = arith.constant 208 : i32
    %1163 = vector.broadcast %c208_i32_272 : i32 to vector<1x256xi32>
    %1164 = arith.cmpi slt, %0, %1163 : vector<1x256xi32>
    %c2_i32_273 = arith.constant 2 : i32
    %1165 = vector.broadcast %c2_i32_273 : i32 to vector<1x256xi32>
    %1166 = arith.cmpi sge, %1, %1165 : vector<1x256xi32>
    %1167 = arith.andi %1164, %1166 : vector<1x256xi1>
    %cst_274 = arith.constant 0.000000e+00 : f32
    %1168 = vector.shape_cast %1167 : vector<1x256xi1> to vector<1x256xi1>
    %1169 = vector.broadcast %1168 : vector<1x256xi1> to vector<2x256xi1>
    %1170 = vector.broadcast %cst_274 : f32 to vector<2x256xf32>
    %1171 = arith.select %1169, %1162, %1170 : vector<2x256xi1>, vector<2x256xf32>
    %c86 = arith.constant 86 : index
    %1172 = memref.load %arg15[%c86] : memref<98xf32, #tpu.memory_space<smem>>
    %1173 = vector.extract_strided_slice %1171 {offsets = [0, 0], sizes = [1, 256], strides = [1, 1]} : vector<2x256xf32> to vector<1x256xf32>
    %1174 = vector.broadcast %1172 : f32 to vector<1x256xf32>
    %1175 = arith.mulf %1174, %1173 : vector<1x256xf32>
    %c87 = arith.constant 87 : index
    %1176 = memref.load %arg15[%c87] : memref<98xf32, #tpu.memory_space<smem>>
    %1177 = vector.extract_strided_slice %1171 {offsets = [1, 0], sizes = [1, 256], strides = [1, 1]} : vector<2x256xf32> to vector<1x256xf32>
    %1178 = vector.broadcast %1176 : f32 to vector<1x256xf32>
    %1179 = arith.mulf %1178, %1177 : vector<1x256xf32>
    %1180 = arith.addf %1175, %1179 : vector<1x256xf32>
    %1181 = arith.addf %1161, %1180 : vector<1x256xf32>
    %c209_i32 = arith.constant 209 : i32
    %1182 = tpu.dynamic_rotate %345 by %c209_i32 dim 1 : vector<2x256xf32>, i32 -> vector<2x256xf32>
    %c208_i32_275 = arith.constant 208 : i32
    %1183 = vector.broadcast %c208_i32_275 : i32 to vector<1x256xi32>
    %1184 = arith.cmpi slt, %0, %1183 : vector<1x256xi32>
    %c1_i32_276 = arith.constant 1 : i32
    %1185 = vector.broadcast %c1_i32_276 : i32 to vector<1x256xi32>
    %1186 = arith.cmpi sge, %1, %1185 : vector<1x256xi32>
    %1187 = arith.andi %1184, %1186 : vector<1x256xi1>
    %cst_277 = arith.constant 0.000000e+00 : f32
    %1188 = vector.shape_cast %1187 : vector<1x256xi1> to vector<1x256xi1>
    %1189 = vector.broadcast %1188 : vector<1x256xi1> to vector<2x256xi1>
    %1190 = vector.broadcast %cst_277 : f32 to vector<2x256xf32>
    %1191 = arith.select %1189, %1182, %1190 : vector<2x256xi1>, vector<2x256xf32>
    %c88 = arith.constant 88 : index
    %1192 = memref.load %arg15[%c88] : memref<98xf32, #tpu.memory_space<smem>>
    %1193 = vector.extract_strided_slice %1191 {offsets = [0, 0], sizes = [1, 256], strides = [1, 1]} : vector<2x256xf32> to vector<1x256xf32>
    %1194 = vector.broadcast %1192 : f32 to vector<1x256xf32>
    %1195 = arith.mulf %1194, %1193 : vector<1x256xf32>
    %c89 = arith.constant 89 : index
    %1196 = memref.load %arg15[%c89] : memref<98xf32, #tpu.memory_space<smem>>
    %1197 = vector.extract_strided_slice %1191 {offsets = [1, 0], sizes = [1, 256], strides = [1, 1]} : vector<2x256xf32> to vector<1x256xf32>
    %1198 = vector.broadcast %1196 : f32 to vector<1x256xf32>
    %1199 = arith.mulf %1198, %1197 : vector<1x256xf32>
    %1200 = arith.addf %1195, %1199 : vector<1x256xf32>
    %1201 = arith.addf %1181, %1200 : vector<1x256xf32>
    %c208_i32_278 = arith.constant 208 : i32
    %1202 = tpu.dynamic_rotate %345 by %c208_i32_278 dim 1 : vector<2x256xf32>, i32 -> vector<2x256xf32>
    %c208_i32_279 = arith.constant 208 : i32
    %1203 = vector.broadcast %c208_i32_279 : i32 to vector<1x256xi32>
    %1204 = arith.cmpi slt, %0, %1203 : vector<1x256xi32>
    %cst_280 = arith.constant 0.000000e+00 : f32
    %1205 = vector.shape_cast %1204 : vector<1x256xi1> to vector<1x256xi1>
    %1206 = vector.broadcast %1205 : vector<1x256xi1> to vector<2x256xi1>
    %1207 = vector.broadcast %cst_280 : f32 to vector<2x256xf32>
    %1208 = arith.select %1206, %1202, %1207 : vector<2x256xi1>, vector<2x256xf32>
    %c90 = arith.constant 90 : index
    %1209 = memref.load %arg15[%c90] : memref<98xf32, #tpu.memory_space<smem>>
    %1210 = vector.extract_strided_slice %1208 {offsets = [0, 0], sizes = [1, 256], strides = [1, 1]} : vector<2x256xf32> to vector<1x256xf32>
    %1211 = vector.broadcast %1209 : f32 to vector<1x256xf32>
    %1212 = arith.mulf %1211, %1210 : vector<1x256xf32>
    %c91 = arith.constant 91 : index
    %1213 = memref.load %arg15[%c91] : memref<98xf32, #tpu.memory_space<smem>>
    %1214 = vector.extract_strided_slice %1208 {offsets = [1, 0], sizes = [1, 256], strides = [1, 1]} : vector<2x256xf32> to vector<1x256xf32>
    %1215 = vector.broadcast %1213 : f32 to vector<1x256xf32>
    %1216 = arith.mulf %1215, %1214 : vector<1x256xf32>
    %1217 = arith.addf %1212, %1216 : vector<1x256xf32>
    %1218 = arith.addf %1201, %1217 : vector<1x256xf32>
    %c207_i32 = arith.constant 207 : i32
    %1219 = tpu.dynamic_rotate %345 by %c207_i32 dim 1 : vector<2x256xf32>, i32 -> vector<2x256xf32>
    %c208_i32_281 = arith.constant 208 : i32
    %1220 = vector.broadcast %c208_i32_281 : i32 to vector<1x256xi32>
    %1221 = arith.cmpi slt, %0, %1220 : vector<1x256xi32>
    %c15_i32_282 = arith.constant 15 : i32
    %1222 = vector.broadcast %c15_i32_282 : i32 to vector<1x256xi32>
    %1223 = arith.cmpi slt, %1, %1222 : vector<1x256xi32>
    %1224 = arith.andi %1221, %1223 : vector<1x256xi1>
    %cst_283 = arith.constant 0.000000e+00 : f32
    %1225 = vector.shape_cast %1224 : vector<1x256xi1> to vector<1x256xi1>
    %1226 = vector.broadcast %1225 : vector<1x256xi1> to vector<2x256xi1>
    %1227 = vector.broadcast %cst_283 : f32 to vector<2x256xf32>
    %1228 = arith.select %1226, %1219, %1227 : vector<2x256xi1>, vector<2x256xf32>
    %c92 = arith.constant 92 : index
    %1229 = memref.load %arg15[%c92] : memref<98xf32, #tpu.memory_space<smem>>
    %1230 = vector.extract_strided_slice %1228 {offsets = [0, 0], sizes = [1, 256], strides = [1, 1]} : vector<2x256xf32> to vector<1x256xf32>
    %1231 = vector.broadcast %1229 : f32 to vector<1x256xf32>
    %1232 = arith.mulf %1231, %1230 : vector<1x256xf32>
    %c93 = arith.constant 93 : index
    %1233 = memref.load %arg15[%c93] : memref<98xf32, #tpu.memory_space<smem>>
    %1234 = vector.extract_strided_slice %1228 {offsets = [1, 0], sizes = [1, 256], strides = [1, 1]} : vector<2x256xf32> to vector<1x256xf32>
    %1235 = vector.broadcast %1233 : f32 to vector<1x256xf32>
    %1236 = arith.mulf %1235, %1234 : vector<1x256xf32>
    %1237 = arith.addf %1232, %1236 : vector<1x256xf32>
    %1238 = arith.addf %1218, %1237 : vector<1x256xf32>
    %c206_i32 = arith.constant 206 : i32
    %1239 = tpu.dynamic_rotate %345 by %c206_i32 dim 1 : vector<2x256xf32>, i32 -> vector<2x256xf32>
    %c208_i32_284 = arith.constant 208 : i32
    %1240 = vector.broadcast %c208_i32_284 : i32 to vector<1x256xi32>
    %1241 = arith.cmpi slt, %0, %1240 : vector<1x256xi32>
    %c14_i32_285 = arith.constant 14 : i32
    %1242 = vector.broadcast %c14_i32_285 : i32 to vector<1x256xi32>
    %1243 = arith.cmpi slt, %1, %1242 : vector<1x256xi32>
    %1244 = arith.andi %1241, %1243 : vector<1x256xi1>
    %cst_286 = arith.constant 0.000000e+00 : f32
    %1245 = vector.shape_cast %1244 : vector<1x256xi1> to vector<1x256xi1>
    %1246 = vector.broadcast %1245 : vector<1x256xi1> to vector<2x256xi1>
    %1247 = vector.broadcast %cst_286 : f32 to vector<2x256xf32>
    %1248 = arith.select %1246, %1239, %1247 : vector<2x256xi1>, vector<2x256xf32>
    %c94 = arith.constant 94 : index
    %1249 = memref.load %arg15[%c94] : memref<98xf32, #tpu.memory_space<smem>>
    %1250 = vector.extract_strided_slice %1248 {offsets = [0, 0], sizes = [1, 256], strides = [1, 1]} : vector<2x256xf32> to vector<1x256xf32>
    %1251 = vector.broadcast %1249 : f32 to vector<1x256xf32>
    %1252 = arith.mulf %1251, %1250 : vector<1x256xf32>
    %c95 = arith.constant 95 : index
    %1253 = memref.load %arg15[%c95] : memref<98xf32, #tpu.memory_space<smem>>
    %1254 = vector.extract_strided_slice %1248 {offsets = [1, 0], sizes = [1, 256], strides = [1, 1]} : vector<2x256xf32> to vector<1x256xf32>
    %1255 = vector.broadcast %1253 : f32 to vector<1x256xf32>
    %1256 = arith.mulf %1255, %1254 : vector<1x256xf32>
    %1257 = arith.addf %1252, %1256 : vector<1x256xf32>
    %1258 = arith.addf %1238, %1257 : vector<1x256xf32>
    %c205_i32 = arith.constant 205 : i32
    %1259 = tpu.dynamic_rotate %345 by %c205_i32 dim 1 : vector<2x256xf32>, i32 -> vector<2x256xf32>
    %c208_i32_287 = arith.constant 208 : i32
    %1260 = vector.broadcast %c208_i32_287 : i32 to vector<1x256xi32>
    %1261 = arith.cmpi slt, %0, %1260 : vector<1x256xi32>
    %c13_i32_288 = arith.constant 13 : i32
    %1262 = vector.broadcast %c13_i32_288 : i32 to vector<1x256xi32>
    %1263 = arith.cmpi slt, %1, %1262 : vector<1x256xi32>
    %1264 = arith.andi %1261, %1263 : vector<1x256xi1>
    %cst_289 = arith.constant 0.000000e+00 : f32
    %1265 = vector.shape_cast %1264 : vector<1x256xi1> to vector<1x256xi1>
    %1266 = vector.broadcast %1265 : vector<1x256xi1> to vector<2x256xi1>
    %1267 = vector.broadcast %cst_289 : f32 to vector<2x256xf32>
    %1268 = arith.select %1266, %1259, %1267 : vector<2x256xi1>, vector<2x256xf32>
    %c96 = arith.constant 96 : index
    %1269 = memref.load %arg15[%c96] : memref<98xf32, #tpu.memory_space<smem>>
    %1270 = vector.extract_strided_slice %1268 {offsets = [0, 0], sizes = [1, 256], strides = [1, 1]} : vector<2x256xf32> to vector<1x256xf32>
    %1271 = vector.broadcast %1269 : f32 to vector<1x256xf32>
    %1272 = arith.mulf %1271, %1270 : vector<1x256xf32>
    %c97 = arith.constant 97 : index
    %1273 = memref.load %arg15[%c97] : memref<98xf32, #tpu.memory_space<smem>>
    %1274 = vector.extract_strided_slice %1268 {offsets = [1, 0], sizes = [1, 256], strides = [1, 1]} : vector<2x256xf32> to vector<1x256xf32>
    %1275 = vector.broadcast %1273 : f32 to vector<1x256xf32>
    %1276 = arith.mulf %1275, %1274 : vector<1x256xf32>
    %1277 = arith.addf %1272, %1276 : vector<1x256xf32>
    %1278 = arith.addf %1258, %1277 : vector<1x256xf32>
    %1279 = arith.negf %1278 : vector<1x256xf32>
    %1280 = math.exp %1279 : vector<1x256xf32>
    %cst_290 = arith.constant 1.000000e+00 : f32
    %1281 = vector.broadcast %cst_290 : f32 to vector<1x256xf32>
    %1282 = arith.addf %1281, %1280 : vector<1x256xf32>
    %1283 = arith.divf %1281, %1282 : vector<1x256xf32>
    %1284 = vector.broadcast %1283 : vector<1x256xf32> to vector<8x256xf32>
    %1285 = arith.mulf %35, %1284 : vector<8x256xf32>
    %1286 = arith.addf %12, %1285 : vector<8x256xf32>
    %1287 = arith.addf %1286, %338 : vector<8x256xf32>
    %cst_291 = arith.constant 0.000000e+00 : f32
    %1288 = vector.broadcast %cst_291 : f32 to vector<8x256xf32>
    %1289 = arith.maximumf %1287, %1288 : vector<8x256xf32>
    %c0_292 = arith.constant 0 : index
    %c0_293 = arith.constant 0 : index
    %1290 = vector.load %arg16[%c0_292, %c0_293] : memref<16x8xf32, #tpu.memory_space<vmem>>, vector<16x8xf32>
    %cst_294 = arith.constant dense<0.000000e+00> : vector<16x256xf32>
    %1291 = tpu.matmul %1290, %1289, %cst_294 {dimension_numbers = #tpu.dot_dimension_numbers<[1], [0], [0], [1], [0, 0, 1, 1], [], []>} : vector<16x8xf32>, vector<8x256xf32>, vector<16x256xf32> -> vector<16x256xf32>
    %c0_295 = arith.constant 0 : index
    %c0_296 = arith.constant 0 : index
    %1292 = vector.load %arg17[%c0_295, %c0_296] : memref<16x1xf32, #tpu.memory_space<vmem>>, vector<16x1xf32>
    %1293 = vector.broadcast %1292 : vector<16x1xf32> to vector<16x256xf32>
    %1294 = arith.addf %1291, %1293 : vector<16x256xf32>
    %cst_297 = arith.constant 0.000000e+00 : f32
    %1295 = vector.broadcast %cst_297 : f32 to vector<16x256xf32>
    %1296 = arith.maximumf %1294, %1295 : vector<16x256xf32>
    %c0_298 = arith.constant 0 : index
    %c0_299 = arith.constant 0 : index
    %c0_300 = arith.constant 0 : index
    %1297 = vector.load %arg18[%c0_298, %c0_299, %c0_300] : memref<1x16x256xf32, #tpu.memory_space<vmem>>, vector<1x16x256xf32>
    %1298 = vector.shape_cast %1297 : vector<1x16x256xf32> to vector<16x256xf32>
    %1299 = vector.shape_cast %1296 : vector<16x256xf32> to vector<1x16x256xf32>
    tpu.vector_store %arg18[%c0_298, %c0_299, %c0_300], %1299 {strides = array<i32>} : memref<1x16x256xf32, #tpu.memory_space<vmem>>, vector<1x16x256xf32>,
    return
  }
  func.func @transform_0(%arg0: i32) -> (i32, i32, i32) {
    %c0_i32 = arith.constant 0 : i32
    %c0_i32_0 = arith.constant 0 : i32
    %c0_i32_1 = arith.constant 0 : i32
    return %arg0, %c0_i32, %c0_i32_0 : i32, i32, i32
  }
  func.func @transform_1(%arg0: i32) -> (i32, i32) {
    %c0_i32 = arith.constant 0 : i32
    %c0_i32_0 = arith.constant 0 : i32
    %c0_i32_1 = arith.constant 0 : i32
    return %c0_i32, %c0_i32_0 : i32, i32
  }
  func.func @transform_2(%arg0: i32) -> (i32, i32) {
    %c0_i32 = arith.constant 0 : i32
    %c0_i32_0 = arith.constant 0 : i32
    %c0_i32_1 = arith.constant 0 : i32
    return %c0_i32, %c0_i32_0 : i32, i32
  }
  func.func @transform_3(%arg0: i32) -> (i32, i32) {
    %c0_i32 = arith.constant 0 : i32
    %c0_i32_0 = arith.constant 0 : i32
    %c0_i32_1 = arith.constant 0 : i32
    return %c0_i32, %c0_i32_0 : i32, i32
  }
  func.func @transform_4(%arg0: i32) -> (i32, i32) {
    %c0_i32 = arith.constant 0 : i32
    %c0_i32_0 = arith.constant 0 : i32
    %c0_i32_1 = arith.constant 0 : i32
    return %c0_i32, %c0_i32_0 : i32, i32
  }
  func.func @transform_5(%arg0: i32) -> (i32, i32) {
    %c0_i32 = arith.constant 0 : i32
    %c0_i32_0 = arith.constant 0 : i32
    %c0_i32_1 = arith.constant 0 : i32
    return %c0_i32, %c0_i32_0 : i32, i32
  }
  func.func @transform_6(%arg0: i32) -> (i32, i32) {
    %c0_i32 = arith.constant 0 : i32
    %c0_i32_0 = arith.constant 0 : i32
    %c0_i32_1 = arith.constant 0 : i32
    return %c0_i32, %c0_i32_0 : i32, i32
  }
  func.func @transform_7(%arg0: i32) -> (i32, i32) {
    %c0_i32 = arith.constant 0 : i32
    %c0_i32_0 = arith.constant 0 : i32
    %c0_i32_1 = arith.constant 0 : i32
    return %c0_i32, %c0_i32_0 : i32, i32
  }
  func.func @transform_8(%arg0: i32) -> (i32, i32) {
    %c0_i32 = arith.constant 0 : i32
    %c0_i32_0 = arith.constant 0 : i32
    %c0_i32_1 = arith.constant 0 : i32
    return %c0_i32, %c0_i32_0 : i32, i32
  }
  func.func @transform_9(%arg0: i32) -> (i32, i32) {
    %c0_i32 = arith.constant 0 : i32
    %c0_i32_0 = arith.constant 0 : i32
    %c0_i32_1 = arith.constant 0 : i32
    return %c0_i32, %c0_i32_0 : i32, i32
  }
  func.func @transform_10(%arg0: i32) -> (i32, i32) {
    %c0_i32 = arith.constant 0 : i32
    %c0_i32_0 = arith.constant 0 : i32
    %c0_i32_1 = arith.constant 0 : i32
    return %c0_i32, %c0_i32_0 : i32, i32
  }
  func.func @transform_11(%arg0: i32) -> (i32, i32) {
    %c0_i32 = arith.constant 0 : i32
    %c0_i32_0 = arith.constant 0 : i32
    %c0_i32_1 = arith.constant 0 : i32
    return %c0_i32, %c0_i32_0 : i32, i32
  }
  func.func @transform_12(%arg0: i32) -> (i32, i32) {
    %c0_i32 = arith.constant 0 : i32
    %c0_i32_0 = arith.constant 0 : i32
    %c0_i32_1 = arith.constant 0 : i32
    return %c0_i32, %c0_i32_0 : i32, i32
  }
  func.func @transform_13(%arg0: i32) -> (i32, i32) {
    %c0_i32 = arith.constant 0 : i32
    %c0_i32_0 = arith.constant 0 : i32
    %c0_i32_1 = arith.constant 0 : i32
    return %c0_i32, %c0_i32_0 : i32, i32
  }
  func.func @transform_14(%arg0: i32) -> i32 {
    %c0_i32 = arith.constant 0 : i32
    %c0_i32_0 = arith.constant 0 : i32
    return %c0_i32 : i32
  }
  func.func @transform_15(%arg0: i32) -> (i32, i32) {
    %c0_i32 = arith.constant 0 : i32
    %c0_i32_0 = arith.constant 0 : i32
    %c0_i32_1 = arith.constant 0 : i32
    return %c0_i32, %c0_i32_0 : i32, i32
  }
  func.func @transform_16(%arg0: i32) -> (i32, i32) {
    %c0_i32 = arith.constant 0 : i32
    %c0_i32_0 = arith.constant 0 : i32
    %c0_i32_1 = arith.constant 0 : i32
    return %c0_i32, %c0_i32_0 : i32, i32
  }
  func.func @transform_17(%arg0: i32) -> (i32, i32, i32) {
    %c0_i32 = arith.constant 0 : i32
    %c0_i32_0 = arith.constant 0 : i32
    %c0_i32_1 = arith.constant 0 : i32
    return %arg0, %c0_i32, %c0_i32_0 : i32, i32, i32
  }
}

</mosaic_0001>

<llo_original>
// kernel: _lambda_.1
$region0: #{_lambda_.1}
  #allocation0 [shape = 'u32[]', space=smem, size = 0x4, offset = 0x4, fixed_abs, tag = 'smem constant byte address 0x4 - core index']
  #allocation1 [shape = 'u32[144,128]{1,0:T(1,128)}', space=vmem, size = 0x12000, scoped, tag = 'internal scratch']
  %s0 = inlined_call_operand.vmem [shape: f32[2,1,256], index: 0, kind: input, shape index: {}]
  %s1 = inlined_call_operand.vmem [shape: s32[1,256], index: 1, kind: input, shape index: {}]
  %s2 = inlined_call_operand.vmem [shape: f32[8,1], index: 2, kind: input, shape index: {}]
  %s3 = inlined_call_operand.vmem [shape: f32[8,1], index: 3, kind: input, shape index: {}]
  %s4 = inlined_call_operand.vmem [shape: f32[2,8], index: 4, kind: input, shape index: {}]
  %s5 = inlined_call_operand.vmem [shape: f32[8,2], index: 5, kind: input, shape index: {}]
  %s6 = inlined_call_operand.hbm [shape: f32[8,72], index: 6, kind: input, shape index: {}]
  %s7 = inlined_call_operand.hbm [shape: f32[8,1], index: 7, kind: input, shape index: {}]
  %s8 = inlined_call_operand.hbm [shape: f32[8,72], index: 8, kind: input, shape index: {}]
  %s9 = inlined_call_operand.hbm [shape: f32[8,1], index: 9, kind: input, shape index: {}]
  %s10 = inlined_call_operand.hbm [shape: f32[8,72], index: 10, kind: input, shape index: {}]
  %s11 = inlined_call_operand.hbm [shape: f32[8,1], index: 11, kind: input, shape index: {}]
  %s12 = inlined_call_operand.hbm [shape: f32[8,72], index: 12, kind: input, shape index: {}]
  %s13 = inlined_call_operand.hbm [shape: f32[8,1], index: 13, kind: input, shape index: {}]
  %s14 = inlined_call_operand.vmem [shape: f32[98], index: 14, kind: input, shape index: {}]
  %s15 = inlined_call_operand.vmem [shape: f32[16,8], index: 15, kind: input, shape index: {}]
  %s16 = inlined_call_operand.vmem [shape: f32[16,1], index: 16, kind: input, shape index: {}]
  %s17 = inlined_call_operand.vmem [shape: f32[2,16,256], index: 17, kind: output, shape index: {}]
  %s18 = sld [smem:[#allocation0]]
  $region137: #{_lambda_.1} parent=0
    _
  %s20 = ssub.s32 1, %s18
  %s21 = scalar_select 0, %s20, %s18
  $region1: #{_lambda_.1} parent=0
    #allocation2 [shape = 'u8[4096]{0}', space=vmem, size = 0x1000, scoped, tag = 'input window, operand 6, single buffered']
    #allocation3 [shape = 's32[2]{0}', space=sflag, size = 0x8, scoped, tag = 'scoped memory for _lambda_.1']
    #allocation4 [shape = 's32[2]{0}', space=sflag, size = 0x8, scoped, tag = 'scoped memory for _lambda_.1']
    #allocation5 [shape = 'u8[4096]{0}', space=vmem, size = 0x1000, scoped, tag = 'input window, operand 7, single buffered']
    #allocation6 [shape = 's32[1]{0}', space=sflag, size = 0x4, scoped, tag = 'scoped memory for _lambda_.1']
    #allocation7 [shape = 'u8[4096]{0}', space=vmem, size = 0x1000, scoped, tag = 'input window, operand 8, single buffered']
    #allocation8 [shape = 'u8[4096]{0}', space=vmem, size = 0x1000, scoped, tag = 'input window, operand 9, single buffered']
    #allocation9 [shape = 's32[1]{0}', space=sflag, size = 0x4, scoped, tag = 'scoped memory for _lambda_.1']
    #allocation10 [shape = 'u8[4096]{0}', space=vmem, size = 0x1000, scoped, tag = 'input window, operand 10, single buffered']
    #allocation11 [shape = 'u8[4096]{0}', space=vmem, size = 0x1000, scoped, tag = 'input window, operand 11, single buffered']
    #allocation12 [shape = 's32[1]{0}', space=sflag, size = 0x4, scoped, tag = 'scoped memory for _lambda_.1']
    #allocation13 [shape = 'u8[4096]{0}', space=vmem, size = 0x1000, scoped, tag = 'input window, operand 12, single buffered']
    #allocation14 [shape = 'u8[4096]{0}', space=vmem, size = 0x1000, scoped, tag = 'input window, operand 13, single buffered']
    #allocation15 [shape = 's32[1]{0}', space=sflag, size = 0x4, scoped, tag = 'scoped memory for _lambda_.1']
    #allocation16 [shape = 'u8[512]{0}', space=smem, size = 0x200, scoped, tag = 'input window, operand 14, single buffered']
    %22 = vsyncpa [#allocation3], 0
    %23 = vsyncpa [#allocation6], 0
    %24 = vsyncpa [#allocation9], 0
    %25 = vsyncpa [#allocation12], 0
    %26 = vsyncpa [#allocation15], 0
    %27 = vsyncpa [#allocation4], 0
    loop: start=0, step=1, limit=4
    $region2: #{_lambda_.1} parent=1 // loop_pre_header
      _
    $region3: #{_lambda_.1} parent=1 // loop_header
      %s29 = sphi 0, %s33
      %p30 = scmp.ge.s32.totalorder %s29, 4
      %s39 = sphi 0, %s41
      %s42 = sphi 0, %s39
      %s43 = sphi 0, %s42
      %s59 = sphi 0, %s43
      %s63 = sphi 0, %s63
      %s65 = sphi 0, %s63
      %s66 = sphi 0, %s65
      %s80 = sphi 0, %s66
      %s84 = sphi 0, %s84
      %s86 = sphi 0, %s84
      %s87 = sphi 0, %s86
      %s101 = sphi 0, %s87
      %s105 = sphi 0, %s105
      %s107 = sphi 0, %s105
      %s108 = sphi 0, %s107
      %s122 = sphi 0, %s108
      %s126 = sphi 0, %s126
      %s128 = sphi 0, %s126
      %s129 = sphi 0, %s128
      %s143 = sphi 0, %s129
      %s147 = sphi 0, %s147
      %s149 = sphi 0, %s147
      %s150 = sphi 0, %s149
      %s164 = sphi 0, %s150
      %s168 = sphi 0, %s168
      %s170 = sphi 0, %s168
      %s171 = sphi 0, %s170
      %s185 = sphi 0, %s171
      %s189 = sphi 0, %s189
      %s191 = sphi 0, %s189
      %s192 = sphi 0, %s191
      %s206 = sphi 0, %s192
      %s210 = sphi 0, %s210
      %s212 = sphi 0, %s210
      %s213 = sphi 0, %s212
      %s227 = sphi 0, %s213
      %s231 = sphi 0, %s231
      %s233 = sphi 0, %s231
      %s234 = sphi 0, %s233
      %s248 = sphi 0, %s234
      %s252 = sphi 0, %s252
      %s254 = sphi 0, %s252
      %s255 = sphi 0, %s254
      %s269 = sphi 0, %s255
      %s273 = sphi 0, %s273
      %s275 = sphi 0, %s273
      %s276 = sphi 0, %s275
      %s290 = sphi 0, %s276
      %s294 = sphi 0, %s294
      %s296 = sphi 0, %s294
      %s297 = sphi 0, %s296
      %s311 = sphi 0, %s297
      %s315 = sphi 0, %s315
      %s317 = sphi 0, %s315
      %s318 = sphi 0, %s317
      %s332 = sphi 0, %s318
      %s336 = sphi 0, %s336
      %s338 = sphi 0, %s336
      %s339 = sphi 0, %s338
      %s353 = sphi 0, %s339
      %s357 = sphi 0, %s357
      %s359 = sphi 0, %s357
      %s360 = sphi 0, %s359
      %s374 = sphi 0, %s360
      %s378 = sphi 0, %s378
      %s380 = sphi 0, %s378
      %s381 = sphi 0, %s380
      %s395 = sphi 0, %s381
      %s401 = sphi 0, %s403
      %s404 = sphi 0, %s401
      %s405 = sphi 0, %s404
      %s421 = sphi 0, %s405
    $region4: #{_lambda_.1} parent=1 // loop_header_branch
      %32 = sbr.rel (%p30) target = $region8
    $region5: #{_lambda_.1} parent=1 // loop_body
      %s34 = ssub.s32 %s29, 1
      %s35 = ssub.s32 %s29, 2
      %s36 = sadd.s32 %s29, 1
      %s37 = ssub.s32 %s29, %s36
      %p38 = scmp.eq.s32.totalorder %s37, 0
      %s40 = sadd.s32 %s39, 1
      %s41 = scalar_select %p38, %s39, %s40
      %p44 = pneg %p38
      %p45 = scmp.eq.s32.totalorder %s29, 1
      %p46 = por %p44, %p45
      %p47 = scmp.ne.s32.totalorder %s39, %s42
      %p48 = scmp.eq.s32.totalorder %s29, 0
      %p49 = por %p47, %p48
      %p50 = scmp.ne.s32.totalorder %s39, %s42
      %p51 = scmp.eq.s32.totalorder %s34, 1
      %p52 = por %p50, %p51
      %p53 = scmp.ne.s32.totalorder %s42, %s43
      %p54 = scmp.eq.s32.totalorder %s34, 0
      %p55 = por %p53, %p54
      %p56 = scmp.ne.s32.totalorder %s42, %s43
      %p57 = scmp.eq.s32.totalorder %s35, 1
      %p58 = por %p56, %p57
      %p60 = scmp.ne.s32.totalorder %s43, %s59
      %p61 = scmp.eq.s32.totalorder %s35, 0
      %p62 = por %p60, %p61
      %s64 = sadd.s32 %s63, 1
      %p67 = scmp.eq.s32.totalorder %s29, 1
      %p68 = scmp.ne.s32.totalorder %s63, %s65
      %p69 = scmp.eq.s32.totalorder %s29, 0
      %p70 = por %p68, %p69
      %p71 = scmp.ne.s32.totalorder %s63, %s65
      %p72 = scmp.eq.s32.totalorder %s34, 1
      %p73 = por %p71, %p72
      %p74 = scmp.ne.s32.totalorder %s65, %s66
      %p75 = scmp.eq.s32.totalorder %s34, 0
      %p76 = por %p74, %p75
      %p77 = scmp.ne.s32.totalorder %s65, %s66
      %p78 = scmp.eq.s32.totalorder %s35, 1
      %p79 = por %p77, %p78
      %p81 = scmp.ne.s32.totalorder %s66, %s80
      %p82 = scmp.eq.s32.totalorder %s35, 0
      %p83 = por %p81, %p82
      %s85 = sadd.s32 %s84, 1
      %p88 = scmp.eq.s32.totalorder %s29, 1
      %p89 = scmp.ne.s32.totalorder %s84, %s86
      %p90 = scmp.eq.s32.totalorder %s29, 0
      %p91 = por %p89, %p90
      %p92 = scmp.ne.s32.totalorder %s84, %s86
      %p93 = scmp.eq.s32.totalorder %s34, 1
      %p94 = por %p92, %p93
      %p95 = scmp.ne.s32.totalorder %s86, %s87
      %p96 = scmp.eq.s32.totalorder %s34, 0
      %p97 = por %p95, %p96
      %p98 = scmp.ne.s32.totalorder %s86, %s87
      %p99 = scmp.eq.s32.totalorder %s35, 1
      %p100 = por %p98, %p99
      %p102 = scmp.ne.s32.totalorder %s87, %s101
      %p103 = scmp.eq.s32.totalorder %s35, 0
      %p104 = por %p102, %p103
      %s106 = sadd.s32 %s105, 1
      %p109 = scmp.eq.s32.totalorder %s29, 1
      %p110 = scmp.ne.s32.totalorder %s105, %s107
      %p111 = scmp.eq.s32.totalorder %s29, 0
      %p112 = por %p110, %p111
      %p113 = scmp.ne.s32.totalorder %s105, %s107
      %p114 = scmp.eq.s32.totalorder %s34, 1
      %p115 = por %p113, %p114
      %p116 = scmp.ne.s32.totalorder %s107, %s108
      %p117 = scmp.eq.s32.totalorder %s34, 0
      %p118 = por %p116, %p117
      %p119 = scmp.ne.s32.totalorder %s107, %s108
      %p120 = scmp.eq.s32.totalorder %s35, 1
      %p121 = por %p119, %p120
      %p123 = scmp.ne.s32.totalorder %s108, %s122
      %p124 = scmp.eq.s32.totalorder %s35, 0
      %p125 = por %p123, %p124
      %s127 = sadd.s32 %s126, 1
      %p130 = scmp.eq.s32.totalorder %s29, 1
      %p131 = scmp.ne.s32.totalorder %s126, %s128
      %p132 = scmp.eq.s32.totalorder %s29, 0
      %p133 = por %p131, %p132
      %p134 = scmp.ne.s32.totalorder %s126, %s128
      %p135 = scmp.eq.s32.totalorder %s34, 1
      %p136 = por %p134, %p135
      %p137 = scmp.ne.s32.totalorder %s128, %s129
      %p138 = scmp.eq.s32.totalorder %s34, 0
      %p139 = por %p137, %p138
      %p140 = scmp.ne.s32.totalorder %s128, %s129
      %p141 = scmp.eq.s32.totalorder %s35, 1
      %p142 = por %p140, %p141
      %p144 = scmp.ne.s32.totalorder %s129, %s143
      %p145 = scmp.eq.s32.totalorder %s35, 0
      %p146 = por %p144, %p145
      %s148 = sadd.s32 %s147, 1
      %p151 = scmp.eq.s32.totalorder %s29, 1
      %p152 = scmp.ne.s32.totalorder %s147, %s149
      %p153 = scmp.eq.s32.totalorder %s29, 0
      %p154 = por %p152, %p153
      %p155 = scmp.ne.s32.totalorder %s147, %s149
      %p156 = scmp.eq.s32.totalorder %s34, 1
      %p157 = por %p155, %p156
      %p158 = scmp.ne.s32.totalorder %s149, %s150
      %p159 = scmp.eq.s32.totalorder %s34, 0
      %p160 = por %p158, %p159
      %p161 = scmp.ne.s32.totalorder %s149, %s150
      %p162 = scmp.eq.s32.totalorder %s35, 1
      %p163 = por %p161, %p162
      %p165 = scmp.ne.s32.totalorder %s150, %s164
      %p166 = scmp.eq.s32.totalorder %s35, 0
      %p167 = por %p165, %p166
      %s169 = sadd.s32 %s168, 1
      %p172 = scmp.eq.s32.totalorder %s29, 1
      %p173 = scmp.ne.s32.totalorder %s168, %s170
      %p174 = scmp.eq.s32.totalorder %s29, 0
      %p175 = por %p173, %p174
      %p176 = scmp.ne.s32.totalorder %s168, %s170
      %p177 = scmp.eq.s32.totalorder %s34, 1
      %p178 = por %p176, %p177
      %p179 = scmp.ne.s32.totalorder %s170, %s171
      %p180 = scmp.eq.s32.totalorder %s34, 0
      %p181 = por %p179, %p180
      %p182 = scmp.ne.s32.totalorder %s170, %s171
      %p183 = scmp.eq.s32.totalorder %s35, 1
      %p184 = por %p182, %p183
      %p186 = scmp.ne.s32.totalorder %s171, %s185
      %p187 = scmp.eq.s32.totalorder %s35, 0
      %p188 = por %p186, %p187
      %s190 = sadd.s32 %s189, 1
      %p193 = scmp.eq.s32.totalorder %s29, 1
      %p194 = scmp.ne.s32.totalorder %s189, %s191
      %p195 = scmp.eq.s32.totalorder %s29, 0
      %p196 = por %p194, %p195
      %p197 = scmp.ne.s32.totalorder %s189, %s191
      %p198 = scmp.eq.s32.totalorder %s34, 1
      %p199 = por %p197, %p198
      %p200 = scmp.ne.s32.totalorder %s191, %s192
      %p201 = scmp.eq.s32.totalorder %s34, 0
      %p202 = por %p200, %p201
      %p203 = scmp.ne.s32.totalorder %s191, %s192
      %p204 = scmp.eq.s32.totalorder %s35, 1
      %p205 = por %p203, %p204
      %p207 = scmp.ne.s32.totalorder %s192, %s206
      %p208 = scmp.eq.s32.totalorder %s35, 0
      %p209 = por %p207, %p208
      %s211 = sadd.s32 %s210, 1
      %p214 = scmp.eq.s32.totalorder %s29, 1
      %p215 = scmp.ne.s32.totalorder %s210, %s212
      %p216 = scmp.eq.s32.totalorder %s29, 0
      %p217 = por %p215, %p216
      %p218 = scmp.ne.s32.totalorder %s210, %s212
      %p219 = scmp.eq.s32.totalorder %s34, 1
      %p220 = por %p218, %p219
      %p221 = scmp.ne.s32.totalorder %s212, %s213
      %p222 = scmp.eq.s32.totalorder %s34, 0
      %p223 = por %p221, %p222
      %p224 = scmp.ne.s32.totalorder %s212, %s213
      %p225 = scmp.eq.s32.totalorder %s35, 1
      %p226 = por %p224, %p225
      %p228 = scmp.ne.s32.totalorder %s213, %s227
      %p229 = scmp.eq.s32.totalorder %s35, 0
      %p230 = por %p228, %p229
      %s232 = sadd.s32 %s231, 1
      %p235 = scmp.eq.s32.totalorder %s29, 1
      %p236 = scmp.ne.s32.totalorder %s231, %s233
      %p237 = scmp.eq.s32.totalorder %s29, 0
      %p238 = por %p236, %p237
      %p239 = scmp.ne.s32.totalorder %s231, %s233
      %p240 = scmp.eq.s32.totalorder %s34, 1
      %p241 = por %p239, %p240
      %p242 = scmp.ne.s32.totalorder %s233, %s234
      %p243 = scmp.eq.s32.totalorder %s34, 0
      %p244 = por %p242, %p243
      %p245 = scmp.ne.s32.totalorder %s233, %s234
      %p246 = scmp.eq.s32.totalorder %s35, 1
      %p247 = por %p245, %p246
      %p249 = scmp.ne.s32.totalorder %s234, %s248
      %p250 = scmp.eq.s32.totalorder %s35, 0
      %p251 = por %p249, %p250
      %s253 = sadd.s32 %s252, 1
      %p256 = scmp.eq.s32.totalorder %s29, 1
      %p257 = scmp.ne.s32.totalorder %s252, %s254
      %p258 = scmp.eq.s32.totalorder %s29, 0
      %p259 = por %p257, %p258
      %p260 = scmp.ne.s32.totalorder %s252, %s254
      %p261 = scmp.eq.s32.totalorder %s34, 1
      %p262 = por %p260, %p261
      %p263 = scmp.ne.s32.totalorder %s254, %s255
      %p264 = scmp.eq.s32.totalorder %s34, 0
      %p265 = por %p263, %p264
      %p266 = scmp.ne.s32.totalorder %s254, %s255
      %p267 = scmp.eq.s32.totalorder %s35, 1
      %p268 = por %p266, %p267
      %p270 = scmp.ne.s32.totalorder %s255, %s269
      %p271 = scmp.eq.s32.totalorder %s35, 0
      %p272 = por %p270, %p271
      %s274 = sadd.s32 %s273, 1
      %p277 = scmp.eq.s32.totalorder %s29, 1
      %p278 = scmp.ne.s32.totalorder %s273, %s275
      %p279 = scmp.eq.s32.totalorder %s29, 0
      %p280 = por %p278, %p279
      %p281 = scmp.ne.s32.totalorder %s273, %s275
      %p282 = scmp.eq.s32.totalorder %s34, 1
      %p283 = por %p281, %p282
      %p284 = scmp.ne.s32.totalorder %s275, %s276
      %p285 = scmp.eq.s32.totalorder %s34, 0
      %p286 = por %p284, %p285
      %p287 = scmp.ne.s32.totalorder %s275, %s276
      %p288 = scmp.eq.s32.totalorder %s35, 1
      %p289 = por %p287, %p288
      %p291 = scmp.ne.s32.totalorder %s276, %s290
      %p292 = scmp.eq.s32.totalorder %s35, 0
      %p293 = por %p291, %p292
      %s295 = sadd.s32 %s294, 1
      %p298 = scmp.eq.s32.totalorder %s29, 1
      %p299 = scmp.ne.s32.totalorder %s294, %s296
      %p300 = scmp.eq.s32.totalorder %s29, 0
      %p301 = por %p299, %p300
      %p302 = scmp.ne.s32.totalorder %s294, %s296
      %p303 = scmp.eq.s32.totalorder %s34, 1
      %p304 = por %p302, %p303
      %p305 = scmp.ne.s32.totalorder %s296, %s297
      %p306 = scmp.eq.s32.totalorder %s34, 0
      %p307 = por %p305, %p306
      %p308 = scmp.ne.s32.totalorder %s296, %s297
      %p309 = scmp.eq.s32.totalorder %s35, 1
      %p310 = por %p308, %p309
      %p312 = scmp.ne.s32.totalorder %s297, %s311
      %p313 = scmp.eq.s32.totalorder %s35, 0
      %p314 = por %p312, %p313
      %s316 = sadd.s32 %s315, 1
      %p319 = scmp.eq.s32.totalorder %s29, 1
      %p320 = scmp.ne.s32.totalorder %s315, %s317
      %p321 = scmp.eq.s32.totalorder %s29, 0
      %p322 = por %p320, %p321
      %p323 = scmp.ne.s32.totalorder %s315, %s317
      %p324 = scmp.eq.s32.totalorder %s34, 1
      %p325 = por %p323, %p324
      %p326 = scmp.ne.s32.totalorder %s317, %s318
      %p327 = scmp.eq.s32.totalorder %s34, 0
      %p328 = por %p326, %p327
      %p329 = scmp.ne.s32.totalorder %s317, %s318
      %p330 = scmp.eq.s32.totalorder %s35, 1
      %p331 = por %p329, %p330
      %p333 = scmp.ne.s32.totalorder %s318, %s332
      %p334 = scmp.eq.s32.totalorder %s35, 0
      %p335 = por %p333, %p334
      %s337 = sadd.s32 %s336, 1
      %p340 = scmp.eq.s32.totalorder %s29, 1
      %p341 = scmp.ne.s32.totalorder %s336, %s338
      %p342 = scmp.eq.s32.totalorder %s29, 0
      %p343 = por %p341, %p342
      %p344 = scmp.ne.s32.totalorder %s336, %s338
      %p345 = scmp.eq.s32.totalorder %s34, 1
      %p346 = por %p344, %p345
      %p347 = scmp.ne.s32.totalorder %s338, %s339
      %p348 = scmp.eq.s32.totalorder %s34, 0
      %p349 = por %p347, %p348
      %p350 = scmp.ne.s32.totalorder %s338, %s339
      %p351 = scmp.eq.s32.totalorder %s35, 1
      %p352 = por %p350, %p351
      %p354 = scmp.ne.s32.totalorder %s339, %s353
      %p355 = scmp.eq.s32.totalorder %s35, 0
      %p356 = por %p354, %p355
      %s358 = sadd.s32 %s357, 1
      %p361 = scmp.eq.s32.totalorder %s29, 1
      %p362 = scmp.ne.s32.totalorder %s357, %s359
      %p363 = scmp.eq.s32.totalorder %s29, 0
      %p364 = por %p362, %p363
      %p365 = scmp.ne.s32.totalorder %s357, %s359
      %p366 = scmp.eq.s32.totalorder %s34, 1
      %p367 = por %p365, %p366
      %p368 = scmp.ne.s32.totalorder %s359, %s360
      %p369 = scmp.eq.s32.totalorder %s34, 0
      %p370 = por %p368, %p369
      %p371 = scmp.ne.s32.totalorder %s359, %s360
      %p372 = scmp.eq.s32.totalorder %s35, 1
      %p373 = por %p371, %p372
      %p375 = scmp.ne.s32.totalorder %s360, %s374
      %p376 = scmp.eq.s32.totalorder %s35, 0
      %p377 = por %p375, %p376
      %s379 = sadd.s32 %s378, 1
      %p382 = scmp.eq.s32.totalorder %s29, 1
      %p383 = scmp.ne.s32.totalorder %s378, %s380
      %p384 = scmp.eq.s32.totalorder %s29, 0
      %p385 = por %p383, %p384
      %p386 = scmp.ne.s32.totalorder %s378, %s380
      %p387 = scmp.eq.s32.totalorder %s34, 1
      %p388 = por %p386, %p387
      %p389 = scmp.ne.s32.totalorder %s380, %s381
      %p390 = scmp.eq.s32.totalorder %s34, 0
      %p391 = por %p389, %p390
      %p392 = scmp.ne.s32.totalorder %s380, %s381
      %p393 = scmp.eq.s32.totalorder %s35, 1
      %p394 = por %p392, %p393
      %p396 = scmp.ne.s32.totalorder %s381, %s395
      %p397 = scmp.eq.s32.totalorder %s35, 0
      %p398 = por %p396, %p397
      %s399 = ssub.s32 %s29, %s36
      %p400 = scmp.eq.s32.totalorder %s399, 0
      %s402 = sadd.s32 %s401, 1
      %s403 = scalar_select %p400, %s401, %s402
      %p406 = pneg %p400
      %p407 = scmp.eq.s32.totalorder %s29, 1
      %p408 = por %p406, %p407
      %p409 = scmp.ne.s32.totalorder %s401, %s404
      %p410 = scmp.eq.s32.totalorder %s29, 0
      %p411 = por %p409, %p410
      %p412 = scmp.ne.s32.totalorder %s401, %s404
      %p413 = scmp.eq.s32.totalorder %s34, 1
      %p414 = por %p412, %p413
      %p415 = scmp.ne.s32.totalorder %s404, %s405
      %p416 = scmp.eq.s32.totalorder %s34, 0
      %p417 = por %p415, %p416
      %p418 = scmp.ne.s32.totalorder %s404, %s405
      %p419 = scmp.eq.s32.totalorder %s35, 1
      %p420 = por %p418, %p419
      %p422 = scmp.ne.s32.totalorder %s405, %s421
      %p423 = scmp.eq.s32.totalorder %s35, 0
      %p424 = por %p422, %p423
      %p425 = scmp.le.s32.totalorder 1, %s29
      %p426 = scmp.lt.s32.totalorder %s29, 3
      %p427 = pnand %p425, %p426
      %p428 = pneg %p427
      // Predicated region
      $region9: #{_lambda_.1} parent=5 // pred_check
        _
      $region10: #{_lambda_.1} parent=5 // pred_check_branch
        %430 = sbr.rel (%p427) target = $region12
      $region11: #{_lambda_.1} parent=5 // pred_region
        %s431 = ssub.s32 %s29, 1
        // Predicated region
        $region13: #{_lambda_.1} parent=11 // pred_check
          %p432 = pneg %p76
        $region14: #{_lambda_.1} parent=11 // pred_check_branch
          %434 = sbr.rel (%p432) target = $region16
        $region15: #{_lambda_.1} parent=11 // pred_region
          _
        $region16: #{_lambda_.1} parent=11 // pred_fallthru
          _
        // Predicated region
        $region17: #{_lambda_.1} parent=11 // pred_check
          %p435 = pneg %p97
        $region18: #{_lambda_.1} parent=11 // pred_check_branch
          %437 = sbr.rel (%p435) target = $region20
        $region19: #{_lambda_.1} parent=11 // pred_region
          _
        $region20: #{_lambda_.1} parent=11 // pred_fallthru
          _
        // Predicated region
        $region21: #{_lambda_.1} parent=11 // pred_check
          %p438 = pneg %p118
        $region22: #{_lambda_.1} parent=11 // pred_check_branch
          %440 = sbr.rel (%p438) target = $region24
        $region23: #{_lambda_.1} parent=11 // pred_region
          _
        $region24: #{_lambda_.1} parent=11 // pred_fallthru
          _
        // Predicated region
        $region25: #{_lambda_.1} parent=11 // pred_check
          %p441 = pneg %p139
        $region26: #{_lambda_.1} parent=11 // pred_check_branch
          %443 = sbr.rel (%p441) target = $region28
        $region27: #{_lambda_.1} parent=11 // pred_region
          _
        $region28: #{_lambda_.1} parent=11 // pred_fallthru
          _
        // Predicated region
        $region29: #{_lambda_.1} parent=11 // pred_check
          %p444 = pneg %p160
        $region30: #{_lambda_.1} parent=11 // pred_check_branch
          %446 = sbr.rel (%p444) target = $region32
        $region31: #{_lambda_.1} parent=11 // pred_region
          _
        $region32: #{_lambda_.1} parent=11 // pred_fallthru
          _
        // Predicated region
        $region33: #{_lambda_.1} parent=11 // pred_check
          %p447 = pneg %p181
        $region34: #{_lambda_.1} parent=11 // pred_check_branch
          %449 = sbr.rel (%p447) target = $region36
        $region35: #{_lambda_.1} parent=11 // pred_region
          %s451 = ssub.s32 128, 128
          %452 = vsyncadd [#allocation3], %s451
          %s454 = sshll.u32 [#allocation2], 4
          %s455 = int_to_ptr.vmem [resolvable:$true] %s454
          %457 = dma.hbm_to_vmem [thread:$0]  %s6, 128, %s455, [#allocation3]
        $region36: #{_lambda_.1} parent=11 // pred_fallthru
          _
        // Predicated region
        $region37: #{_lambda_.1} parent=11 // pred_check
          %p458 = pneg %p202
        $region38: #{_lambda_.1} parent=11 // pred_check_branch
          %460 = sbr.rel (%p458) target = $region40
        $region39: #{_lambda_.1} parent=11 // pred_region
          %s462 = ssub.s32 128, 128
          %463 = vsyncadd [#allocation6], %s462
          %s465 = sshll.u32 [#allocation5], 4
          %s466 = int_to_ptr.vmem [resolvable:$true] %s465
          %468 = dma.hbm_to_vmem [thread:$0]  %s7, 128, %s466, [#allocation6]
        $region40: #{_lambda_.1} parent=11 // pred_fallthru
          _
        // Predicated region
        $region41: #{_lambda_.1} parent=11 // pred_check
          %p469 = pneg %p223
        $region42: #{_lambda_.1} parent=11 // pred_check_branch
          %471 = sbr.rel (%p469) target = $region44
        $region43: #{_lambda_.1} parent=11 // pred_region
          %s473 = ssub.s32 128, 128
          %474 = vsyncadd [#allocation6], %s473
          %s476 = sshll.u32 [#allocation7], 4
          %s477 = int_to_ptr.vmem [resolvable:$true] %s476
          %479 = dma.hbm_to_vmem [thread:$0]  %s8, 128, %s477, [#allocation6]
        $region44: #{_lambda_.1} parent=11 // pred_fallthru
          _
        // Predicated region
        $region45: #{_lambda_.1} parent=11 // pred_check
          %p480 = pneg %p244
        $region46: #{_lambda_.1} parent=11 // pred_check_branch
          %482 = sbr.rel (%p480) target = $region48
        $region47: #{_lambda_.1} parent=11 // pred_region
          %s484 = ssub.s32 128, 128
          %485 = vsyncadd [#allocation9], %s484
          %s487 = sshll.u32 [#allocation8], 4
          %s488 = int_to_ptr.vmem [resolvable:$true] %s487
          %490 = dma.hbm_to_vmem [thread:$0]  %s9, 128, %s488, [#allocation9]
        $region48: #{_lambda_.1} parent=11 // pred_fallthru
          _
        // Predicated region
        $region49: #{_lambda_.1} parent=11 // pred_check
          %p491 = pneg %p265
        $region50: #{_lambda_.1} parent=11 // pred_check_branch
          %493 = sbr.rel (%p491) target = $region52
        $region51: #{_lambda_.1} parent=11 // pred_region
          %s495 = ssub.s32 128, 128
          %496 = vsyncadd [#allocation9], %s495
          %s498 = sshll.u32 [#allocation10], 4
          %s499 = int_to_ptr.vmem [resolvable:$true] %s498
          %501 = dma.hbm_to_vmem [thread:$0]  %s10, 128, %s499, [#allocation9]
        $region52: #{_lambda_.1} parent=11 // pred_fallthru
          _
        // Predicated region
        $region53: #{_lambda_.1} parent=11 // pred_check
          %p502 = pneg %p286
        $region54: #{_lambda_.1} parent=11 // pred_check_branch
          %504 = sbr.rel (%p502) target = $region56
        $region55: #{_lambda_.1} parent=11 // pred_region
          %s506 = ssub.s32 128, 128
          %507 = vsyncadd [#allocation12], %s506
          %s509 = sshll.u32 [#allocation11], 4
          %s510 = int_to_ptr.vmem [resolvable:$true] %s509
          %512 = dma.hbm_to_vmem [thread:$0]  %s11, 128, %s510, [#allocation12]
        $region56: #{_lambda_.1} parent=11 // pred_fallthru
          _
        // Predicated region
        $region57: #{_lambda_.1} parent=11 // pred_check
          %p513 = pneg %p307
        $region58: #{_lambda_.1} parent=11 // pred_check_branch
          %515 = sbr.rel (%p513) target = $region60
        $region59: #{_lambda_.1} parent=11 // pred_region
          %s517 = ssub.s32 128, 128
          %518 = vsyncadd [#allocation12], %s517
          %s520 = sshll.u32 [#allocation13], 4
          %s521 = int_to_ptr.vmem [resolvable:$true] %s520
          %523 = dma.hbm_to_vmem [thread:$0]  %s12, 128, %s521, [#allocation12]
        $region60: #{_lambda_.1} parent=11 // pred_fallthru
          _
        // Predicated region
        $region61: #{_lambda_.1} parent=11 // pred_check
          %p524 = pneg %p328
        $region62: #{_lambda_.1} parent=11 // pred_check_branch
          %526 = sbr.rel (%p524) target = $region64
        $region63: #{_lambda_.1} parent=11 // pred_region
          %s528 = ssub.s32 128, 128
          %529 = vsyncadd [#allocation15], %s528
          %s531 = sshll.u32 [#allocation14], 4
          %s532 = int_to_ptr.vmem [resolvable:$true] %s531
          %534 = dma.hbm_to_vmem [thread:$0]  %s13, 128, %s532, [#allocation15]
        $region64: #{_lambda_.1} parent=11 // pred_fallthru
          _
        // Predicated region
        $region65: #{_lambda_.1} parent=11 // pred_check
          %p535 = pneg %p349
        $region66: #{_lambda_.1} parent=11 // pred_check_branch
          %537 = sbr.rel (%p535) target = $region68
        $region67: #{_lambda_.1} parent=11 // pred_region
          %s539 = ssub.s32 16, 16
          %540 = vsyncadd [#allocation4], %s539
          %s542 = sshll.u32 %s14, 4
          %s543 = int_to_ptr.vmem [resolvable:$true] %s542
          %545 = dma.vmem_to_smem %s543, 16, [#allocation16], [#allocation4]
        $region68: #{_lambda_.1} parent=11 // pred_fallthru
          _
        // Predicated region
        $region69: #{_lambda_.1} parent=11 // pred_check
          %p546 = pneg %p370
        $region70: #{_lambda_.1} parent=11 // pred_check_branch
          %548 = sbr.rel (%p546) target = $region72
        $region71: #{_lambda_.1} parent=11 // pred_region
          _
        $region72: #{_lambda_.1} parent=11 // pred_fallthru
          _
        // Predicated region
        $region73: #{_lambda_.1} parent=11 // pred_check
          %p549 = pneg %p391
        $region74: #{_lambda_.1} parent=11 // pred_check_branch
          %551 = sbr.rel (%p549) target = $region76
        $region75: #{_lambda_.1} parent=11 // pred_region
          _
        $region76: #{_lambda_.1} parent=11 // pred_fallthru
          _
      $region12: #{_lambda_.1} parent=5 // pred_fallthru
        _
      %p552 = scmp.lt.s32.totalorder %s29, 2
      // Predicated region
      $region77: #{_lambda_.1} parent=5 // pred_check
        %p553 = pneg %p552
      $region78: #{_lambda_.1} parent=5 // pred_check_branch
        %555 = sbr.rel (%p553) target = $region80
      $region79: #{_lambda_.1} parent=5 // pred_region
        // Predicated region
        $region81: #{_lambda_.1} parent=79 // pred_check
          %p556 = pneg %p49
        $region82: #{_lambda_.1} parent=79 // pred_check_branch
          %558 = sbr.rel (%p556) target = $region84
        $region83: #{_lambda_.1} parent=79 // pred_region
          %p559 = scmp.lt.s32.totalorder %s29, 1
          %s560 = scalar_select %p559, %s29, 1
          %s561 = smul.addr %s560, 2
          %s562 = scalar_lea.vmem %s0, %s561
        $region84: #{_lambda_.1} parent=79 // pred_fallthru
          _
      $region80: #{_lambda_.1} parent=5 // pred_fallthru
        _
      %p563 = scmp.le.s32.totalorder 1, %s29
      %p564 = scmp.lt.s32.totalorder %s29, 3
      %p565 = pnand %p563, %p564
      %p566 = pneg %p565
      // Predicated region
      $region85: #{_lambda_.1} parent=5 // pred_check
        _
      $region86: #{_lambda_.1} parent=5 // pred_check_branch
        %568 = sbr.rel (%p565) target = $region88
      $region87: #{_lambda_.1} parent=5 // pred_region
        %s569 = ssub.s32 %s29, 1
        // Predicated region
        $region89: #{_lambda_.1} parent=87 // pred_check
          %p570 = pneg %p181
        $region90: #{_lambda_.1} parent=87 // pred_check_branch
          %572 = sbr.rel (%p570) target = $region92
        $region91: #{_lambda_.1} parent=87 // pred_region
          %573 = dma.done [#allocation3], 128
        $region92: #{_lambda_.1} parent=87 // pred_fallthru
          _
        // Predicated region
        $region93: #{_lambda_.1} parent=87 // pred_check
          %p574 = pneg %p202
        $region94: #{_lambda_.1} parent=87 // pred_check_branch
          %576 = sbr.rel (%p574) target = $region96
        $region95: #{_lambda_.1} parent=87 // pred_region
          %577 = dma.done [#allocation6], 128
        $region96: #{_lambda_.1} parent=87 // pred_fallthru
          _
        // Predicated region
        $region97: #{_lambda_.1} parent=87 // pred_check
          %p578 = pneg %p223
        $region98: #{_lambda_.1} parent=87 // pred_check_branch
          %580 = sbr.rel (%p578) target = $region100
        $region99: #{_lambda_.1} parent=87 // pred_region
          %581 = dma.done [#allocation6], 128
        $region100: #{_lambda_.1} parent=87 // pred_fallthru
          _
        // Predicated region
        $region101: #{_lambda_.1} parent=87 // pred_check
          %p582 = pneg %p244
        $region102: #{_lambda_.1} parent=87 // pred_check_branch
          %584 = sbr.rel (%p582) target = $region104
        $region103: #{_lambda_.1} parent=87 // pred_region
          %585 = dma.done [#allocation9], 128
        $region104: #{_lambda_.1} parent=87 // pred_fallthru
          _
        // Predicated region
        $region105: #{_lambda_.1} parent=87 // pred_check
          %p586 = pneg %p265
        $region106: #{_lambda_.1} parent=87 // pred_check_branch
          %588 = sbr.rel (%p586) target = $region108
        $region107: #{_lambda_.1} parent=87 // pred_region
          %589 = dma.done [#allocation9], 128
        $region108: #{_lambda_.1} parent=87 // pred_fallthru
          _
        // Predicated region
        $region109: #{_lambda_.1} parent=87 // pred_check
          %p590 = pneg %p286
        $region110: #{_lambda_.1} parent=87 // pred_check_branch
          %592 = sbr.rel (%p590) target = $region112
        $region111: #{_lambda_.1} parent=87 // pred_region
          %593 = dma.done [#allocation12], 128
        $region112: #{_lambda_.1} parent=87 // pred_fallthru
          _
        // Predicated region
        $region113: #{_lambda_.1} parent=87 // pred_check
          %p594 = pneg %p307
        $region114: #{_lambda_.1} parent=87 // pred_check_branch
          %596 = sbr.rel (%p594) target = $region116
        $region115: #{_lambda_.1} parent=87 // pred_region
          %597 = dma.done [#allocation12], 128
        $region116: #{_lambda_.1} parent=87 // pred_fallthru
          _
        // Predicated region
        $region117: #{_lambda_.1} parent=87 // pred_check
          %p598 = pneg %p328
        $region118: #{_lambda_.1} parent=87 // pred_check_branch
          %600 = sbr.rel (%p598) target = $region120
        $region119: #{_lambda_.1} parent=87 // pred_region
          %601 = dma.done [#allocation15], 128
        $region120: #{_lambda_.1} parent=87 // pred_fallthru
          _
        // Predicated region
        $region121: #{_lambda_.1} parent=87 // pred_check
          %p602 = pneg %p349
        $region122: #{_lambda_.1} parent=87 // pred_check_branch
          %604 = sbr.rel (%p602) target = $region124
        $region123: #{_lambda_.1} parent=87 // pred_region
          %605 = dma.done [#allocation4], 16
        $region124: #{_lambda_.1} parent=87 // pred_fallthru
          _
        %606 = sfence
        %p607 = scmp.lt.s32.totalorder %s34, 1
        %s608 = scalar_select %p607, %s34, 1
        %s609 = smul.addr %s608, 2
        %s610 = scalar_lea.vmem %s0, %s609
        %p611 = pneg %p55
        %p612 = pneg %p52
        %p613 = pneg %p76
        %p614 = pneg %p73
        %p615 = pneg %p97
        %p616 = pneg %p94
        %p617 = pneg %p118
        %p618 = pneg %p115
        %p619 = pneg %p139
        %p620 = pneg %p136
        %p621 = pneg %p160
        %p622 = pneg %p157
        %p623 = pneg %p181
        %p624 = pneg %p178
        %p625 = pneg %p202
        %p626 = pneg %p199
        %p627 = pneg %p223
        %p628 = pneg %p220
        %p629 = pneg %p244
        %p630 = pneg %p241
        %p631 = pneg %p265
        %p632 = pneg %p262
        %p633 = pneg %p286
        %p634 = pneg %p283
        %p635 = pneg %p307
        %p636 = pneg %p304
        %p637 = pneg %p328
        %p638 = pneg %p325
        %p639 = pneg %p349
        %p640 = pneg %p346
        %p641 = pneg %p370
        %p642 = pneg %p367
        %p643 = pneg %p391
        %p644 = pneg %p388
        %p645 = pneg %p417
        %p646 = pneg %p414
        %p647 = scmp.lt.s32.totalorder %s34, 1
        %s648 = scalar_select %p647, %s34, 1
        %s649 = smul.addr %s648, 4
        %s650 = smul.addr %s649, 8
        %s651 = scalar_lea.vmem %s17, %s650
        %p652 = scmp.lt.s32.totalorder %s34, 1
        %s653 = scalar_select %p652, %s34, 1
        %s654 = smul.addr %s653, 2
        %s655 = scalar_lea.vmem %s0, %s654
        %p656 = scmp.lt.s32.totalorder %s34, 1
        %s657 = scalar_select %p656, %s34, 1
        %s658 = smul.addr %s657, 4
        %s659 = smul.addr %s658, 8
        %s660 = scalar_lea.vmem %s17, %s659
        %v661 = vlaneseq
        %v662 = vand.u32 %v661, 127
        %v663 = vadd.s32 %v662, 128
        %v664 = vld [vmem:[%s1] sm:$0x3]
        %v665 = vld [vmem:[%s655] sm:$0x3]
        %v666 = vld [vmem:[%s2] sm:$0xff]
        %668 = vset.pattern.permute.xlu0 0
        %669 = vperm.xlu0 %668, %v666
        %v670 = vpop.permute.xlu0 %669
        %v673 = vlaneseq
        %v674 = vshrl.u32 %v673, 7
        %v675 = vsub.s32 0, %v674
        %v676 = vrot.slane %v665, %v675
        %v677 = vlaneseq
        %v678 = vshrl.u32 %v677, 7
        %v679 = vsub.s32 1, %v678
        %v680 = vrot.slane %v665, %v679
        %v683 = vmul.f32 %v670, %v676
        %v684 = vmul.f32 %v670, %v680
        %v685 = vld [vmem:[%s3] sm:$0xff]
        %687 = vset.pattern.permute.xlu0 0
        %688 = vperm.xlu0 %687, %v685
        %v689 = vpop.permute.xlu0 %688
        %v691 = vadd.f32 %v683, %v689
        %v692 = vadd.f32 %v684, %v689
        %v693 = vmax.f32 %v691, 0.0
        %v694 = vmax.f32 %v692, 0.0
        %v695 = vadd.f32 %v693, %v694
        %696 = vadd.xlane.f32.xlu0 %v695
        %v697 = vpop.xlane.xlu0 %696
        %v698 = vrcp.pop 256.0
        %v699 = vmul.f32 %v697, %v698
        %v700 = vmax.f32 %v693, %v694
        %701 = vmax.xlane.f32.xlu0 %v700
        %v702 = vpop.xlane.xlu0 %701
        %vm703 = vcmask 7168
        %v704 = vsel %vm703, %v699, %v702
        %v705 = vld [vmem:[%s4] sm:$0x3]
        %vm706 = vcmask 64512
        %v708 = vsel %vm706, %v705, 0
        %710 = vmatprep.subr.mxu0 0.0
        %711 = vmatpush1.msra.mxu0 0.0
        %712 = vmatprep.subr.mxu0 0.0
        %713 = vmatpush1.msra.mxu0 0.0
        %714 = vmatprep.subr.mxu0 0.0
        %715 = vmatpush1.msra.mxu0 0.0
        %716 = vmatprep.subr.mxu0 0.0
        %717 = vmatpush1.msra.mxu0 0.0
        %718 = vmatprep.subr.mxu0 0.0
        %719 = vmatpush1.msra.mxu0 0.0
        %720 = vmatprep.subr.mxu0 0.0
        %721 = vmatpush1.msra.mxu0 0.0
        %722 = vmatprep.subr.mxu0 0.0
        %723 = vmatpush1.msra.mxu0 0.0
        %724 = vmatprep.subr.mxu0 0.0
        %725 = vmatpush1.msra.mxu0 0.0
        %726 = vmatprep.subr.mxu0 0.0
        %727 = vmatpush1.msra.mxu0 0.0
        %728 = vmatprep.subr.mxu0 0.0
        %729 = vmatpush1.msra.mxu0 0.0
        %730 = vmatprep.subr.mxu0 0.0
        %731 = vmatpush1.msra.mxu0 0.0
        %732 = vmatprep.subr.mxu0 0.0
        %733 = vmatpush1.msra.mxu0 0.0
        %734 = vmatprep.subr.mxu0 0.0
        %735 = vmatpush1.msra.mxu0 0.0
        %736 = vmatprep.subr.mxu0 0.0
        %737 = vmatpush1.msra.mxu0 0.0
        %738 = vmatprep.subr.mxu0 0.0
        %739 = vmatpush1.msra.mxu0 0.0
        %740 = vmatprep.subr.mxu0 0.0
        %741 = vmatpush1.msra.mxu0 %v704
        %742 = vmatprep.subr.mxu0 0.0
        %743 = vmatpush2.msra.mxu0 0.0
        %744 = vmatprep.subr.mxu0 0.0
        %745 = vmatpush2.msra.mxu0 0.0
        %746 = vmatprep.subr.mxu0 0.0
        %747 = vmatpush2.msra.mxu0 0.0
        %748 = vmatprep.subr.mxu0 0.0
        %749 = vmatpush2.msra.mxu0 0.0
        %750 = vmatprep.subr.mxu0 0.0
        %751 = vmatpush2.msra.mxu0 0.0
        %752 = vmatprep.subr.mxu0 0.0
        %753 = vmatpush2.msra.mxu0 0.0
        %754 = vmatprep.subr.mxu0 0.0
        %755 = vmatpush2.msra.mxu0 0.0
        %756 = vmatprep.subr.mxu0 0.0
        %757 = vmatpush2.msra.mxu0 0.0
        %758 = vmatprep.subr.mxu0 0.0
        %759 = vmatpush2.msra.mxu0 0.0
        %760 = vmatprep.subr.mxu0 0.0
        %761 = vmatpush2.msra.mxu0 0.0
        %762 = vmatprep.subr.mxu0 0.0
        %763 = vmatpush2.msra.mxu0 0.0
        %764 = vmatprep.subr.mxu0 0.0
        %765 = vmatpush2.msra.mxu0 0.0
        %766 = vmatprep.subr.mxu0 0.0
        %767 = vmatpush2.msra.mxu0 0.0
        %768 = vmatprep.subr.mxu0 0.0
        %769 = vmatpush2.msra.mxu0 0.0
        %770 = vmatprep.subr.mxu0 0.0
        %771 = vmatpush2.msra.mxu0 0.0
        %772 = vmatprep.subr.mxu0 0.0
        %773 = vmatpush2.msra.mxu0 0.0
        %774 = vmatprep.mubr.f32.mxu0 0.0
        %775 = vmatmul.mubr.f32.gmra.mxu0 %v708
        %v776 = vpop.f32.mrf.mxu0
        %v777 = vadd.f32 0.0, %v776
        %v778 = vpop.f32.mrf.mxu0
        %779 = vdwg.mxu0
        %v780 = vmax.f32 %v777, 0.0
        %v781 = vld [vmem:[%s5] sm:$0xff]
        %vm782 = vcmask 15360
        %v784 = vsel %vm782, %v781, 0
        %vm786 = vcmask 1041408
        %v788 = vsel %vm786, %v780, 0
        %790 = vmatprep.subr.mxu0 0.0
        %791 = vmatpush1.msra.mxu0 0.0
        %792 = vmatprep.subr.mxu0 0.0
        %793 = vmatpush1.msra.mxu0 0.0
        %794 = vmatprep.subr.mxu0 0.0
        %795 = vmatpush1.msra.mxu0 0.0
        %796 = vmatprep.subr.mxu0 0.0
        %797 = vmatpush1.msra.mxu0 0.0
        %798 = vmatprep.subr.mxu0 0.0
        %799 = vmatpush1.msra.mxu0 0.0
        %800 = vmatprep.subr.mxu0 0.0
        %801 = vmatpush1.msra.mxu0 0.0
        %802 = vmatprep.subr.mxu0 0.0
        %803 = vmatpush1.msra.mxu0 0.0
        %804 = vmatprep.subr.mxu0 0.0
        %805 = vmatpush1.msra.mxu0 0.0
        %806 = vmatprep.subr.mxu0 0.0
        %807 = vmatpush1.msra.mxu0 0.0
        %808 = vmatprep.subr.mxu0 0.0
        %809 = vmatpush1.msra.mxu0 0.0
        %810 = vmatprep.subr.mxu0 0.0
        %811 = vmatpush1.msra.mxu0 0.0
        %812 = vmatprep.subr.mxu0 0.0
        %813 = vmatpush1.msra.mxu0 0.0
        %814 = vmatprep.subr.mxu0 0.0
        %815 = vmatpush1.msra.mxu0 0.0
        %816 = vmatprep.subr.mxu0 0.0
        %817 = vmatpush1.msra.mxu0 0.0
        %818 = vmatprep.subr.mxu0 0.0
        %819 = vmatpush1.msra.mxu0 0.0
        %820 = vmatprep.subr.mxu0 0.0
        %821 = vmatpush1.msra.mxu0 %v788
        %822 = vmatprep.subr.mxu0 0.0
        %823 = vmatpush2.msra.mxu0 0.0
        %824 = vmatprep.subr.mxu0 0.0
        %825 = vmatpush2.msra.mxu0 0.0
        %826 = vmatprep.subr.mxu0 0.0
        %827 = vmatpush2.msra.mxu0 0.0
        %828 = vmatprep.subr.mxu0 0.0
        %829 = vmatpush2.msra.mxu0 0.0
        %830 = vmatprep.subr.mxu0 0.0
        %831 = vmatpush2.msra.mxu0 0.0
        %832 = vmatprep.subr.mxu0 0.0
        %833 = vmatpush2.msra.mxu0 0.0
        %834 = vmatprep.subr.mxu0 0.0
        %835 = vmatpush2.msra.mxu0 0.0
        %836 = vmatprep.subr.mxu0 0.0
        %837 = vmatpush2.msra.mxu0 0.0
        %838 = vmatprep.subr.mxu0 0.0
        %839 = vmatpush2.msra.mxu0 0.0
        %840 = vmatprep.subr.mxu0 0.0
        %841 = vmatpush2.msra.mxu0 0.0
        %842 = vmatprep.subr.mxu0 0.0
        %843 = vmatpush2.msra.mxu0 0.0
        %844 = vmatprep.subr.mxu0 0.0
        %845 = vmatpush2.msra.mxu0 0.0
        %846 = vmatprep.subr.mxu0 0.0
        %847 = vmatpush2.msra.mxu0 0.0
        %848 = vmatprep.subr.mxu0 0.0
        %849 = vmatpush2.msra.mxu0 0.0
        %850 = vmatprep.subr.mxu0 0.0
        %851 = vmatpush2.msra.mxu0 0.0
        %852 = vmatprep.subr.mxu0 0.0
        %853 = vmatpush2.msra.mxu0 0.0
        %854 = vmatprep.mubr.f32.mxu0 0.0
        %855 = vmatmul.mubr.f32.gmra.mxu0 %v784
        %v856 = vpop.f32.mrf.mxu0
        %v857 = vadd.f32 0.0, %v856
        %v858 = vpop.f32.mrf.mxu0
        %859 = vdwg.mxu0
        %861 = vrot.lane.b32.xlu0 %v857, 127
        %v862 = vpop.permute.xlu0 %861
        %v864 = vadd.f32 %v857, %v862
        %v865 = vxor.u32 %v864, 2147483648
        %v866 = vmul.f32 %v865, 1.442695
        %v867 = vpow.pop %v866
        %v868 = vadd.f32 %v867, 1.0
        %v869 = vrcp.pop %v868
        %v870 = vmul.f32 1.0, %v869
        %872 = vset.pattern.permute.xlu0 0
        %873 = vperm.xlu0 %872, %v870
        %v874 = vpop.permute.xlu0 %873
        %v876 = vmul.f32 %v693, %v874
        %v877 = vmul.f32 %v694, %v874
        %878 = vrot.lane.b32.xlu0 %v693, 17
        %v879 = vpop.permute.xlu0 %878
        %880 = vrot.lane.b32.xlu0 %v694, 17
        %v881 = vpop.permute.xlu0 %880
        %vm882 = vcmp.lt.s32.totalorder %v662, 17
        %v883 = vsel %vm882, %v879, %v881
        %v884 = vsel %vm882, %v881, %v879
        %vm885 = vcmp.ge.s32.totalorder %v662, 16
        %vm886 = vcmp.ge.s32.totalorder %v663, 16
        %vm887 = vcmp.ge.s32.totalorder %v664, 1
        %v888 = vsel %vm887, 1, 0
        %v889 = vlaneseq
        %v890 = vshrl.u32 %v889, 7
        %v891 = vsub.s32 0, %v890
        %v892 = vrot.slane %v888, %v891
        %v893 = vlaneseq
        %v894 = vshrl.u32 %v893, 7
        %v895 = vsub.s32 1, %v894
        %v896 = vrot.slane %v888, %v895
        %vm897 = vcmp.ne.s32.totalorder %v892, 0
        %vm898 = vcmp.ne.s32.totalorder %v896, 0
        %vm899 = vmand %vm885, %vm897
        %vm900 = vmand %vm886, %vm898
        %v901 = vsel %vm899, 1, 0
        %v902 = vsel %vm900, 1, 0
        %v903 = vlaneseq
        %v904 = vshrl.u32 %v903, 7
        %v905 = vsub.s32 0, %v904
        %v906 = vrot.slane %v901, %v905
        %v907 = vlaneseq
        %v908 = vshrl.u32 %v907, 7
        %v909 = vsub.s32 0, %v908
        %v910 = vrot.slane %v902, %v909
        %vm911 = vcmp.eq.s32.totalorder %v906, 1
        %vm912 = vcmp.eq.s32.totalorder %v910, 1
        %v913 = vsel %vm911, %v884, 0.0
        %v914 = vsel %vm912, %v883, 0.0
        %915 = vrot.lane.b32.xlu0 %v693, 16
        %v916 = vpop.permute.xlu0 %915
        %917 = vrot.lane.b32.xlu0 %v694, 16
        %v918 = vpop.permute.xlu0 %917
        %vm919 = vcmp.lt.s32.totalorder %v662, 16
        %v920 = vsel %vm919, %v916, %v918
        %v921 = vsel %vm919, %v918, %v916
        %v922 = vsel %vm885, 1, 0
        %v923 = vsel %vm886, 1, 0
        %vm924 = vcmp.eq.s32.totalorder %v922, 1
        %vm925 = vcmp.eq.s32.totalorder %v923, 1
        %v926 = vsel %vm924, %v921, 0.0
        %v927 = vsel %vm925, %v920, 0.0
        %928 = vrot.lane.b32.xlu0 %v693, 15
        %v929 = vpop.permute.xlu0 %928
        %930 = vrot.lane.b32.xlu0 %v694, 15
        %v931 = vpop.permute.xlu0 %930
        %vm932 = vcmp.lt.s32.totalorder %v662, 15
        %v933 = vsel %vm932, %v929, %v931
        %v934 = vsel %vm932, %v931, %v929
        %vm935 = vcmp.lt.s32.totalorder %v664, 15
        %v936 = vsel %vm935, 1, 0
        %v937 = vlaneseq
        %v938 = vshrl.u32 %v937, 7
        %v939 = vsub.s32 0, %v938
        %v940 = vrot.slane %v936, %v939
        %v941 = vlaneseq
        %v942 = vshrl.u32 %v941, 7
        %v943 = vsub.s32 1, %v942
        %v944 = vrot.slane %v936, %v943
        %vm945 = vcmp.ne.s32.totalorder %v940, 0
        %vm946 = vcmp.ne.s32.totalorder %v944, 0
        %vm947 = vmand %vm885, %vm945
        %vm948 = vmand %vm886, %vm946
        %v949 = vsel %vm947, 1, 0
        %v950 = vsel %vm948, 1, 0
        %v951 = vlaneseq
        %v952 = vshrl.u32 %v951, 7
        %v953 = vsub.s32 0, %v952
        %v954 = vrot.slane %v949, %v953
        %v955 = vlaneseq
        %v956 = vshrl.u32 %v955, 7
        %v957 = vsub.s32 0, %v956
        %v958 = vrot.slane %v950, %v957
        %vm959 = vcmp.eq.s32.totalorder %v954, 1
        %vm960 = vcmp.eq.s32.totalorder %v958, 1
        %v961 = vsel %vm959, %v934, 0.0
        %v962 = vsel %vm960, %v933, 0.0
        %963 = vrot.lane.b32.xlu0 %v693, 1
        %v964 = vpop.permute.xlu0 %963
        %965 = vrot.lane.b32.xlu0 %v694, 1
        %v966 = vpop.permute.xlu0 %965
        %vm967 = vcmp.lt.s32.totalorder %v662, 1
        %v968 = vsel %vm967, %v964, %v966
        %v969 = vsel %vm967, %v966, %v964
        %vm970 = vcmp.eq.s32.totalorder %v892, 1
        %vm971 = vcmp.eq.s32.totalorder %v896, 1
        %v972 = vsel %vm970, %v969, 0.0
        %v973 = vsel %vm971, %v968, 0.0
        %974 = vrot.lane.b32.xlu0 %v693, 127
        %v975 = vpop.permute.xlu0 %974
        %976 = vrot.lane.b32.xlu0 %v694, 127
        %v977 = vpop.permute.xlu0 %976
        %vm978 = vcmp.lt.s32.totalorder %v662, 127
        %v979 = vsel %vm978, %v975, %v977
        %v980 = vsel %vm978, %v977, %v975
        %vm981 = vcmp.eq.s32.totalorder %v940, 1
        %vm982 = vcmp.eq.s32.totalorder %v944, 1
        %v983 = vsel %vm981, %v979, 0.0
        %v984 = vsel %vm982, %v980, 0.0
        %985 = vrot.lane.b32.xlu0 %v693, 113
        %v986 = vpop.permute.xlu0 %985
        %987 = vrot.lane.b32.xlu0 %v694, 113
        %v988 = vpop.permute.xlu0 %987
        %vm989 = vcmp.lt.s32.totalorder %v662, 113
        %v990 = vsel %vm989, %v986, %v988
        %v991 = vsel %vm989, %v988, %v986
        %vm992 = vcmp.lt.s32.totalorder %v662, 240
        %vm993 = vcmp.lt.s32.totalorder %v663, 240
        %vm994 = vmand %vm992, %vm897
        %vm995 = vmand %vm993, %vm898
        %v996 = vsel %vm994, 1, 0
        %v997 = vsel %vm995, 1, 0
        %v998 = vlaneseq
        %v999 = vshrl.u32 %v998, 7
        %v1000 = vsub.s32 0, %v999
        %v1001 = vrot.slane %v996, %v1000
        %v1002 = vlaneseq
        %v1003 = vshrl.u32 %v1002, 7
        %v1004 = vsub.s32 0, %v1003
        %v1005 = vrot.slane %v997, %v1004
        %vm1006 = vcmp.eq.s32.totalorder %v1001, 1
        %vm1007 = vcmp.eq.s32.totalorder %v1005, 1
        %v1008 = vsel %vm1006, %v990, 0.0
        %v1009 = vsel %vm1007, %v991, 0.0
        %1010 = vrot.lane.b32.xlu0 %v693, 112
        %v1011 = vpop.permute.xlu0 %1010
        %1012 = vrot.lane.b32.xlu0 %v694, 112
        %v1013 = vpop.permute.xlu0 %1012
        %vm1014 = vcmp.lt.s32.totalorder %v662, 112
        %v1015 = vsel %vm1014, %v1011, %v1013
        %v1016 = vsel %vm1014, %v1013, %v1011
        %v1017 = vsel %vm992, 1, 0
        %v1018 = vsel %vm993, 1, 0
        %vm1019 = vcmp.eq.s32.totalorder %v1017, 1
        %vm1020 = vcmp.eq.s32.totalorder %v1018, 1
        %v1021 = vsel %vm1019, %v1015, 0.0
        %v1022 = vsel %vm1020, %v1016, 0.0
        %1023 = vrot.lane.b32.xlu0 %v693, 111
        %v1024 = vpop.permute.xlu0 %1023
        %1025 = vrot.lane.b32.xlu0 %v694, 111
        %v1026 = vpop.permute.xlu0 %1025
        %vm1027 = vcmp.lt.s32.totalorder %v662, 111
        %v1028 = vsel %vm1027, %v1024, %v1026
        %v1029 = vsel %vm1027, %v1026, %v1024
        %vm1030 = vmand %vm992, %vm945
        %vm1031 = vmand %vm993, %vm946
        %v1032 = vsel %vm1030, 1, 0
        %v1033 = vsel %vm1031, 1, 0
        %v1034 = vlaneseq
        %v1035 = vshrl.u32 %v1034, 7
        %v1036 = vsub.s32 0, %v1035
        %v1037 = vrot.slane %v1032, %v1036
        %v1038 = vlaneseq
        %v1039 = vshrl.u32 %v1038, 7
        %v1040 = vsub.s32 0, %v1039
        %v1041 = vrot.slane %v1033, %v1040
        %vm1042 = vcmp.eq.s32.totalorder %v1037, 1
        %vm1043 = vcmp.eq.s32.totalorder %v1041, 1
        %v1044 = vsel %vm1042, %v1028, 0.0
        %v1045 = vsel %vm1043, %v1029, 0.0
        %v1046 = vld [vmem:[#allocation2] sm:$0xff]
        %v1047 = vld [vmem:[#allocation5] sm:$0xff]
        %1049 = vset.pattern.permute.xlu0 0
        %1050 = vperm.xlu0 %1049, %v1047
        %v1051 = vpop.permute.xlu0 %1050
        %vm1053 = vcmask 588800
        %v1055 = vsel %vm1053, %v1046, 0
        %1057 = vmatprep.subr.mxu0 0.0
        %1058 = vmatpush1.msra.mxu0 0.0
        %1059 = vmatprep.subr.mxu0 0.0
        %1060 = vmatpush1.msra.mxu0 0.0
        %1061 = vmatprep.subr.mxu0 0.0
        %1062 = vmatpush1.msra.mxu0 0.0
        %1063 = vmatprep.subr.mxu0 0.0
        %1064 = vmatpush1.msra.mxu0 0.0
        %1065 = vmatprep.subr.mxu0 0.0
        %1066 = vmatpush1.msra.mxu0 0.0
        %1067 = vmatprep.subr.mxu0 0.0
        %1068 = vmatpush1.msra.mxu0 0.0
        %1069 = vmatprep.subr.mxu0 0.0
        %1070 = vmatpush1.msra.mxu0 0.0
        %1071 = vmatprep.subr.mxu0 %v1045
        %1072 = vmatpush1.msra.mxu0 %v1044
        %1073 = vmatprep.subr.mxu0 %v1022
        %1074 = vmatpush1.msra.mxu0 %v1021
        %1075 = vmatprep.subr.mxu0 %v1009
        %1076 = vmatpush1.msra.mxu0 %v1008
        %1077 = vmatprep.subr.mxu0 %v984
        %1078 = vmatpush1.msra.mxu0 %v983
        %1079 = vmatprep.subr.mxu0 %v694
        %1080 = vmatpush1.msra.mxu0 %v693
        %1081 = vmatprep.subr.mxu0 %v973
        %1082 = vmatpush1.msra.mxu0 %v972
        %1083 = vmatprep.subr.mxu0 %v962
        %1084 = vmatpush1.msra.mxu0 %v961
        %1085 = vmatprep.subr.mxu0 %v927
        %1086 = vmatpush1.msra.mxu0 %v926
        %1087 = vmatprep.subr.mxu0 %v914
        %1088 = vmatpush1.msra.mxu0 %v913
        %1089 = vmatprep.subr.mxu0 0.0
        %1090 = vmatpush2.msra.mxu0 0.0
        %1091 = vmatprep.subr.mxu0 0.0
        %1092 = vmatpush2.msra.mxu0 0.0
        %1093 = vmatprep.subr.mxu0 0.0
        %1094 = vmatpush2.msra.mxu0 0.0
        %1095 = vmatprep.subr.mxu0 0.0
        %1096 = vmatpush2.msra.mxu0 0.0
        %1097 = vmatprep.subr.mxu0 0.0
        %1098 = vmatpush2.msra.mxu0 0.0
        %1099 = vmatprep.subr.mxu0 0.0
        %1100 = vmatpush2.msra.mxu0 0.0
        %1101 = vmatprep.subr.mxu0 0.0
        %1102 = vmatpush2.msra.mxu0 0.0
        %1103 = vmatprep.subr.mxu0 0.0
        %1104 = vmatpush2.msra.mxu0 0.0
        %1105 = vmatprep.subr.mxu0 0.0
        %1106 = vmatpush2.msra.mxu0 0.0
        %1107 = vmatprep.subr.mxu0 0.0
        %1108 = vmatpush2.msra.mxu0 0.0
        %1109 = vmatprep.subr.mxu0 0.0
        %1110 = vmatpush2.msra.mxu0 0.0
        %1111 = vmatprep.subr.mxu0 0.0
        %1112 = vmatpush2.msra.mxu0 0.0
        %1113 = vmatprep.subr.mxu0 0.0
        %1114 = vmatpush2.msra.mxu0 0.0
        %1115 = vmatprep.subr.mxu0 0.0
        %1116 = vmatpush2.msra.mxu0 0.0
        %1117 = vmatprep.subr.mxu0 0.0
        %1118 = vmatpush2.msra.mxu0 0.0
        %1119 = vmatprep.subr.mxu0 0.0
        %1120 = vmatpush2.msra.mxu0 0.0
        %1121 = vmatprep.mubr.f32.mxu0 0.0
        %1122 = vmatmul.mubr.f32.gmra.mxu0 %v1055
        %v1123 = vpop.f32.mrf.mxu0
        %v1124 = vadd.f32 %v1051, %v1123
        %v1125 = vpop.f32.mrf.mxu0
        %v1126 = vadd.f32 %v1051, %v1125
        %1127 = vdwg.mxu0
        %v1128 = vmax.f32 %v1124, 0.0
        %v1129 = vmax.f32 %v1126, 0.0
        %1130 = vrot.lane.b32.xlu0 %v693, 34
        %v1131 = vpop.permute.xlu0 %1130
        %1132 = vrot.lane.b32.xlu0 %v694, 34
        %v1133 = vpop.permute.xlu0 %1132
        %vm1134 = vcmp.lt.s32.totalorder %v662, 34
        %v1135 = vsel %vm1134, %v1131, %v1133
        %v1136 = vsel %vm1134, %v1133, %v1131
        %vm1137 = vcmp.ge.s32.totalorder %v662, 32
        %vm1138 = vcmp.ge.s32.totalorder %v663, 32
        %vm1139 = vcmp.ge.s32.totalorder %v664, 2
        %v1140 = vsel %vm1139, 1, 0
        %v1141 = vlaneseq
        %v1142 = vshrl.u32 %v1141, 7
        %v1143 = vsub.s32 0, %v1142
        %v1144 = vrot.slane %v1140, %v1143
        %v1145 = vlaneseq
        %v1146 = vshrl.u32 %v1145, 7
        %v1147 = vsub.s32 1, %v1146
        %v1148 = vrot.slane %v1140, %v1147
        %vm1149 = vcmp.ne.s32.totalorder %v1144, 0
        %vm1150 = vcmp.ne.s32.totalorder %v1148, 0
        %vm1151 = vmand %vm1137, %vm1149
        %vm1152 = vmand %vm1138, %vm1150
        %v1153 = vsel %vm1151, 1, 0
        %v1154 = vsel %vm1152, 1, 0
        %v1155 = vlaneseq
        %v1156 = vshrl.u32 %v1155, 7
        %v1157 = vsub.s32 0, %v1156
        %v1158 = vrot.slane %v1153, %v1157
        %v1159 = vlaneseq
        %v1160 = vshrl.u32 %v1159, 7
        %v1161 = vsub.s32 0, %v1160
        %v1162 = vrot.slane %v1154, %v1161
        %vm1163 = vcmp.eq.s32.totalorder %v1158, 1
        %vm1164 = vcmp.eq.s32.totalorder %v1162, 1
        %v1165 = vsel %vm1163, %v1136, 0.0
        %v1166 = vsel %vm1164, %v1135, 0.0
        %1167 = vrot.lane.b32.xlu0 %v693, 32
        %v1168 = vpop.permute.xlu0 %1167
        %1169 = vrot.lane.b32.xlu0 %v694, 32
        %v1170 = vpop.permute.xlu0 %1169
        %vm1171 = vcmp.lt.s32.totalorder %v662, 32
        %v1172 = vsel %vm1171, %v1168, %v1170
        %v1173 = vsel %vm1171, %v1170, %v1168
        %v1174 = vsel %vm1137, 1, 0
        %v1175 = vsel %vm1138, 1, 0
        %vm1176 = vcmp.eq.s32.totalorder %v1174, 1
        %vm1177 = vcmp.eq.s32.totalorder %v1175, 1
        %v1178 = vsel %vm1176, %v1173, 0.0
        %v1179 = vsel %vm1177, %v1172, 0.0
        %1180 = vrot.lane.b32.xlu0 %v693, 30
        %v1181 = vpop.permute.xlu0 %1180
        %1182 = vrot.lane.b32.xlu0 %v694, 30
        %v1183 = vpop.permute.xlu0 %1182
        %vm1184 = vcmp.lt.s32.totalorder %v662, 30
        %v1185 = vsel %vm1184, %v1181, %v1183
        %v1186 = vsel %vm1184, %v1183, %v1181
        %vm1187 = vcmp.lt.s32.totalorder %v664, 14
        %v1188 = vsel %vm1187, 1, 0
        %v1189 = vlaneseq
        %v1190 = vshrl.u32 %v1189, 7
        %v1191 = vsub.s32 0, %v1190
        %v1192 = vrot.slane %v1188, %v1191
        %v1193 = vlaneseq
        %v1194 = vshrl.u32 %v1193, 7
        %v1195 = vsub.s32 1, %v1194
        %v1196 = vrot.slane %v1188, %v1195
        %vm1197 = vcmp.ne.s32.totalorder %v1192, 0
        %vm1198 = vcmp.ne.s32.totalorder %v1196, 0
        %vm1199 = vmand %vm1137, %vm1197
        %vm1200 = vmand %vm1138, %vm1198
        %v1201 = vsel %vm1199, 1, 0
        %v1202 = vsel %vm1200, 1, 0
        %v1203 = vlaneseq
        %v1204 = vshrl.u32 %v1203, 7
        %v1205 = vsub.s32 0, %v1204
        %v1206 = vrot.slane %v1201, %v1205
        %v1207 = vlaneseq
        %v1208 = vshrl.u32 %v1207, 7
        %v1209 = vsub.s32 0, %v1208
        %v1210 = vrot.slane %v1202, %v1209
        %vm1211 = vcmp.eq.s32.totalorder %v1206, 1
        %vm1212 = vcmp.eq.s32.totalorder %v1210, 1
        %v1213 = vsel %vm1211, %v1186, 0.0
        %v1214 = vsel %vm1212, %v1185, 0.0
        %1215 = vrot.lane.b32.xlu0 %v693, 2
        %v1216 = vpop.permute.xlu0 %1215
        %1217 = vrot.lane.b32.xlu0 %v694, 2
        %v1218 = vpop.permute.xlu0 %1217
        %vm1219 = vcmp.lt.s32.totalorder %v662, 2
        %v1220 = vsel %vm1219, %v1216, %v1218
        %v1221 = vsel %vm1219, %v1218, %v1216
        %vm1222 = vcmp.eq.s32.totalorder %v1144, 1
        %vm1223 = vcmp.eq.s32.totalorder %v1148, 1
        %v1224 = vsel %vm1222, %v1221, 0.0
        %v1225 = vsel %vm1223, %v1220, 0.0
        %1226 = vrot.lane.b32.xlu0 %v693, 126
        %v1227 = vpop.permute.xlu0 %1226
        %1228 = vrot.lane.b32.xlu0 %v694, 126
        %v1229 = vpop.permute.xlu0 %1228
        %vm1230 = vcmp.lt.s32.totalorder %v662, 126
        %v1231 = vsel %vm1230, %v1227, %v1229
        %v1232 = vsel %vm1230, %v1229, %v1227
        %vm1233 = vcmp.eq.s32.totalorder %v1192, 1
        %vm1234 = vcmp.eq.s32.totalorder %v1196, 1
        %v1235 = vsel %vm1233, %v1231, 0.0
        %v1236 = vsel %vm1234, %v1232, 0.0
        %1237 = vrot.lane.b32.xlu0 %v693, 98
        %v1238 = vpop.permute.xlu0 %1237
        %1239 = vrot.lane.b32.xlu0 %v694, 98
        %v1240 = vpop.permute.xlu0 %1239
        %vm1241 = vcmp.lt.s32.totalorder %v662, 98
        %v1242 = vsel %vm1241, %v1238, %v1240
        %v1243 = vsel %vm1241, %v1240, %v1238
        %vm1244 = vcmp.lt.s32.totalorder %v662, 224
        %vm1245 = vcmp.lt.s32.totalorder %v663, 224
        %vm1246 = vmand %vm1244, %vm1149
        %vm1247 = vmand %vm1245, %vm1150
        %v1248 = vsel %vm1246, 1, 0
        %v1249 = vsel %vm1247, 1, 0
        %v1250 = vlaneseq
        %v1251 = vshrl.u32 %v1250, 7
        %v1252 = vsub.s32 0, %v1251
        %v1253 = vrot.slane %v1248, %v1252
        %v1254 = vlaneseq
        %v1255 = vshrl.u32 %v1254, 7
        %v1256 = vsub.s32 0, %v1255
        %v1257 = vrot.slane %v1249, %v1256
        %vm1258 = vcmp.eq.s32.totalorder %v1253, 1
        %vm1259 = vcmp.eq.s32.totalorder %v1257, 1
        %v1260 = vsel %vm1258, %v1242, 0.0
        %v1261 = vsel %vm1259, %v1243, 0.0
        %1262 = vrot.lane.b32.xlu0 %v693, 96
        %v1263 = vpop.permute.xlu0 %1262
        %1264 = vrot.lane.b32.xlu0 %v694, 96
        %v1265 = vpop.permute.xlu0 %1264
        %vm1266 = vcmp.lt.s32.totalorder %v662, 96
        %v1267 = vsel %vm1266, %v1263, %v1265
        %v1268 = vsel %vm1266, %v1265, %v1263
        %v1269 = vsel %vm1244, 1, 0
        %v1270 = vsel %vm1245, 1, 0
        %vm1271 = vcmp.eq.s32.totalorder %v1269, 1
        %vm1272 = vcmp.eq.s32.totalorder %v1270, 1
        %v1273 = vsel %vm1271, %v1267, 0.0
        %v1274 = vsel %vm1272, %v1268, 0.0
        %1275 = vrot.lane.b32.xlu0 %v693, 94
        %v1276 = vpop.permute.xlu0 %1275
        %1277 = vrot.lane.b32.xlu0 %v694, 94
        %v1278 = vpop.permute.xlu0 %1277
        %vm1279 = vcmp.lt.s32.totalorder %v662, 94
        %v1280 = vsel %vm1279, %v1276, %v1278
        %v1281 = vsel %vm1279, %v1278, %v1276
        %vm1282 = vmand %vm1244, %vm1197
        %vm1283 = vmand %vm1245, %vm1198
        %v1284 = vsel %vm1282, 1, 0
        %v1285 = vsel %vm1283, 1, 0
        %v1286 = vlaneseq
        %v1287 = vshrl.u32 %v1286, 7
        %v1288 = vsub.s32 0, %v1287
        %v1289 = vrot.slane %v1284, %v1288
        %v1290 = vlaneseq
        %v1291 = vshrl.u32 %v1290, 7
        %v1292 = vsub.s32 0, %v1291
        %v1293 = vrot.slane %v1285, %v1292
        %vm1294 = vcmp.eq.s32.totalorder %v1289, 1
        %vm1295 = vcmp.eq.s32.totalorder %v1293, 1
        %v1296 = vsel %vm1294, %v1280, 0.0
        %v1297 = vsel %vm1295, %v1281, 0.0
        %v1298 = vld [vmem:[#allocation10] sm:$0xff]
        %v1299 = vld [vmem:[#allocation11] sm:$0xff]
        %1301 = vset.pattern.permute.xlu0 0
        %1302 = vperm.xlu0 %1301, %v1299
        %v1303 = vpop.permute.xlu0 %1302
        %v1306 = vsel %vm1053, %v1298, 0
        %1308 = vmatprep.subr.mxu0 0.0
        %1309 = vmatpush1.msra.mxu0 0.0
        %1310 = vmatprep.subr.mxu0 0.0
        %1311 = vmatpush1.msra.mxu0 0.0
        %1312 = vmatprep.subr.mxu0 0.0
        %1313 = vmatpush1.msra.mxu0 0.0
        %1314 = vmatprep.subr.mxu0 0.0
        %1315 = vmatpush1.msra.mxu0 0.0
        %1316 = vmatprep.subr.mxu0 0.0
        %1317 = vmatpush1.msra.mxu0 0.0
        %1318 = vmatprep.subr.mxu0 0.0
        %1319 = vmatpush1.msra.mxu0 0.0
        %1320 = vmatprep.subr.mxu0 0.0
        %1321 = vmatpush1.msra.mxu0 0.0
        %1322 = vmatprep.subr.mxu0 %v1297
        %1323 = vmatpush1.msra.mxu0 %v1296
        %1324 = vmatprep.subr.mxu0 %v1274
        %1325 = vmatpush1.msra.mxu0 %v1273
        %1326 = vmatprep.subr.mxu0 %v1261
        %1327 = vmatpush1.msra.mxu0 %v1260
        %1328 = vmatprep.subr.mxu0 %v1236
        %1329 = vmatpush1.msra.mxu0 %v1235
        %1330 = vmatprep.subr.mxu0 %v694
        %1331 = vmatpush1.msra.mxu0 %v693
        %1332 = vmatprep.subr.mxu0 %v1225
        %1333 = vmatpush1.msra.mxu0 %v1224
        %1334 = vmatprep.subr.mxu0 %v1214
        %1335 = vmatpush1.msra.mxu0 %v1213
        %1336 = vmatprep.subr.mxu0 %v1179
        %1337 = vmatpush1.msra.mxu0 %v1178
        %1338 = vmatprep.subr.mxu0 %v1166
        %1339 = vmatpush1.msra.mxu0 %v1165
        %1340 = vmatprep.subr.mxu0 0.0
        %1341 = vmatpush2.msra.mxu0 0.0
        %1342 = vmatprep.subr.mxu0 0.0
        %1343 = vmatpush2.msra.mxu0 0.0
        %1344 = vmatprep.subr.mxu0 0.0
        %1345 = vmatpush2.msra.mxu0 0.0
        %1346 = vmatprep.subr.mxu0 0.0
        %1347 = vmatpush2.msra.mxu0 0.0
        %1348 = vmatprep.subr.mxu0 0.0
        %1349 = vmatpush2.msra.mxu0 0.0
        %1350 = vmatprep.subr.mxu0 0.0
        %1351 = vmatpush2.msra.mxu0 0.0
        %1352 = vmatprep.subr.mxu0 0.0
        %1353 = vmatpush2.msra.mxu0 0.0
        %1354 = vmatprep.subr.mxu0 0.0
        %1355 = vmatpush2.msra.mxu0 0.0
        %1356 = vmatprep.subr.mxu0 0.0
        %1357 = vmatpush2.msra.mxu0 0.0
        %1358 = vmatprep.subr.mxu0 0.0
        %1359 = vmatpush2.msra.mxu0 0.0
        %1360 = vmatprep.subr.mxu0 0.0
        %1361 = vmatpush2.msra.mxu0 0.0
        %1362 = vmatprep.subr.mxu0 0.0
        %1363 = vmatpush2.msra.mxu0 0.0
        %1364 = vmatprep.subr.mxu0 0.0
        %1365 = vmatpush2.msra.mxu0 0.0
        %1366 = vmatprep.subr.mxu0 0.0
        %1367 = vmatpush2.msra.mxu0 0.0
        %1368 = vmatprep.subr.mxu0 0.0
        %1369 = vmatpush2.msra.mxu0 0.0
        %1370 = vmatprep.subr.mxu0 0.0
        %1371 = vmatpush2.msra.mxu0 0.0
        %1372 = vmatprep.mubr.f32.mxu0 0.0
        %1373 = vmatmul.mubr.f32.gmra.mxu0 %v1306
        %v1374 = vpop.f32.mrf.mxu0
        %v1375 = vadd.f32 %v1303, %v1374
        %v1376 = vpop.f32.mrf.mxu0
        %v1377 = vadd.f32 %v1303, %v1376
        %1378 = vdwg.mxu0
        %v1379 = vmax.f32 %v1375, 0.0
        %v1380 = vmax.f32 %v1377, 0.0
        %1381 = vrot.lane.b32.xlu0 %v1128, 17
        %v1382 = vpop.permute.xlu0 %1381
        %1383 = vrot.lane.b32.xlu0 %v1129, 17
        %v1384 = vpop.permute.xlu0 %1383
        %v1385 = vsel %vm882, %v1382, %v1384
        %v1386 = vsel %vm882, %v1384, %v1382
        %v1387 = vsel %vm911, %v1386, 0.0
        %v1388 = vsel %vm912, %v1385, 0.0
        %1389 = vrot.lane.b32.xlu0 %v1128, 16
        %v1390 = vpop.permute.xlu0 %1389
        %1391 = vrot.lane.b32.xlu0 %v1129, 16
        %v1392 = vpop.permute.xlu0 %1391
        %v1393 = vsel %vm919, %v1390, %v1392
        %v1394 = vsel %vm919, %v1392, %v1390
        %v1395 = vsel %vm924, %v1394, 0.0
        %v1396 = vsel %vm925, %v1393, 0.0
        %1397 = vrot.lane.b32.xlu0 %v1128, 15
        %v1398 = vpop.permute.xlu0 %1397
        %1399 = vrot.lane.b32.xlu0 %v1129, 15
        %v1400 = vpop.permute.xlu0 %1399
        %v1401 = vsel %vm932, %v1398, %v1400
        %v1402 = vsel %vm932, %v1400, %v1398
        %v1403 = vsel %vm959, %v1402, 0.0
        %v1404 = vsel %vm960, %v1401, 0.0
        %1405 = vrot.lane.b32.xlu0 %v1128, 1
        %v1406 = vpop.permute.xlu0 %1405
        %1407 = vrot.lane.b32.xlu0 %v1129, 1
        %v1408 = vpop.permute.xlu0 %1407
        %v1409 = vsel %vm967, %v1406, %v1408
        %v1410 = vsel %vm967, %v1408, %v1406
        %v1411 = vsel %vm970, %v1410, 0.0
        %v1412 = vsel %vm971, %v1409, 0.0
        %1413 = vrot.lane.b32.xlu0 %v1128, 127
        %v1414 = vpop.permute.xlu0 %1413
        %1415 = vrot.lane.b32.xlu0 %v1129, 127
        %v1416 = vpop.permute.xlu0 %1415
        %v1417 = vsel %vm978, %v1414, %v1416
        %v1418 = vsel %vm978, %v1416, %v1414
        %v1419 = vsel %vm981, %v1417, 0.0
        %v1420 = vsel %vm982, %v1418, 0.0
        %1421 = vrot.lane.b32.xlu0 %v1128, 113
        %v1422 = vpop.permute.xlu0 %1421
        %1423 = vrot.lane.b32.xlu0 %v1129, 113
        %v1424 = vpop.permute.xlu0 %1423
        %v1425 = vsel %vm989, %v1422, %v1424
        %v1426 = vsel %vm989, %v1424, %v1422
        %v1427 = vsel %vm1006, %v1425, 0.0
        %v1428 = vsel %vm1007, %v1426, 0.0
        %1429 = vrot.lane.b32.xlu0 %v1128, 112
        %v1430 = vpop.permute.xlu0 %1429
        %1431 = vrot.lane.b32.xlu0 %v1129, 112
        %v1432 = vpop.permute.xlu0 %1431
        %v1433 = vsel %vm1014, %v1430, %v1432
        %v1434 = vsel %vm1014, %v1432, %v1430
        %v1435 = vsel %vm1019, %v1433, 0.0
        %v1436 = vsel %vm1020, %v1434, 0.0
        %1437 = vrot.lane.b32.xlu0 %v1128, 111
        %v1438 = vpop.permute.xlu0 %1437
        %1439 = vrot.lane.b32.xlu0 %v1129, 111
        %v1440 = vpop.permute.xlu0 %1439
        %v1441 = vsel %vm1027, %v1438, %v1440
        %v1442 = vsel %vm1027, %v1440, %v1438
        %v1443 = vsel %vm1042, %v1441, 0.0
        %v1444 = vsel %vm1043, %v1442, 0.0
        %v1445 = vld [vmem:[#allocation7] sm:$0xff]
        %v1446 = vld [vmem:[#allocation8] sm:$0xff]
        %1448 = vset.pattern.permute.xlu0 0
        %1449 = vperm.xlu0 %1448, %v1446
        %v1450 = vpop.permute.xlu0 %1449
        %v1453 = vsel %vm1053, %v1445, 0
        %1455 = vmatprep.subr.mxu0 0.0
        %1456 = vmatpush1.msra.mxu0 0.0
        %1457 = vmatprep.subr.mxu0 0.0
        %1458 = vmatpush1.msra.mxu0 0.0
        %1459 = vmatprep.subr.mxu0 0.0
        %1460 = vmatpush1.msra.mxu0 0.0
        %1461 = vmatprep.subr.mxu0 0.0
        %1462 = vmatpush1.msra.mxu0 0.0
        %1463 = vmatprep.subr.mxu0 0.0
        %1464 = vmatpush1.msra.mxu0 0.0
        %1465 = vmatprep.subr.mxu0 0.0
        %1466 = vmatpush1.msra.mxu0 0.0
        %1467 = vmatprep.subr.mxu0 0.0
        %1468 = vmatpush1.msra.mxu0 0.0
        %1469 = vmatprep.subr.mxu0 %v1444
        %1470 = vmatpush1.msra.mxu0 %v1443
        %1471 = vmatprep.subr.mxu0 %v1436
        %1472 = vmatpush1.msra.mxu0 %v1435
        %1473 = vmatprep.subr.mxu0 %v1428
        %1474 = vmatpush1.msra.mxu0 %v1427
        %1475 = vmatprep.subr.mxu0 %v1420
        %1476 = vmatpush1.msra.mxu0 %v1419
        %1477 = vmatprep.subr.mxu0 %v1129
        %1478 = vmatpush1.msra.mxu0 %v1128
        %1479 = vmatprep.subr.mxu0 %v1412
        %1480 = vmatpush1.msra.mxu0 %v1411
        %1481 = vmatprep.subr.mxu0 %v1404
        %1482 = vmatpush1.msra.mxu0 %v1403
        %1483 = vmatprep.subr.mxu0 %v1396
        %1484 = vmatpush1.msra.mxu0 %v1395
        %1485 = vmatprep.subr.mxu0 %v1388
        %1486 = vmatpush1.msra.mxu0 %v1387
        %1487 = vmatprep.subr.mxu0 0.0
        %1488 = vmatpush2.msra.mxu0 0.0
        %1489 = vmatprep.subr.mxu0 0.0
        %1490 = vmatpush2.msra.mxu0 0.0
        %1491 = vmatprep.subr.mxu0 0.0
        %1492 = vmatpush2.msra.mxu0 0.0
        %1493 = vmatprep.subr.mxu0 0.0
        %1494 = vmatpush2.msra.mxu0 0.0
        %1495 = vmatprep.subr.mxu0 0.0
        %1496 = vmatpush2.msra.mxu0 0.0
        %1497 = vmatprep.subr.mxu0 0.0
        %1498 = vmatpush2.msra.mxu0 0.0
        %1499 = vmatprep.subr.mxu0 0.0
        %1500 = vmatpush2.msra.mxu0 0.0
        %1501 = vmatprep.subr.mxu0 0.0
        %1502 = vmatpush2.msra.mxu0 0.0
        %1503 = vmatprep.subr.mxu0 0.0
        %1504 = vmatpush2.msra.mxu0 0.0
        %1505 = vmatprep.subr.mxu0 0.0
        %1506 = vmatpush2.msra.mxu0 0.0
        %1507 = vmatprep.subr.mxu0 0.0
        %1508 = vmatpush2.msra.mxu0 0.0
        %1509 = vmatprep.subr.mxu0 0.0
        %1510 = vmatpush2.msra.mxu0 0.0
        %1511 = vmatprep.subr.mxu0 0.0
        %1512 = vmatpush2.msra.mxu0 0.0
        %1513 = vmatprep.subr.mxu0 0.0
        %1514 = vmatpush2.msra.mxu0 0.0
        %1515 = vmatprep.subr.mxu0 0.0
        %1516 = vmatpush2.msra.mxu0 0.0
        %1517 = vmatprep.subr.mxu0 0.0
        %1518 = vmatpush2.msra.mxu0 0.0
        %1519 = vmatprep.mubr.f32.mxu0 0.0
        %1520 = vmatmul.mubr.f32.gmra.mxu0 %v1453
        %v1521 = vpop.f32.mrf.mxu0
        %v1522 = vadd.f32 %v1450, %v1521
        %v1523 = vpop.f32.mrf.mxu0
        %v1524 = vadd.f32 %v1450, %v1523
        %1525 = vdwg.mxu0
        %1526 = vrot.lane.b32.xlu0 %v1379, 34
        %v1527 = vpop.permute.xlu0 %1526
        %1528 = vrot.lane.b32.xlu0 %v1380, 34
        %v1529 = vpop.permute.xlu0 %1528
        %v1530 = vsel %vm1134, %v1527, %v1529
        %v1531 = vsel %vm1134, %v1529, %v1527
        %v1532 = vsel %vm1163, %v1531, 0.0
        %v1533 = vsel %vm1164, %v1530, 0.0
        %1534 = vrot.lane.b32.xlu0 %v1379, 32
        %v1535 = vpop.permute.xlu0 %1534
        %1536 = vrot.lane.b32.xlu0 %v1380, 32
        %v1537 = vpop.permute.xlu0 %1536
        %v1538 = vsel %vm1171, %v1535, %v1537
        %v1539 = vsel %vm1171, %v1537, %v1535
        %v1540 = vsel %vm1176, %v1539, 0.0
        %v1541 = vsel %vm1177, %v1538, 0.0
        %1542 = vrot.lane.b32.xlu0 %v1379, 30
        %v1543 = vpop.permute.xlu0 %1542
        %1544 = vrot.lane.b32.xlu0 %v1380, 30
        %v1545 = vpop.permute.xlu0 %1544
        %v1546 = vsel %vm1184, %v1543, %v1545
        %v1547 = vsel %vm1184, %v1545, %v1543
        %v1548 = vsel %vm1211, %v1547, 0.0
        %v1549 = vsel %vm1212, %v1546, 0.0
        %1550 = vrot.lane.b32.xlu0 %v1379, 2
        %v1551 = vpop.permute.xlu0 %1550
        %1552 = vrot.lane.b32.xlu0 %v1380, 2
        %v1553 = vpop.permute.xlu0 %1552
        %v1554 = vsel %vm1219, %v1551, %v1553
        %v1555 = vsel %vm1219, %v1553, %v1551
        %v1556 = vsel %vm1222, %v1555, 0.0
        %v1557 = vsel %vm1223, %v1554, 0.0
        %1558 = vrot.lane.b32.xlu0 %v1379, 126
        %v1559 = vpop.permute.xlu0 %1558
        %1560 = vrot.lane.b32.xlu0 %v1380, 126
        %v1561 = vpop.permute.xlu0 %1560
        %v1562 = vsel %vm1230, %v1559, %v1561
        %v1563 = vsel %vm1230, %v1561, %v1559
        %v1564 = vsel %vm1233, %v1562, 0.0
        %v1565 = vsel %vm1234, %v1563, 0.0
        %1566 = vrot.lane.b32.xlu0 %v1379, 98
        %v1567 = vpop.permute.xlu0 %1566
        %1568 = vrot.lane.b32.xlu0 %v1380, 98
        %v1569 = vpop.permute.xlu0 %1568
        %v1570 = vsel %vm1241, %v1567, %v1569
        %v1571 = vsel %vm1241, %v1569, %v1567
        %v1572 = vsel %vm1258, %v1570, 0.0
        %v1573 = vsel %vm1259, %v1571, 0.0
        %1574 = vrot.lane.b32.xlu0 %v1379, 96
        %v1575 = vpop.permute.xlu0 %1574
        %1576 = vrot.lane.b32.xlu0 %v1380, 96
        %v1577 = vpop.permute.xlu0 %1576
        %v1578 = vsel %vm1266, %v1575, %v1577
        %v1579 = vsel %vm1266, %v1577, %v1575
        %v1580 = vsel %vm1271, %v1578, 0.0
        %v1581 = vsel %vm1272, %v1579, 0.0
        %1582 = vrot.lane.b32.xlu0 %v1379, 94
        %v1583 = vpop.permute.xlu0 %1582
        %1584 = vrot.lane.b32.xlu0 %v1380, 94
        %v1585 = vpop.permute.xlu0 %1584
        %v1586 = vsel %vm1279, %v1583, %v1585
        %v1587 = vsel %vm1279, %v1585, %v1583
        %v1588 = vsel %vm1294, %v1586, 0.0
        %v1589 = vsel %vm1295, %v1587, 0.0
        %v1590 = vld [vmem:[#allocation13] sm:$0xff]
        %v1591 = vld [vmem:[#allocation14] sm:$0xff]
        %1593 = vset.pattern.permute.xlu0 0
        %1594 = vperm.xlu0 %1593, %v1591
        %v1595 = vpop.permute.xlu0 %1594
        %v1598 = vsel %vm1053, %v1590, 0
        %1600 = vmatprep.subr.mxu0 0.0
        %1601 = vmatpush1.msra.mxu0 0.0
        %1602 = vmatprep.subr.mxu0 0.0
        %1603 = vmatpush1.msra.mxu0 0.0
        %1604 = vmatprep.subr.mxu0 0.0
        %1605 = vmatpush1.msra.mxu0 0.0
        %1606 = vmatprep.subr.mxu0 0.0
        %1607 = vmatpush1.msra.mxu0 0.0
        %1608 = vmatprep.subr.mxu0 0.0
        %1609 = vmatpush1.msra.mxu0 0.0
        %1610 = vmatprep.subr.mxu0 0.0
        %1611 = vmatpush1.msra.mxu0 0.0
        %1612 = vmatprep.subr.mxu0 0.0
        %1613 = vmatpush1.msra.mxu0 0.0
        %1614 = vmatprep.subr.mxu0 %v1589
        %1615 = vmatpush1.msra.mxu0 %v1588
        %1616 = vmatprep.subr.mxu0 %v1581
        %1617 = vmatpush1.msra.mxu0 %v1580
        %1618 = vmatprep.subr.mxu0 %v1573
        %1619 = vmatpush1.msra.mxu0 %v1572
        %1620 = vmatprep.subr.mxu0 %v1565
        %1621 = vmatpush1.msra.mxu0 %v1564
        %1622 = vmatprep.subr.mxu0 %v1380
        %1623 = vmatpush1.msra.mxu0 %v1379
        %1624 = vmatprep.subr.mxu0 %v1557
        %1625 = vmatpush1.msra.mxu0 %v1556
        %1626 = vmatprep.subr.mxu0 %v1549
        %1627 = vmatpush1.msra.mxu0 %v1548
        %1628 = vmatprep.subr.mxu0 %v1541
        %1629 = vmatpush1.msra.mxu0 %v1540
        %1630 = vmatprep.subr.mxu0 %v1533
        %1631 = vmatpush1.msra.mxu0 %v1532
        %1632 = vmatprep.subr.mxu0 0.0
        %1633 = vmatpush2.msra.mxu0 0.0
        %1634 = vmatprep.subr.mxu0 0.0
        %1635 = vmatpush2.msra.mxu0 0.0
        %1636 = vmatprep.subr.mxu0 0.0
        %1637 = vmatpush2.msra.mxu0 0.0
        %1638 = vmatprep.subr.mxu0 0.0
        %1639 = vmatpush2.msra.mxu0 0.0
        %1640 = vmatprep.subr.mxu0 0.0
        %1641 = vmatpush2.msra.mxu0 0.0
        %1642 = vmatprep.subr.mxu0 0.0
        %1643 = vmatpush2.msra.mxu0 0.0
        %1644 = vmatprep.subr.mxu0 0.0
        %1645 = vmatpush2.msra.mxu0 0.0
        %1646 = vmatprep.subr.mxu0 0.0
        %1647 = vmatpush2.msra.mxu0 0.0
        %1648 = vmatprep.subr.mxu0 0.0
        %1649 = vmatpush2.msra.mxu0 0.0
        %1650 = vmatprep.subr.mxu0 0.0
        %1651 = vmatpush2.msra.mxu0 0.0
        %1652 = vmatprep.subr.mxu0 0.0
        %1653 = vmatpush2.msra.mxu0 0.0
        %1654 = vmatprep.subr.mxu0 0.0
        %1655 = vmatpush2.msra.mxu0 0.0
        %1656 = vmatprep.subr.mxu0 0.0
        %1657 = vmatpush2.msra.mxu0 0.0
        %1658 = vmatprep.subr.mxu0 0.0
        %1659 = vmatpush2.msra.mxu0 0.0
        %1660 = vmatprep.subr.mxu0 0.0
        %1661 = vmatpush2.msra.mxu0 0.0
        %1662 = vmatprep.subr.mxu0 0.0
        %1663 = vmatpush2.msra.mxu0 0.0
        %1664 = vmatprep.mubr.f32.mxu0 0.0
        %1665 = vmatmul.mubr.f32.gmra.mxu0 %v1598
        %v1666 = vpop.f32.mrf.mxu0
        %v1667 = vadd.f32 %v1595, %v1666
        %v1668 = vpop.f32.mrf.mxu0
        %v1669 = vadd.f32 %v1595, %v1668
        %1670 = vdwg.mxu0
        %v1671 = vadd.f32 %v1522, %v1667
        %v1672 = vadd.f32 %v1524, %v1669
        %v1673 = vmax.f32 %v1671, 0.0
        %v1674 = vmax.f32 %v1672, 0.0
        %v1675 = vrot.slane %v876, 4
        %v1676 = vadd.f32 %v876, %v1675
        %v1677 = vrot.slane %v1676, 2
        %v1678 = vadd.f32 %v1676, %v1677
        %v1679 = vrot.slane %v1678, 1
        %v1680 = vadd.f32 %v1678, %v1679
        %v1681 = vrot.slane %v877, 4
        %v1682 = vadd.f32 %v877, %v1681
        %v1683 = vrot.slane %v1682, 2
        %v1684 = vadd.f32 %v1682, %v1683
        %v1685 = vrot.slane %v1684, 1
        %v1686 = vadd.f32 %v1684, %v1685
        %v1687 = vrcp.pop 8.0
        %v1688 = vmul.f32 %v1680, %v1687
        %v1689 = vmul.f32 %v1686, %v1687
        %v1690 = vrot.slane %v876, 4
        %v1691 = vmax.f32 %v876, %v1690
        %v1692 = vrot.slane %v1691, 2
        %v1693 = vmax.f32 %v1691, %v1692
        %v1694 = vrot.slane %v1693, 1
        %v1695 = vmax.f32 %v1693, %v1694
        %v1696 = vrot.slane %v877, 4
        %v1697 = vmax.f32 %v877, %v1696
        %v1698 = vrot.slane %v1697, 2
        %v1699 = vmax.f32 %v1697, %v1698
        %v1700 = vrot.slane %v1699, 1
        %v1701 = vmax.f32 %v1699, %v1700
        %vm1702 = vcmask 1040384
        %v1703 = vsel %vm1702, %v1688, %v1695
        %v1704 = vsel %vm1702, %v1689, %v1701
        %1705 = vrot.lane.b32.xlu0 %v1703, 51
        %v1706 = vpop.permute.xlu0 %1705
        %1707 = vrot.lane.b32.xlu0 %v1704, 51
        %v1708 = vpop.permute.xlu0 %1707
        %vm1709 = vcmp.lt.s32.totalorder %v662, 51
        %v1710 = vsel %vm1709, %v1706, %v1708
        %v1711 = vsel %vm1709, %v1708, %v1706
        %vm1712 = vcmp.ge.s32.totalorder %v662, 48
        %vm1713 = vcmp.ge.s32.totalorder %v663, 48
        %vm1714 = vcmp.ge.s32.totalorder %v664, 3
        %v1715 = vsel %vm1714, 1, 0
        %v1716 = vlaneseq
        %v1717 = vshrl.u32 %v1716, 7
        %v1718 = vsub.s32 0, %v1717
        %v1719 = vrot.slane %v1715, %v1718
        %v1720 = vlaneseq
        %v1721 = vshrl.u32 %v1720, 7
        %v1722 = vsub.s32 1, %v1721
        %v1723 = vrot.slane %v1715, %v1722
        %vm1724 = vcmp.ne.s32.totalorder %v1719, 0
        %vm1725 = vcmp.ne.s32.totalorder %v1723, 0
        %vm1726 = vmand %vm1712, %vm1724
        %vm1727 = vmand %vm1713, %vm1725
        %v1728 = vsel %vm1726, 1, 0
        %v1729 = vsel %vm1727, 1, 0
        %v1730 = vlaneseq
        %v1731 = vshrl.u32 %v1730, 7
        %v1732 = vsub.s32 0, %v1731
        %v1733 = vrot.slane %v1728, %v1732
        %v1734 = vlaneseq
        %v1735 = vshrl.u32 %v1734, 7
        %v1736 = vsub.s32 0, %v1735
        %v1737 = vrot.slane %v1729, %v1736
        %vm1738 = vcmp.eq.s32.totalorder %v1733, 1
        %vm1739 = vcmp.eq.s32.totalorder %v1737, 1
        %v1740 = vsel %vm1738, %v1711, 0.0
        %v1741 = vsel %vm1739, %v1710, 0.0
        %s1742 = sld [smem:[#allocation16]]
        %v1743 = vstv %s1742
        %v1744 = vmul.f32 %v1743, %v1740
        %v1745 = vmul.f32 %v1743, %v1741
        %s1746 = sld [smem:[#allocation16 + $0x1]]
        %v1747 = vstv %s1746
        %v1748 = vmul.f32 %v1747, %v1740
        %v1749 = vmul.f32 %v1747, %v1741
        %v1752 = vrot.slane %v1748, 1
        %v1753 = vrot.slane %v1749, 1
        %v1756 = vadd.f32 %v1744, %v1752
        %v1757 = vadd.f32 %v1745, %v1753
        %1758 = vrot.lane.b32.xlu0 %v1703, 50
        %v1759 = vpop.permute.xlu0 %1758
        %1760 = vrot.lane.b32.xlu0 %v1704, 50
        %v1761 = vpop.permute.xlu0 %1760
        %vm1762 = vcmp.lt.s32.totalorder %v662, 50
        %v1763 = vsel %vm1762, %v1759, %v1761
        %v1764 = vsel %vm1762, %v1761, %v1759
        %vm1765 = vmand %vm1712, %vm1149
        %vm1766 = vmand %vm1713, %vm1150
        %v1767 = vsel %vm1765, 1, 0
        %v1768 = vsel %vm1766, 1, 0
        %v1769 = vlaneseq
        %v1770 = vshrl.u32 %v1769, 7
        %v1771 = vsub.s32 0, %v1770
        %v1772 = vrot.slane %v1767, %v1771
        %v1773 = vlaneseq
        %v1774 = vshrl.u32 %v1773, 7
        %v1775 = vsub.s32 0, %v1774
        %v1776 = vrot.slane %v1768, %v1775
        %vm1777 = vcmp.eq.s32.totalorder %v1772, 1
        %vm1778 = vcmp.eq.s32.totalorder %v1776, 1
        %v1779 = vsel %vm1777, %v1764, 0.0
        %v1780 = vsel %vm1778, %v1763, 0.0
        %s1781 = sld [smem:[#allocation16 + $0x2]]
        %v1782 = vstv %s1781
        %v1783 = vmul.f32 %v1782, %v1779
        %v1784 = vmul.f32 %v1782, %v1780
        %s1785 = sld [smem:[#allocation16 + $0x3]]
        %v1786 = vstv %s1785
        %v1787 = vmul.f32 %v1786, %v1779
        %v1788 = vmul.f32 %v1786, %v1780
        %v1791 = vrot.slane %v1787, 1
        %v1792 = vrot.slane %v1788, 1
        %v1795 = vadd.f32 %v1783, %v1791
        %v1796 = vadd.f32 %v1784, %v1792
        %v1797 = vadd.f32 %v1756, %v1795
        %v1798 = vadd.f32 %v1757, %v1796
        %1799 = vrot.lane.b32.xlu0 %v1703, 49
        %v1800 = vpop.permute.xlu0 %1799
        %1801 = vrot.lane.b32.xlu0 %v1704, 49
        %v1802 = vpop.permute.xlu0 %1801
        %vm1803 = vcmp.lt.s32.totalorder %v662, 49
        %v1804 = vsel %vm1803, %v1800, %v1802
        %v1805 = vsel %vm1803, %v1802, %v1800
        %vm1806 = vmand %vm1712, %vm897
        %vm1807 = vmand %vm1713, %vm898
        %v1808 = vsel %vm1806, 1, 0
        %v1809 = vsel %vm1807, 1, 0
        %v1810 = vlaneseq
        %v1811 = vshrl.u32 %v1810, 7
        %v1812 = vsub.s32 0, %v1811
        %v1813 = vrot.slane %v1808, %v1812
        %v1814 = vlaneseq
        %v1815 = vshrl.u32 %v1814, 7
        %v1816 = vsub.s32 0, %v1815
        %v1817 = vrot.slane %v1809, %v1816
        %vm1818 = vcmp.eq.s32.totalorder %v1813, 1
        %vm1819 = vcmp.eq.s32.totalorder %v1817, 1
        %v1820 = vsel %vm1818, %v1805, 0.0
        %v1821 = vsel %vm1819, %v1804, 0.0
        %s1822 = sld [smem:[#allocation16 + $0x4]]
        %v1823 = vstv %s1822
        %v1824 = vmul.f32 %v1823, %v1820
        %v1825 = vmul.f32 %v1823, %v1821
        %s1826 = sld [smem:[#allocation16 + $0x5]]
        %v1827 = vstv %s1826
        %v1828 = vmul.f32 %v1827, %v1820
        %v1829 = vmul.f32 %v1827, %v1821
        %v1832 = vrot.slane %v1828, 1
        %v1833 = vrot.slane %v1829, 1
        %v1836 = vadd.f32 %v1824, %v1832
        %v1837 = vadd.f32 %v1825, %v1833
        %v1838 = vadd.f32 %v1797, %v1836
        %v1839 = vadd.f32 %v1798, %v1837
        %1840 = vrot.lane.b32.xlu0 %v1703, 48
        %v1841 = vpop.permute.xlu0 %1840
        %1842 = vrot.lane.b32.xlu0 %v1704, 48
        %v1843 = vpop.permute.xlu0 %1842
        %vm1844 = vcmp.lt.s32.totalorder %v662, 48
        %v1845 = vsel %vm1844, %v1841, %v1843
        %v1846 = vsel %vm1844, %v1843, %v1841
        %v1847 = vsel %vm1712, 1, 0
        %v1848 = vsel %vm1713, 1, 0
        %vm1849 = vcmp.eq.s32.totalorder %v1847, 1
        %vm1850 = vcmp.eq.s32.totalorder %v1848, 1
        %v1851 = vsel %vm1849, %v1846, 0.0
        %v1852 = vsel %vm1850, %v1845, 0.0
        %s1853 = sld [smem:[#allocation16 + $0x6]]
        %v1854 = vstv %s1853
        %v1855 = vmul.f32 %v1854, %v1851
        %v1856 = vmul.f32 %v1854, %v1852
        %s1857 = sld [smem:[#allocation16 + $0x7]]
        %v1858 = vstv %s1857
        %v1859 = vmul.f32 %v1858, %v1851
        %v1860 = vmul.f32 %v1858, %v1852
        %v1863 = vrot.slane %v1859, 1
        %v1864 = vrot.slane %v1860, 1
        %v1867 = vadd.f32 %v1855, %v1863
        %v1868 = vadd.f32 %v1856, %v1864
        %v1869 = vadd.f32 %v1838, %v1867
        %v1870 = vadd.f32 %v1839, %v1868
        %1871 = vrot.lane.b32.xlu0 %v1703, 47
        %v1872 = vpop.permute.xlu0 %1871
        %1873 = vrot.lane.b32.xlu0 %v1704, 47
        %v1874 = vpop.permute.xlu0 %1873
        %vm1875 = vcmp.lt.s32.totalorder %v662, 47
        %v1876 = vsel %vm1875, %v1872, %v1874
        %v1877 = vsel %vm1875, %v1874, %v1872
        %vm1878 = vmand %vm1712, %vm945
        %vm1879 = vmand %vm1713, %vm946
        %v1880 = vsel %vm1878, 1, 0
        %v1881 = vsel %vm1879, 1, 0
        %v1882 = vlaneseq
        %v1883 = vshrl.u32 %v1882, 7
        %v1884 = vsub.s32 0, %v1883
        %v1885 = vrot.slane %v1880, %v1884
        %v1886 = vlaneseq
        %v1887 = vshrl.u32 %v1886, 7
        %v1888 = vsub.s32 0, %v1887
        %v1889 = vrot.slane %v1881, %v1888
        %vm1890 = vcmp.eq.s32.totalorder %v1885, 1
        %vm1891 = vcmp.eq.s32.totalorder %v1889, 1
        %v1892 = vsel %vm1890, %v1877, 0.0
        %v1893 = vsel %vm1891, %v1876, 0.0
        %s1894 = sld [smem:[#allocation16 + $0x8]]
        %v1895 = vstv %s1894
        %v1896 = vmul.f32 %v1895, %v1892
        %v1897 = vmul.f32 %v1895, %v1893
        %s1898 = sld [smem:[#allocation16 + $0x9]]
        %v1899 = vstv %s1898
        %v1900 = vmul.f32 %v1899, %v1892
        %v1901 = vmul.f32 %v1899, %v1893
        %v1904 = vrot.slane %v1900, 1
        %v1905 = vrot.slane %v1901, 1
        %v1908 = vadd.f32 %v1896, %v1904
        %v1909 = vadd.f32 %v1897, %v1905
        %v1910 = vadd.f32 %v1869, %v1908
        %v1911 = vadd.f32 %v1870, %v1909
        %1912 = vrot.lane.b32.xlu0 %v1703, 46
        %v1913 = vpop.permute.xlu0 %1912
        %1914 = vrot.lane.b32.xlu0 %v1704, 46
        %v1915 = vpop.permute.xlu0 %1914
        %vm1916 = vcmp.lt.s32.totalorder %v662, 46
        %v1917 = vsel %vm1916, %v1913, %v1915
        %v1918 = vsel %vm1916, %v1915, %v1913
        %vm1919 = vmand %vm1712, %vm1197
        %vm1920 = vmand %vm1713, %vm1198
        %v1921 = vsel %vm1919, 1, 0
        %v1922 = vsel %vm1920, 1, 0
        %v1923 = vlaneseq
        %v1924 = vshrl.u32 %v1923, 7
        %v1925 = vsub.s32 0, %v1924
        %v1926 = vrot.slane %v1921, %v1925
        %v1927 = vlaneseq
        %v1928 = vshrl.u32 %v1927, 7
        %v1929 = vsub.s32 0, %v1928
        %v1930 = vrot.slane %v1922, %v1929
        %vm1931 = vcmp.eq.s32.totalorder %v1926, 1
        %vm1932 = vcmp.eq.s32.totalorder %v1930, 1
        %v1933 = vsel %vm1931, %v1918, 0.0
        %v1934 = vsel %vm1932, %v1917, 0.0
        %s1935 = sld [smem:[#allocation16 + $0xa]]
        %v1936 = vstv %s1935
        %v1937 = vmul.f32 %v1936, %v1933
        %v1938 = vmul.f32 %v1936, %v1934
        %s1939 = sld [smem:[#allocation16 + $0xb]]
        %v1940 = vstv %s1939
        %v1941 = vmul.f32 %v1940, %v1933
        %v1942 = vmul.f32 %v1940, %v1934
        %v1945 = vrot.slane %v1941, 1
        %v1946 = vrot.slane %v1942, 1
        %v1949 = vadd.f32 %v1937, %v1945
        %v1950 = vadd.f32 %v1938, %v1946
        %v1951 = vadd.f32 %v1910, %v1949
        %v1952 = vadd.f32 %v1911, %v1950
        %1953 = vrot.lane.b32.xlu0 %v1703, 45
        %v1954 = vpop.permute.xlu0 %1953
        %1955 = vrot.lane.b32.xlu0 %v1704, 45
        %v1956 = vpop.permute.xlu0 %1955
        %vm1957 = vcmp.lt.s32.totalorder %v662, 45
        %v1958 = vsel %vm1957, %v1954, %v1956
        %v1959 = vsel %vm1957, %v1956, %v1954
        %vm1960 = vcmp.lt.s32.totalorder %v664, 13
        %v1961 = vsel %vm1960, 1, 0
        %v1962 = vlaneseq
        %v1963 = vshrl.u32 %v1962, 7
        %v1964 = vsub.s32 0, %v1963
        %v1965 = vrot.slane %v1961, %v1964
        %v1966 = vlaneseq
        %v1967 = vshrl.u32 %v1966, 7
        %v1968 = vsub.s32 1, %v1967
        %v1969 = vrot.slane %v1961, %v1968
        %vm1970 = vcmp.ne.s32.totalorder %v1965, 0
        %vm1971 = vcmp.ne.s32.totalorder %v1969, 0
        %vm1972 = vmand %vm1712, %vm1970
        %vm1973 = vmand %vm1713, %vm1971
        %v1974 = vsel %vm1972, 1, 0
        %v1975 = vsel %vm1973, 1, 0
        %v1976 = vlaneseq
        %v1977 = vshrl.u32 %v1976, 7
        %v1978 = vsub.s32 0, %v1977
        %v1979 = vrot.slane %v1974, %v1978
        %v1980 = vlaneseq
        %v1981 = vshrl.u32 %v1980, 7
        %v1982 = vsub.s32 0, %v1981
        %v1983 = vrot.slane %v1975, %v1982
        %vm1984 = vcmp.eq.s32.totalorder %v1979, 1
        %vm1985 = vcmp.eq.s32.totalorder %v1983, 1
        %v1986 = vsel %vm1984, %v1959, 0.0
        %v1987 = vsel %vm1985, %v1958, 0.0
        %s1988 = sld [smem:[#allocation16 + $0xc]]
        %v1989 = vstv %s1988
        %v1990 = vmul.f32 %v1989, %v1986
        %v1991 = vmul.f32 %v1989, %v1987
        %s1992 = sld [smem:[#allocation16 + $0xd]]
        %v1993 = vstv %s1992
        %v1994 = vmul.f32 %v1993, %v1986
        %v1995 = vmul.f32 %v1993, %v1987
        %v1998 = vrot.slane %v1994, 1
        %v1999 = vrot.slane %v1995, 1
        %v2002 = vadd.f32 %v1990, %v1998
        %v2003 = vadd.f32 %v1991, %v1999
        %v2004 = vadd.f32 %v1951, %v2002
        %v2005 = vadd.f32 %v1952, %v2003
        %2006 = vrot.lane.b32.xlu0 %v1703, 35
        %v2007 = vpop.permute.xlu0 %2006
        %2008 = vrot.lane.b32.xlu0 %v1704, 35
        %v2009 = vpop.permute.xlu0 %2008
        %vm2010 = vcmp.lt.s32.totalorder %v662, 35
        %v2011 = vsel %vm2010, %v2007, %v2009
        %v2012 = vsel %vm2010, %v2009, %v2007
        %vm2013 = vmand %vm1137, %vm1724
        %vm2014 = vmand %vm1138, %vm1725
        %v2015 = vsel %vm2013, 1, 0
        %v2016 = vsel %vm2014, 1, 0
        %v2017 = vlaneseq
        %v2018 = vshrl.u32 %v2017, 7
        %v2019 = vsub.s32 0, %v2018
        %v2020 = vrot.slane %v2015, %v2019
        %v2021 = vlaneseq
        %v2022 = vshrl.u32 %v2021, 7
        %v2023 = vsub.s32 0, %v2022
        %v2024 = vrot.slane %v2016, %v2023
        %vm2025 = vcmp.eq.s32.totalorder %v2020, 1
        %vm2026 = vcmp.eq.s32.totalorder %v2024, 1
        %v2027 = vsel %vm2025, %v2012, 0.0
        %v2028 = vsel %vm2026, %v2011, 0.0
        %s2029 = sld [smem:[#allocation16 + $0xe]]
        %v2030 = vstv %s2029
        %v2031 = vmul.f32 %v2030, %v2027
        %v2032 = vmul.f32 %v2030, %v2028
        %s2033 = sld [smem:[#allocation16 + $0xf]]
        %v2034 = vstv %s2033
        %v2035 = vmul.f32 %v2034, %v2027
        %v2036 = vmul.f32 %v2034, %v2028
        %v2039 = vrot.slane %v2035, 1
        %v2040 = vrot.slane %v2036, 1
        %v2043 = vadd.f32 %v2031, %v2039
        %v2044 = vadd.f32 %v2032, %v2040
        %v2045 = vadd.f32 %v2004, %v2043
        %v2046 = vadd.f32 %v2005, %v2044
        %2047 = vrot.lane.b32.xlu0 %v1703, 34
        %v2048 = vpop.permute.xlu0 %2047
        %2049 = vrot.lane.b32.xlu0 %v1704, 34
        %v2050 = vpop.permute.xlu0 %2049
        %v2051 = vsel %vm1134, %v2048, %v2050
        %v2052 = vsel %vm1134, %v2050, %v2048
        %v2053 = vsel %vm1163, %v2052, 0.0
        %v2054 = vsel %vm1164, %v2051, 0.0
        %s2055 = sld [smem:[#allocation16 + $0x10]]
        %v2056 = vstv %s2055
        %v2057 = vmul.f32 %v2056, %v2053
        %v2058 = vmul.f32 %v2056, %v2054
        %s2059 = sld [smem:[#allocation16 + $0x11]]
        %v2060 = vstv %s2059
        %v2061 = vmul.f32 %v2060, %v2053
        %v2062 = vmul.f32 %v2060, %v2054
        %v2065 = vrot.slane %v2061, 1
        %v2066 = vrot.slane %v2062, 1
        %v2069 = vadd.f32 %v2057, %v2065
        %v2070 = vadd.f32 %v2058, %v2066
        %v2071 = vadd.f32 %v2045, %v2069
        %v2072 = vadd.f32 %v2046, %v2070
        %2073 = vrot.lane.b32.xlu0 %v1703, 33
        %v2074 = vpop.permute.xlu0 %2073
        %2075 = vrot.lane.b32.xlu0 %v1704, 33
        %v2076 = vpop.permute.xlu0 %2075
        %vm2077 = vcmp.lt.s32.totalorder %v662, 33
        %v2078 = vsel %vm2077, %v2074, %v2076
        %v2079 = vsel %vm2077, %v2076, %v2074
        %vm2080 = vmand %vm1137, %vm897
        %vm2081 = vmand %vm1138, %vm898
        %v2082 = vsel %vm2080, 1, 0
        %v2083 = vsel %vm2081, 1, 0
        %v2084 = vlaneseq
        %v2085 = vshrl.u32 %v2084, 7
        %v2086 = vsub.s32 0, %v2085
        %v2087 = vrot.slane %v2082, %v2086
        %v2088 = vlaneseq
        %v2089 = vshrl.u32 %v2088, 7
        %v2090 = vsub.s32 0, %v2089
        %v2091 = vrot.slane %v2083, %v2090
        %vm2092 = vcmp.eq.s32.totalorder %v2087, 1
        %vm2093 = vcmp.eq.s32.totalorder %v2091, 1
        %v2094 = vsel %vm2092, %v2079, 0.0
        %v2095 = vsel %vm2093, %v2078, 0.0
        %s2096 = sld [smem:[#allocation16 + $0x12]]
        %v2097 = vstv %s2096
        %v2098 = vmul.f32 %v2097, %v2094
        %v2099 = vmul.f32 %v2097, %v2095
        %s2100 = sld [smem:[#allocation16 + $0x13]]
        %v2101 = vstv %s2100
        %v2102 = vmul.f32 %v2101, %v2094
        %v2103 = vmul.f32 %v2101, %v2095
        %v2106 = vrot.slane %v2102, 1
        %v2107 = vrot.slane %v2103, 1
        %v2110 = vadd.f32 %v2098, %v2106
        %v2111 = vadd.f32 %v2099, %v2107
        %v2112 = vadd.f32 %v2071, %v2110
        %v2113 = vadd.f32 %v2072, %v2111
        %2114 = vrot.lane.b32.xlu0 %v1703, 32
        %v2115 = vpop.permute.xlu0 %2114
        %2116 = vrot.lane.b32.xlu0 %v1704, 32
        %v2117 = vpop.permute.xlu0 %2116
        %v2118 = vsel %vm1171, %v2115, %v2117
        %v2119 = vsel %vm1171, %v2117, %v2115
        %v2120 = vsel %vm1176, %v2119, 0.0
        %v2121 = vsel %vm1177, %v2118, 0.0
        %s2122 = sld [smem:[#allocation16 + $0x14]]
        %v2123 = vstv %s2122
        %v2124 = vmul.f32 %v2123, %v2120
        %v2125 = vmul.f32 %v2123, %v2121
        %s2126 = sld [smem:[#allocation16 + $0x15]]
        %v2127 = vstv %s2126
        %v2128 = vmul.f32 %v2127, %v2120
        %v2129 = vmul.f32 %v2127, %v2121
        %v2132 = vrot.slane %v2128, 1
        %v2133 = vrot.slane %v2129, 1
        %v2136 = vadd.f32 %v2124, %v2132
        %v2137 = vadd.f32 %v2125, %v2133
        %v2138 = vadd.f32 %v2112, %v2136
        %v2139 = vadd.f32 %v2113, %v2137
        %2140 = vrot.lane.b32.xlu0 %v1703, 31
        %v2141 = vpop.permute.xlu0 %2140
        %2142 = vrot.lane.b32.xlu0 %v1704, 31
        %v2143 = vpop.permute.xlu0 %2142
        %vm2144 = vcmp.lt.s32.totalorder %v662, 31
        %v2145 = vsel %vm2144, %v2141, %v2143
        %v2146 = vsel %vm2144, %v2143, %v2141
        %vm2147 = vmand %vm1137, %vm945
        %vm2148 = vmand %vm1138, %vm946
        %v2149 = vsel %vm2147, 1, 0
        %v2150 = vsel %vm2148, 1, 0
        %v2151 = vlaneseq
        %v2152 = vshrl.u32 %v2151, 7
        %v2153 = vsub.s32 0, %v2152
        %v2154 = vrot.slane %v2149, %v2153
        %v2155 = vlaneseq
        %v2156 = vshrl.u32 %v2155, 7
        %v2157 = vsub.s32 0, %v2156
        %v2158 = vrot.slane %v2150, %v2157
        %vm2159 = vcmp.eq.s32.totalorder %v2154, 1
        %vm2160 = vcmp.eq.s32.totalorder %v2158, 1
        %v2161 = vsel %vm2159, %v2146, 0.0
        %v2162 = vsel %vm2160, %v2145, 0.0
        %s2163 = sld [smem:[#allocation16 + $0x16]]
        %v2164 = vstv %s2163
        %v2165 = vmul.f32 %v2164, %v2161
        %v2166 = vmul.f32 %v2164, %v2162
        %s2167 = sld [smem:[#allocation16 + $0x17]]
        %v2168 = vstv %s2167
        %v2169 = vmul.f32 %v2168, %v2161
        %v2170 = vmul.f32 %v2168, %v2162
        %v2173 = vrot.slane %v2169, 1
        %v2174 = vrot.slane %v2170, 1
        %v2177 = vadd.f32 %v2165, %v2173
        %v2178 = vadd.f32 %v2166, %v2174
        %v2179 = vadd.f32 %v2138, %v2177
        %v2180 = vadd.f32 %v2139, %v2178
        %2181 = vrot.lane.b32.xlu0 %v1703, 30
        %v2182 = vpop.permute.xlu0 %2181
        %2183 = vrot.lane.b32.xlu0 %v1704, 30
        %v2184 = vpop.permute.xlu0 %2183
        %v2185 = vsel %vm1184, %v2182, %v2184
        %v2186 = vsel %vm1184, %v2184, %v2182
        %v2187 = vsel %vm1211, %v2186, 0.0
        %v2188 = vsel %vm1212, %v2185, 0.0
        %s2189 = sld [smem:[#allocation16 + $0x18]]
        %v2190 = vstv %s2189
        %v2191 = vmul.f32 %v2190, %v2187
        %v2192 = vmul.f32 %v2190, %v2188
        %s2193 = sld [smem:[#allocation16 + $0x19]]
        %v2194 = vstv %s2193
        %v2195 = vmul.f32 %v2194, %v2187
        %v2196 = vmul.f32 %v2194, %v2188
        %v2199 = vrot.slane %v2195, 1
        %v2200 = vrot.slane %v2196, 1
        %v2203 = vadd.f32 %v2191, %v2199
        %v2204 = vadd.f32 %v2192, %v2200
        %v2205 = vadd.f32 %v2179, %v2203
        %v2206 = vadd.f32 %v2180, %v2204
        %2207 = vrot.lane.b32.xlu0 %v1703, 29
        %v2208 = vpop.permute.xlu0 %2207
        %2209 = vrot.lane.b32.xlu0 %v1704, 29
        %v2210 = vpop.permute.xlu0 %2209
        %vm2211 = vcmp.lt.s32.totalorder %v662, 29
        %v2212 = vsel %vm2211, %v2208, %v2210
        %v2213 = vsel %vm2211, %v2210, %v2208
        %vm2214 = vmand %vm1137, %vm1970
        %vm2215 = vmand %vm1138, %vm1971
        %v2216 = vsel %vm2214, 1, 0
        %v2217 = vsel %vm2215, 1, 0
        %v2218 = vlaneseq
        %v2219 = vshrl.u32 %v2218, 7
        %v2220 = vsub.s32 0, %v2219
        %v2221 = vrot.slane %v2216, %v2220
        %v2222 = vlaneseq
        %v2223 = vshrl.u32 %v2222, 7
        %v2224 = vsub.s32 0, %v2223
        %v2225 = vrot.slane %v2217, %v2224
        %vm2226 = vcmp.eq.s32.totalorder %v2221, 1
        %vm2227 = vcmp.eq.s32.totalorder %v2225, 1
        %v2228 = vsel %vm2226, %v2213, 0.0
        %v2229 = vsel %vm2227, %v2212, 0.0
        %s2230 = sld [smem:[#allocation16 + $0x1a]]
        %v2231 = vstv %s2230
        %v2232 = vmul.f32 %v2231, %v2228
        %v2233 = vmul.f32 %v2231, %v2229
        %s2234 = sld [smem:[#allocation16 + $0x1b]]
        %v2235 = vstv %s2234
        %v2236 = vmul.f32 %v2235, %v2228
        %v2237 = vmul.f32 %v2235, %v2229
        %v2240 = vrot.slane %v2236, 1
        %v2241 = vrot.slane %v2237, 1
        %v2244 = vadd.f32 %v2232, %v2240
        %v2245 = vadd.f32 %v2233, %v2241
        %v2246 = vadd.f32 %v2205, %v2244
        %v2247 = vadd.f32 %v2206, %v2245
        %2248 = vrot.lane.b32.xlu0 %v1703, 19
        %v2249 = vpop.permute.xlu0 %2248
        %2250 = vrot.lane.b32.xlu0 %v1704, 19
        %v2251 = vpop.permute.xlu0 %2250
        %vm2252 = vcmp.lt.s32.totalorder %v662, 19
        %v2253 = vsel %vm2252, %v2249, %v2251
        %v2254 = vsel %vm2252, %v2251, %v2249
        %vm2255 = vmand %vm885, %vm1724
        %vm2256 = vmand %vm886, %vm1725
        %v2257 = vsel %vm2255, 1, 0
        %v2258 = vsel %vm2256, 1, 0
        %v2259 = vlaneseq
        %v2260 = vshrl.u32 %v2259, 7
        %v2261 = vsub.s32 0, %v2260
        %v2262 = vrot.slane %v2257, %v2261
        %v2263 = vlaneseq
        %v2264 = vshrl.u32 %v2263, 7
        %v2265 = vsub.s32 0, %v2264
        %v2266 = vrot.slane %v2258, %v2265
        %vm2267 = vcmp.eq.s32.totalorder %v2262, 1
        %vm2268 = vcmp.eq.s32.totalorder %v2266, 1
        %v2269 = vsel %vm2267, %v2254, 0.0
        %v2270 = vsel %vm2268, %v2253, 0.0
        %s2271 = sld [smem:[#allocation16 + $0x1c]]
        %v2272 = vstv %s2271
        %v2273 = vmul.f32 %v2272, %v2269
        %v2274 = vmul.f32 %v2272, %v2270
        %s2275 = sld [smem:[#allocation16 + $0x1d]]
        %v2276 = vstv %s2275
        %v2277 = vmul.f32 %v2276, %v2269
        %v2278 = vmul.f32 %v2276, %v2270
        %v2281 = vrot.slane %v2277, 1
        %v2282 = vrot.slane %v2278, 1
        %v2285 = vadd.f32 %v2273, %v2281
        %v2286 = vadd.f32 %v2274, %v2282
        %v2287 = vadd.f32 %v2246, %v2285
        %v2288 = vadd.f32 %v2247, %v2286
        %2289 = vrot.lane.b32.xlu0 %v1703, 18
        %v2290 = vpop.permute.xlu0 %2289
        %2291 = vrot.lane.b32.xlu0 %v1704, 18
        %v2292 = vpop.permute.xlu0 %2291
        %vm2293 = vcmp.lt.s32.totalorder %v662, 18
        %v2294 = vsel %vm2293, %v2290, %v2292
        %v2295 = vsel %vm2293, %v2292, %v2290
        %vm2296 = vmand %vm885, %vm1149
        %vm2297 = vmand %vm886, %vm1150
        %v2298 = vsel %vm2296, 1, 0
        %v2299 = vsel %vm2297, 1, 0
        %v2300 = vlaneseq
        %v2301 = vshrl.u32 %v2300, 7
        %v2302 = vsub.s32 0, %v2301
        %v2303 = vrot.slane %v2298, %v2302
        %v2304 = vlaneseq
        %v2305 = vshrl.u32 %v2304, 7
        %v2306 = vsub.s32 0, %v2305
        %v2307 = vrot.slane %v2299, %v2306
        %vm2308 = vcmp.eq.s32.totalorder %v2303, 1
        %vm2309 = vcmp.eq.s32.totalorder %v2307, 1
        %v2310 = vsel %vm2308, %v2295, 0.0
        %v2311 = vsel %vm2309, %v2294, 0.0
        %s2312 = sld [smem:[#allocation16 + $0x1e]]
        %v2313 = vstv %s2312
        %v2314 = vmul.f32 %v2313, %v2310
        %v2315 = vmul.f32 %v2313, %v2311
        %s2316 = sld [smem:[#allocation16 + $0x1f]]
        %v2317 = vstv %s2316
        %v2318 = vmul.f32 %v2317, %v2310
        %v2319 = vmul.f32 %v2317, %v2311
        %v2322 = vrot.slane %v2318, 1
        %v2323 = vrot.slane %v2319, 1
        %v2326 = vadd.f32 %v2314, %v2322
        %v2327 = vadd.f32 %v2315, %v2323
        %v2328 = vadd.f32 %v2287, %v2326
        %v2329 = vadd.f32 %v2288, %v2327
        %2330 = vrot.lane.b32.xlu0 %v1703, 17
        %v2331 = vpop.permute.xlu0 %2330
        %2332 = vrot.lane.b32.xlu0 %v1704, 17
        %v2333 = vpop.permute.xlu0 %2332
        %v2334 = vsel %vm882, %v2331, %v2333
        %v2335 = vsel %vm882, %v2333, %v2331
        %v2336 = vsel %vm911, %v2335, 0.0
        %v2337 = vsel %vm912, %v2334, 0.0
        %s2338 = sld [smem:[#allocation16 + $0x20]]
        %v2339 = vstv %s2338
        %v2340 = vmul.f32 %v2339, %v2336
        %v2341 = vmul.f32 %v2339, %v2337
        %s2342 = sld [smem:[#allocation16 + $0x21]]
        %v2343 = vstv %s2342
        %v2344 = vmul.f32 %v2343, %v2336
        %v2345 = vmul.f32 %v2343, %v2337
        %v2348 = vrot.slane %v2344, 1
        %v2349 = vrot.slane %v2345, 1
        %v2352 = vadd.f32 %v2340, %v2348
        %v2353 = vadd.f32 %v2341, %v2349
        %v2354 = vadd.f32 %v2328, %v2352
        %v2355 = vadd.f32 %v2329, %v2353
        %2356 = vrot.lane.b32.xlu0 %v1703, 16
        %v2357 = vpop.permute.xlu0 %2356
        %2358 = vrot.lane.b32.xlu0 %v1704, 16
        %v2359 = vpop.permute.xlu0 %2358
        %v2360 = vsel %vm919, %v2357, %v2359
        %v2361 = vsel %vm919, %v2359, %v2357
        %v2362 = vsel %vm924, %v2361, 0.0
        %v2363 = vsel %vm925, %v2360, 0.0
        %s2364 = sld [smem:[#allocation16 + $0x22]]
        %v2365 = vstv %s2364
        %v2366 = vmul.f32 %v2365, %v2362
        %v2367 = vmul.f32 %v2365, %v2363
        %s2368 = sld [smem:[#allocation16 + $0x23]]
        %v2369 = vstv %s2368
        %v2370 = vmul.f32 %v2369, %v2362
        %v2371 = vmul.f32 %v2369, %v2363
        %v2374 = vrot.slane %v2370, 1
        %v2375 = vrot.slane %v2371, 1
        %v2378 = vadd.f32 %v2366, %v2374
        %v2379 = vadd.f32 %v2367, %v2375
        %v2380 = vadd.f32 %v2354, %v2378
        %v2381 = vadd.f32 %v2355, %v2379
        %2382 = vrot.lane.b32.xlu0 %v1703, 15
        %v2383 = vpop.permute.xlu0 %2382
        %2384 = vrot.lane.b32.xlu0 %v1704, 15
        %v2385 = vpop.permute.xlu0 %2384
        %v2386 = vsel %vm932, %v2383, %v2385
        %v2387 = vsel %vm932, %v2385, %v2383
        %v2388 = vsel %vm959, %v2387, 0.0
        %v2389 = vsel %vm960, %v2386, 0.0
        %s2390 = sld [smem:[#allocation16 + $0x24]]
        %v2391 = vstv %s2390
        %v2392 = vmul.f32 %v2391, %v2388
        %v2393 = vmul.f32 %v2391, %v2389
        %s2394 = sld [smem:[#allocation16 + $0x25]]
        %v2395 = vstv %s2394
        %v2396 = vmul.f32 %v2395, %v2388
        %v2397 = vmul.f32 %v2395, %v2389
        %v2400 = vrot.slane %v2396, 1
        %v2401 = vrot.slane %v2397, 1
        %v2404 = vadd.f32 %v2392, %v2400
        %v2405 = vadd.f32 %v2393, %v2401
        %v2406 = vadd.f32 %v2380, %v2404
        %v2407 = vadd.f32 %v2381, %v2405
        %2408 = vrot.lane.b32.xlu0 %v1703, 14
        %v2409 = vpop.permute.xlu0 %2408
        %2410 = vrot.lane.b32.xlu0 %v1704, 14
        %v2411 = vpop.permute.xlu0 %2410
        %vm2412 = vcmp.lt.s32.totalorder %v662, 14
        %v2413 = vsel %vm2412, %v2409, %v2411
        %v2414 = vsel %vm2412, %v2411, %v2409
        %vm2415 = vmand %vm885, %vm1197
        %vm2416 = vmand %vm886, %vm1198
        %v2417 = vsel %vm2415, 1, 0
        %v2418 = vsel %vm2416, 1, 0
        %v2419 = vlaneseq
        %v2420 = vshrl.u32 %v2419, 7
        %v2421 = vsub.s32 0, %v2420
        %v2422 = vrot.slane %v2417, %v2421
        %v2423 = vlaneseq
        %v2424 = vshrl.u32 %v2423, 7
        %v2425 = vsub.s32 0, %v2424
        %v2426 = vrot.slane %v2418, %v2425
        %vm2427 = vcmp.eq.s32.totalorder %v2422, 1
        %vm2428 = vcmp.eq.s32.totalorder %v2426, 1
        %v2429 = vsel %vm2427, %v2414, 0.0
        %v2430 = vsel %vm2428, %v2413, 0.0
        %s2431 = sld [smem:[#allocation16 + $0x26]]
        %v2432 = vstv %s2431
        %v2433 = vmul.f32 %v2432, %v2429
        %v2434 = vmul.f32 %v2432, %v2430
        %s2435 = sld [smem:[#allocation16 + $0x27]]
        %v2436 = vstv %s2435
        %v2437 = vmul.f32 %v2436, %v2429
        %v2438 = vmul.f32 %v2436, %v2430
        %v2441 = vrot.slane %v2437, 1
        %v2442 = vrot.slane %v2438, 1
        %v2445 = vadd.f32 %v2433, %v2441
        %v2446 = vadd.f32 %v2434, %v2442
        %v2447 = vadd.f32 %v2406, %v2445
        %v2448 = vadd.f32 %v2407, %v2446
        %2449 = vrot.lane.b32.xlu0 %v1703, 13
        %v2450 = vpop.permute.xlu0 %2449
        %2451 = vrot.lane.b32.xlu0 %v1704, 13
        %v2452 = vpop.permute.xlu0 %2451
        %vm2453 = vcmp.lt.s32.totalorder %v662, 13
        %v2454 = vsel %vm2453, %v2450, %v2452
        %v2455 = vsel %vm2453, %v2452, %v2450
        %vm2456 = vmand %vm885, %vm1970
        %vm2457 = vmand %vm886, %vm1971
        %v2458 = vsel %vm2456, 1, 0
        %v2459 = vsel %vm2457, 1, 0
        %v2460 = vlaneseq
        %v2461 = vshrl.u32 %v2460, 7
        %v2462 = vsub.s32 0, %v2461
        %v2463 = vrot.slane %v2458, %v2462
        %v2464 = vlaneseq
        %v2465 = vshrl.u32 %v2464, 7
        %v2466 = vsub.s32 0, %v2465
        %v2467 = vrot.slane %v2459, %v2466
        %vm2468 = vcmp.eq.s32.totalorder %v2463, 1
        %vm2469 = vcmp.eq.s32.totalorder %v2467, 1
        %v2470 = vsel %vm2468, %v2455, 0.0
        %v2471 = vsel %vm2469, %v2454, 0.0
        %s2472 = sld [smem:[#allocation16 + $0x28]]
        %v2473 = vstv %s2472
        %v2474 = vmul.f32 %v2473, %v2470
        %v2475 = vmul.f32 %v2473, %v2471
        %s2476 = sld [smem:[#allocation16 + $0x29]]
        %v2477 = vstv %s2476
        %v2478 = vmul.f32 %v2477, %v2470
        %v2479 = vmul.f32 %v2477, %v2471
        %v2482 = vrot.slane %v2478, 1
        %v2483 = vrot.slane %v2479, 1
        %v2486 = vadd.f32 %v2474, %v2482
        %v2487 = vadd.f32 %v2475, %v2483
        %v2488 = vadd.f32 %v2447, %v2486
        %v2489 = vadd.f32 %v2448, %v2487
        %2490 = vrot.lane.b32.xlu0 %v1703, 3
        %v2491 = vpop.permute.xlu0 %2490
        %2492 = vrot.lane.b32.xlu0 %v1704, 3
        %v2493 = vpop.permute.xlu0 %2492
        %vm2494 = vcmp.lt.s32.totalorder %v662, 3
        %v2495 = vsel %vm2494, %v2491, %v2493
        %v2496 = vsel %vm2494, %v2493, %v2491
        %vm2497 = vcmp.eq.s32.totalorder %v1719, 1
        %vm2498 = vcmp.eq.s32.totalorder %v1723, 1
        %v2499 = vsel %vm2497, %v2496, 0.0
        %v2500 = vsel %vm2498, %v2495, 0.0
        %s2501 = sld [smem:[#allocation16 + $0x2a]]
        %v2502 = vstv %s2501
        %v2503 = vmul.f32 %v2502, %v2499
        %v2504 = vmul.f32 %v2502, %v2500
        %s2505 = sld [smem:[#allocation16 + $0x2b]]
        %v2506 = vstv %s2505
        %v2507 = vmul.f32 %v2506, %v2499
        %v2508 = vmul.f32 %v2506, %v2500
        %v2511 = vrot.slane %v2507, 1
        %v2512 = vrot.slane %v2508, 1
        %v2515 = vadd.f32 %v2503, %v2511
        %v2516 = vadd.f32 %v2504, %v2512
        %v2517 = vadd.f32 %v2488, %v2515
        %v2518 = vadd.f32 %v2489, %v2516
        %2519 = vrot.lane.b32.xlu0 %v1703, 2
        %v2520 = vpop.permute.xlu0 %2519
        %2521 = vrot.lane.b32.xlu0 %v1704, 2
        %v2522 = vpop.permute.xlu0 %2521
        %v2523 = vsel %vm1219, %v2520, %v2522
        %v2524 = vsel %vm1219, %v2522, %v2520
        %v2525 = vsel %vm1222, %v2524, 0.0
        %v2526 = vsel %vm1223, %v2523, 0.0
        %s2527 = sld [smem:[#allocation16 + $0x2c]]
        %v2528 = vstv %s2527
        %v2529 = vmul.f32 %v2528, %v2525
        %v2530 = vmul.f32 %v2528, %v2526
        %s2531 = sld [smem:[#allocation16 + $0x2d]]
        %v2532 = vstv %s2531
        %v2533 = vmul.f32 %v2532, %v2525
        %v2534 = vmul.f32 %v2532, %v2526
        %v2537 = vrot.slane %v2533, 1
        %v2538 = vrot.slane %v2534, 1
        %v2541 = vadd.f32 %v2529, %v2537
        %v2542 = vadd.f32 %v2530, %v2538
        %v2543 = vadd.f32 %v2517, %v2541
        %v2544 = vadd.f32 %v2518, %v2542
        %2545 = vrot.lane.b32.xlu0 %v1703, 1
        %v2546 = vpop.permute.xlu0 %2545
        %2547 = vrot.lane.b32.xlu0 %v1704, 1
        %v2548 = vpop.permute.xlu0 %2547
        %v2549 = vsel %vm967, %v2546, %v2548
        %v2550 = vsel %vm967, %v2548, %v2546
        %v2551 = vsel %vm970, %v2550, 0.0
        %v2552 = vsel %vm971, %v2549, 0.0
        %s2553 = sld [smem:[#allocation16 + $0x2e]]
        %v2554 = vstv %s2553
        %v2555 = vmul.f32 %v2554, %v2551
        %v2556 = vmul.f32 %v2554, %v2552
        %s2557 = sld [smem:[#allocation16 + $0x2f]]
        %v2558 = vstv %s2557
        %v2559 = vmul.f32 %v2558, %v2551
        %v2560 = vmul.f32 %v2558, %v2552
        %v2563 = vrot.slane %v2559, 1
        %v2564 = vrot.slane %v2560, 1
        %v2567 = vadd.f32 %v2555, %v2563
        %v2568 = vadd.f32 %v2556, %v2564
        %v2569 = vadd.f32 %v2543, %v2567
        %v2570 = vadd.f32 %v2544, %v2568
        %s2571 = sld [smem:[#allocation16 + $0x30]]
        %v2572 = vstv %s2571
        %v2573 = vmul.f32 %v2572, %v1703
        %v2574 = vmul.f32 %v2572, %v1704
        %s2575 = sld [smem:[#allocation16 + $0x31]]
        %v2576 = vstv %s2575
        %v2577 = vmul.f32 %v2576, %v1703
        %v2578 = vmul.f32 %v2576, %v1704
        %v2581 = vrot.slane %v2577, 1
        %v2582 = vrot.slane %v2578, 1
        %v2585 = vadd.f32 %v2573, %v2581
        %v2586 = vadd.f32 %v2574, %v2582
        %v2587 = vadd.f32 %v2569, %v2585
        %v2588 = vadd.f32 %v2570, %v2586
        %2589 = vrot.lane.b32.xlu0 %v1703, 127
        %v2590 = vpop.permute.xlu0 %2589
        %2591 = vrot.lane.b32.xlu0 %v1704, 127
        %v2592 = vpop.permute.xlu0 %2591
        %v2593 = vsel %vm978, %v2590, %v2592
        %v2594 = vsel %vm978, %v2592, %v2590
        %v2595 = vsel %vm981, %v2593, 0.0
        %v2596 = vsel %vm982, %v2594, 0.0
        %s2597 = sld [smem:[#allocation16 + $0x32]]
        %v2598 = vstv %s2597
        %v2599 = vmul.f32 %v2598, %v2595
        %v2600 = vmul.f32 %v2598, %v2596
        %s2601 = sld [smem:[#allocation16 + $0x33]]
        %v2602 = vstv %s2601
        %v2603 = vmul.f32 %v2602, %v2595
        %v2604 = vmul.f32 %v2602, %v2596
        %v2607 = vrot.slane %v2603, 1
        %v2608 = vrot.slane %v2604, 1
        %v2611 = vadd.f32 %v2599, %v2607
        %v2612 = vadd.f32 %v2600, %v2608
        %v2613 = vadd.f32 %v2587, %v2611
        %v2614 = vadd.f32 %v2588, %v2612
        %2615 = vrot.lane.b32.xlu0 %v1703, 126
        %v2616 = vpop.permute.xlu0 %2615
        %2617 = vrot.lane.b32.xlu0 %v1704, 126
        %v2618 = vpop.permute.xlu0 %2617
        %v2619 = vsel %vm1230, %v2616, %v2618
        %v2620 = vsel %vm1230, %v2618, %v2616
        %v2621 = vsel %vm1233, %v2619, 0.0
        %v2622 = vsel %vm1234, %v2620, 0.0
        %s2623 = sld [smem:[#allocation16 + $0x34]]
        %v2624 = vstv %s2623
        %v2625 = vmul.f32 %v2624, %v2621
        %v2626 = vmul.f32 %v2624, %v2622
        %s2627 = sld [smem:[#allocation16 + $0x35]]
        %v2628 = vstv %s2627
        %v2629 = vmul.f32 %v2628, %v2621
        %v2630 = vmul.f32 %v2628, %v2622
        %v2633 = vrot.slane %v2629, 1
        %v2634 = vrot.slane %v2630, 1
        %v2637 = vadd.f32 %v2625, %v2633
        %v2638 = vadd.f32 %v2626, %v2634
        %v2639 = vadd.f32 %v2613, %v2637
        %v2640 = vadd.f32 %v2614, %v2638
        %2641 = vrot.lane.b32.xlu0 %v1703, 125
        %v2642 = vpop.permute.xlu0 %2641
        %2643 = vrot.lane.b32.xlu0 %v1704, 125
        %v2644 = vpop.permute.xlu0 %2643
        %vm2645 = vcmp.lt.s32.totalorder %v662, 125
        %v2646 = vsel %vm2645, %v2642, %v2644
        %v2647 = vsel %vm2645, %v2644, %v2642
        %vm2648 = vcmp.eq.s32.totalorder %v1965, 1
        %vm2649 = vcmp.eq.s32.totalorder %v1969, 1
        %v2650 = vsel %vm2648, %v2646, 0.0
        %v2651 = vsel %vm2649, %v2647, 0.0
        %s2652 = sld [smem:[#allocation16 + $0x36]]
        %v2653 = vstv %s2652
        %v2654 = vmul.f32 %v2653, %v2650
        %v2655 = vmul.f32 %v2653, %v2651
        %s2656 = sld [smem:[#allocation16 + $0x37]]
        %v2657 = vstv %s2656
        %v2658 = vmul.f32 %v2657, %v2650
        %v2659 = vmul.f32 %v2657, %v2651
        %v2662 = vrot.slane %v2658, 1
        %v2663 = vrot.slane %v2659, 1
        %v2666 = vadd.f32 %v2654, %v2662
        %v2667 = vadd.f32 %v2655, %v2663
        %v2668 = vadd.f32 %v2639, %v2666
        %v2669 = vadd.f32 %v2640, %v2667
        %2670 = vrot.lane.b32.xlu0 %v1703, 115
        %v2671 = vpop.permute.xlu0 %2670
        %2672 = vrot.lane.b32.xlu0 %v1704, 115
        %v2673 = vpop.permute.xlu0 %2672
        %vm2674 = vcmp.lt.s32.totalorder %v662, 115
        %v2675 = vsel %vm2674, %v2671, %v2673
        %v2676 = vsel %vm2674, %v2673, %v2671
        %vm2677 = vmand %vm992, %vm1724
        %vm2678 = vmand %vm993, %vm1725
        %v2679 = vsel %vm2677, 1, 0
        %v2680 = vsel %vm2678, 1, 0
        %v2681 = vlaneseq
        %v2682 = vshrl.u32 %v2681, 7
        %v2683 = vsub.s32 0, %v2682
        %v2684 = vrot.slane %v2679, %v2683
        %v2685 = vlaneseq
        %v2686 = vshrl.u32 %v2685, 7
        %v2687 = vsub.s32 0, %v2686
        %v2688 = vrot.slane %v2680, %v2687
        %vm2689 = vcmp.eq.s32.totalorder %v2684, 1
        %vm2690 = vcmp.eq.s32.totalorder %v2688, 1
        %v2691 = vsel %vm2689, %v2675, 0.0
        %v2692 = vsel %vm2690, %v2676, 0.0
        %s2693 = sld [smem:[#allocation16 + $0x38]]
        %v2694 = vstv %s2693
        %v2695 = vmul.f32 %v2694, %v2691
        %v2696 = vmul.f32 %v2694, %v2692
        %s2697 = sld [smem:[#allocation16 + $0x39]]
        %v2698 = vstv %s2697
        %v2699 = vmul.f32 %v2698, %v2691
        %v2700 = vmul.f32 %v2698, %v2692
        %v2703 = vrot.slane %v2699, 1
        %v2704 = vrot.slane %v2700, 1
        %v2707 = vadd.f32 %v2695, %v2703
        %v2708 = vadd.f32 %v2696, %v2704
        %v2709 = vadd.f32 %v2668, %v2707
        %v2710 = vadd.f32 %v2669, %v2708
        %2711 = vrot.lane.b32.xlu0 %v1703, 114
        %v2712 = vpop.permute.xlu0 %2711
        %2713 = vrot.lane.b32.xlu0 %v1704, 114
        %v2714 = vpop.permute.xlu0 %2713
        %vm2715 = vcmp.lt.s32.totalorder %v662, 114
        %v2716 = vsel %vm2715, %v2712, %v2714
        %v2717 = vsel %vm2715, %v2714, %v2712
        %vm2718 = vmand %vm992, %vm1149
        %vm2719 = vmand %vm993, %vm1150
        %v2720 = vsel %vm2718, 1, 0
        %v2721 = vsel %vm2719, 1, 0
        %v2722 = vlaneseq
        %v2723 = vshrl.u32 %v2722, 7
        %v2724 = vsub.s32 0, %v2723
        %v2725 = vrot.slane %v2720, %v2724
        %v2726 = vlaneseq
        %v2727 = vshrl.u32 %v2726, 7
        %v2728 = vsub.s32 0, %v2727
        %v2729 = vrot.slane %v2721, %v2728
        %vm2730 = vcmp.eq.s32.totalorder %v2725, 1
        %vm2731 = vcmp.eq.s32.totalorder %v2729, 1
        %v2732 = vsel %vm2730, %v2716, 0.0
        %v2733 = vsel %vm2731, %v2717, 0.0
        %s2734 = sld [smem:[#allocation16 + $0x3a]]
        %v2735 = vstv %s2734
        %v2736 = vmul.f32 %v2735, %v2732
        %v2737 = vmul.f32 %v2735, %v2733
        %s2738 = sld [smem:[#allocation16 + $0x3b]]
        %v2739 = vstv %s2738
        %v2740 = vmul.f32 %v2739, %v2732
        %v2741 = vmul.f32 %v2739, %v2733
        %v2744 = vrot.slane %v2740, 1
        %v2745 = vrot.slane %v2741, 1
        %v2748 = vadd.f32 %v2736, %v2744
        %v2749 = vadd.f32 %v2737, %v2745
        %v2750 = vadd.f32 %v2709, %v2748
        %v2751 = vadd.f32 %v2710, %v2749
        %2752 = vrot.lane.b32.xlu0 %v1703, 113
        %v2753 = vpop.permute.xlu0 %2752
        %2754 = vrot.lane.b32.xlu0 %v1704, 113
        %v2755 = vpop.permute.xlu0 %2754
        %v2756 = vsel %vm989, %v2753, %v2755
        %v2757 = vsel %vm989, %v2755, %v2753
        %v2758 = vsel %vm1006, %v2756, 0.0
        %v2759 = vsel %vm1007, %v2757, 0.0
        %s2760 = sld [smem:[#allocation16 + $0x3c]]
        %v2761 = vstv %s2760
        %v2762 = vmul.f32 %v2761, %v2758
        %v2763 = vmul.f32 %v2761, %v2759
        %s2764 = sld [smem:[#allocation16 + $0x3d]]
        %v2765 = vstv %s2764
        %v2766 = vmul.f32 %v2765, %v2758
        %v2767 = vmul.f32 %v2765, %v2759
        %v2770 = vrot.slane %v2766, 1
        %v2771 = vrot.slane %v2767, 1
        %v2774 = vadd.f32 %v2762, %v2770
        %v2775 = vadd.f32 %v2763, %v2771
        %v2776 = vadd.f32 %v2750, %v2774
        %v2777 = vadd.f32 %v2751, %v2775
        %2778 = vrot.lane.b32.xlu0 %v1703, 112
        %v2779 = vpop.permute.xlu0 %2778
        %2780 = vrot.lane.b32.xlu0 %v1704, 112
        %v2781 = vpop.permute.xlu0 %2780
        %v2782 = vsel %vm1014, %v2779, %v2781
        %v2783 = vsel %vm1014, %v2781, %v2779
        %v2784 = vsel %vm1019, %v2782, 0.0
        %v2785 = vsel %vm1020, %v2783, 0.0
        %s2786 = sld [smem:[#allocation16 + $0x3e]]
        %v2787 = vstv %s2786
        %v2788 = vmul.f32 %v2787, %v2784
        %v2789 = vmul.f32 %v2787, %v2785
        %s2790 = sld [smem:[#allocation16 + $0x3f]]
        %v2791 = vstv %s2790
        %v2792 = vmul.f32 %v2791, %v2784
        %v2793 = vmul.f32 %v2791, %v2785
        %v2796 = vrot.slane %v2792, 1
        %v2797 = vrot.slane %v2793, 1
        %v2800 = vadd.f32 %v2788, %v2796
        %v2801 = vadd.f32 %v2789, %v2797
        %v2802 = vadd.f32 %v2776, %v2800
        %v2803 = vadd.f32 %v2777, %v2801
        %2804 = vrot.lane.b32.xlu0 %v1703, 111
        %v2805 = vpop.permute.xlu0 %2804
        %2806 = vrot.lane.b32.xlu0 %v1704, 111
        %v2807 = vpop.permute.xlu0 %2806
        %v2808 = vsel %vm1027, %v2805, %v2807
        %v2809 = vsel %vm1027, %v2807, %v2805
        %v2810 = vsel %vm1042, %v2808, 0.0
        %v2811 = vsel %vm1043, %v2809, 0.0
        %s2812 = sld [smem:[#allocation16 + $0x40]]
        %v2813 = vstv %s2812
        %v2814 = vmul.f32 %v2813, %v2810
        %v2815 = vmul.f32 %v2813, %v2811
        %s2816 = sld [smem:[#allocation16 + $0x41]]
        %v2817 = vstv %s2816
        %v2818 = vmul.f32 %v2817, %v2810
        %v2819 = vmul.f32 %v2817, %v2811
        %v2822 = vrot.slane %v2818, 1
        %v2823 = vrot.slane %v2819, 1
        %v2826 = vadd.f32 %v2814, %v2822
        %v2827 = vadd.f32 %v2815, %v2823
        %v2828 = vadd.f32 %v2802, %v2826
        %v2829 = vadd.f32 %v2803, %v2827
        %2830 = vrot.lane.b32.xlu0 %v1703, 110
        %v2831 = vpop.permute.xlu0 %2830
        %2832 = vrot.lane.b32.xlu0 %v1704, 110
        %v2833 = vpop.permute.xlu0 %2832
        %vm2834 = vcmp.lt.s32.totalorder %v662, 110
        %v2835 = vsel %vm2834, %v2831, %v2833
        %v2836 = vsel %vm2834, %v2833, %v2831
        %vm2837 = vmand %vm992, %vm1197
        %vm2838 = vmand %vm993, %vm1198
        %v2839 = vsel %vm2837, 1, 0
        %v2840 = vsel %vm2838, 1, 0
        %v2841 = vlaneseq
        %v2842 = vshrl.u32 %v2841, 7
        %v2843 = vsub.s32 0, %v2842
        %v2844 = vrot.slane %v2839, %v2843
        %v2845 = vlaneseq
        %v2846 = vshrl.u32 %v2845, 7
        %v2847 = vsub.s32 0, %v2846
        %v2848 = vrot.slane %v2840, %v2847
        %vm2849 = vcmp.eq.s32.totalorder %v2844, 1
        %vm2850 = vcmp.eq.s32.totalorder %v2848, 1
        %v2851 = vsel %vm2849, %v2835, 0.0
        %v2852 = vsel %vm2850, %v2836, 0.0
        %s2853 = sld [smem:[#allocation16 + $0x42]]
        %v2854 = vstv %s2853
        %v2855 = vmul.f32 %v2854, %v2851
        %v2856 = vmul.f32 %v2854, %v2852
        %s2857 = sld [smem:[#allocation16 + $0x43]]
        %v2858 = vstv %s2857
        %v2859 = vmul.f32 %v2858, %v2851
        %v2860 = vmul.f32 %v2858, %v2852
        %v2863 = vrot.slane %v2859, 1
        %v2864 = vrot.slane %v2860, 1
        %v2867 = vadd.f32 %v2855, %v2863
        %v2868 = vadd.f32 %v2856, %v2864
        %v2869 = vadd.f32 %v2828, %v2867
        %v2870 = vadd.f32 %v2829, %v2868
        %2871 = vrot.lane.b32.xlu0 %v1703, 109
        %v2872 = vpop.permute.xlu0 %2871
        %2873 = vrot.lane.b32.xlu0 %v1704, 109
        %v2874 = vpop.permute.xlu0 %2873
        %vm2875 = vcmp.lt.s32.totalorder %v662, 109
        %v2876 = vsel %vm2875, %v2872, %v2874
        %v2877 = vsel %vm2875, %v2874, %v2872
        %vm2878 = vmand %vm992, %vm1970
        %vm2879 = vmand %vm993, %vm1971
        %v2880 = vsel %vm2878, 1, 0
        %v2881 = vsel %vm2879, 1, 0
        %v2882 = vlaneseq
        %v2883 = vshrl.u32 %v2882, 7
        %v2884 = vsub.s32 0, %v2883
        %v2885 = vrot.slane %v2880, %v2884
        %v2886 = vlaneseq
        %v2887 = vshrl.u32 %v2886, 7
        %v2888 = vsub.s32 0, %v2887
        %v2889 = vrot.slane %v2881, %v2888
        %vm2890 = vcmp.eq.s32.totalorder %v2885, 1
        %vm2891 = vcmp.eq.s32.totalorder %v2889, 1
        %v2892 = vsel %vm2890, %v2876, 0.0
        %v2893 = vsel %vm2891, %v2877, 0.0
        %s2894 = sld [smem:[#allocation16 + $0x44]]
        %v2895 = vstv %s2894
        %v2896 = vmul.f32 %v2895, %v2892
        %v2897 = vmul.f32 %v2895, %v2893
        %s2898 = sld [smem:[#allocation16 + $0x45]]
        %v2899 = vstv %s2898
        %v2900 = vmul.f32 %v2899, %v2892
        %v2901 = vmul.f32 %v2899, %v2893
        %v2904 = vrot.slane %v2900, 1
        %v2905 = vrot.slane %v2901, 1
        %v2908 = vadd.f32 %v2896, %v2904
        %v2909 = vadd.f32 %v2897, %v2905
        %v2910 = vadd.f32 %v2869, %v2908
        %v2911 = vadd.f32 %v2870, %v2909
        %2912 = vrot.lane.b32.xlu0 %v1703, 99
        %v2913 = vpop.permute.xlu0 %2912
        %2914 = vrot.lane.b32.xlu0 %v1704, 99
        %v2915 = vpop.permute.xlu0 %2914
        %vm2916 = vcmp.lt.s32.totalorder %v662, 99
        %v2917 = vsel %vm2916, %v2913, %v2915
        %v2918 = vsel %vm2916, %v2915, %v2913
        %vm2919 = vmand %vm1244, %vm1724
        %vm2920 = vmand %vm1245, %vm1725
        %v2921 = vsel %vm2919, 1, 0
        %v2922 = vsel %vm2920, 1, 0
        %v2923 = vlaneseq
        %v2924 = vshrl.u32 %v2923, 7
        %v2925 = vsub.s32 0, %v2924
        %v2926 = vrot.slane %v2921, %v2925
        %v2927 = vlaneseq
        %v2928 = vshrl.u32 %v2927, 7
        %v2929 = vsub.s32 0, %v2928
        %v2930 = vrot.slane %v2922, %v2929
        %vm2931 = vcmp.eq.s32.totalorder %v2926, 1
        %vm2932 = vcmp.eq.s32.totalorder %v2930, 1
        %v2933 = vsel %vm2931, %v2917, 0.0
        %v2934 = vsel %vm2932, %v2918, 0.0
        %s2935 = sld [smem:[#allocation16 + $0x46]]
        %v2936 = vstv %s2935
        %v2937 = vmul.f32 %v2936, %v2933
        %v2938 = vmul.f32 %v2936, %v2934
        %s2939 = sld [smem:[#allocation16 + $0x47]]
        %v2940 = vstv %s2939
        %v2941 = vmul.f32 %v2940, %v2933
        %v2942 = vmul.f32 %v2940, %v2934
        %v2945 = vrot.slane %v2941, 1
        %v2946 = vrot.slane %v2942, 1
        %v2949 = vadd.f32 %v2937, %v2945
        %v2950 = vadd.f32 %v2938, %v2946
        %v2951 = vadd.f32 %v2910, %v2949
        %v2952 = vadd.f32 %v2911, %v2950
        %2953 = vrot.lane.b32.xlu0 %v1703, 98
        %v2954 = vpop.permute.xlu0 %2953
        %2955 = vrot.lane.b32.xlu0 %v1704, 98
        %v2956 = vpop.permute.xlu0 %2955
        %v2957 = vsel %vm1241, %v2954, %v2956
        %v2958 = vsel %vm1241, %v2956, %v2954
        %v2959 = vsel %vm1258, %v2957, 0.0
        %v2960 = vsel %vm1259, %v2958, 0.0
        %s2961 = sld [smem:[#allocation16 + $0x48]]
        %v2962 = vstv %s2961
        %v2963 = vmul.f32 %v2962, %v2959
        %v2964 = vmul.f32 %v2962, %v2960
        %s2965 = sld [smem:[#allocation16 + $0x49]]
        %v2966 = vstv %s2965
        %v2967 = vmul.f32 %v2966, %v2959
        %v2968 = vmul.f32 %v2966, %v2960
        %v2971 = vrot.slane %v2967, 1
        %v2972 = vrot.slane %v2968, 1
        %v2975 = vadd.f32 %v2963, %v2971
        %v2976 = vadd.f32 %v2964, %v2972
        %v2977 = vadd.f32 %v2951, %v2975
        %v2978 = vadd.f32 %v2952, %v2976
        %2979 = vrot.lane.b32.xlu0 %v1703, 97
        %v2980 = vpop.permute.xlu0 %2979
        %2981 = vrot.lane.b32.xlu0 %v1704, 97
        %v2982 = vpop.permute.xlu0 %2981
        %vm2983 = vcmp.lt.s32.totalorder %v662, 97
        %v2984 = vsel %vm2983, %v2980, %v2982
        %v2985 = vsel %vm2983, %v2982, %v2980
        %vm2986 = vmand %vm1244, %vm897
        %vm2987 = vmand %vm1245, %vm898
        %v2988 = vsel %vm2986, 1, 0
        %v2989 = vsel %vm2987, 1, 0
        %v2990 = vlaneseq
        %v2991 = vshrl.u32 %v2990, 7
        %v2992 = vsub.s32 0, %v2991
        %v2993 = vrot.slane %v2988, %v2992
        %v2994 = vlaneseq
        %v2995 = vshrl.u32 %v2994, 7
        %v2996 = vsub.s32 0, %v2995
        %v2997 = vrot.slane %v2989, %v2996
        %vm2998 = vcmp.eq.s32.totalorder %v2993, 1
        %vm2999 = vcmp.eq.s32.totalorder %v2997, 1
        %v3000 = vsel %vm2998, %v2984, 0.0
        %v3001 = vsel %vm2999, %v2985, 0.0
        %s3002 = sld [smem:[#allocation16 + $0x4a]]
        %v3003 = vstv %s3002
        %v3004 = vmul.f32 %v3003, %v3000
        %v3005 = vmul.f32 %v3003, %v3001
        %s3006 = sld [smem:[#allocation16 + $0x4b]]
        %v3007 = vstv %s3006
        %v3008 = vmul.f32 %v3007, %v3000
        %v3009 = vmul.f32 %v3007, %v3001
        %v3012 = vrot.slane %v3008, 1
        %v3013 = vrot.slane %v3009, 1
        %v3016 = vadd.f32 %v3004, %v3012
        %v3017 = vadd.f32 %v3005, %v3013
        %v3018 = vadd.f32 %v2977, %v3016
        %v3019 = vadd.f32 %v2978, %v3017
        %3020 = vrot.lane.b32.xlu0 %v1703, 96
        %v3021 = vpop.permute.xlu0 %3020
        %3022 = vrot.lane.b32.xlu0 %v1704, 96
        %v3023 = vpop.permute.xlu0 %3022
        %v3024 = vsel %vm1266, %v3021, %v3023
        %v3025 = vsel %vm1266, %v3023, %v3021
        %v3026 = vsel %vm1271, %v3024, 0.0
        %v3027 = vsel %vm1272, %v3025, 0.0
        %s3028 = sld [smem:[#allocation16 + $0x4c]]
        %v3029 = vstv %s3028
        %v3030 = vmul.f32 %v3029, %v3026
        %v3031 = vmul.f32 %v3029, %v3027
        %s3032 = sld [smem:[#allocation16 + $0x4d]]
        %v3033 = vstv %s3032
        %v3034 = vmul.f32 %v3033, %v3026
        %v3035 = vmul.f32 %v3033, %v3027
        %v3038 = vrot.slane %v3034, 1
        %v3039 = vrot.slane %v3035, 1
        %v3042 = vadd.f32 %v3030, %v3038
        %v3043 = vadd.f32 %v3031, %v3039
        %v3044 = vadd.f32 %v3018, %v3042
        %v3045 = vadd.f32 %v3019, %v3043
        %3046 = vrot.lane.b32.xlu0 %v1703, 95
        %v3047 = vpop.permute.xlu0 %3046
        %3048 = vrot.lane.b32.xlu0 %v1704, 95
        %v3049 = vpop.permute.xlu0 %3048
        %vm3050 = vcmp.lt.s32.totalorder %v662, 95
        %v3051 = vsel %vm3050, %v3047, %v3049
        %v3052 = vsel %vm3050, %v3049, %v3047
        %vm3053 = vmand %vm1244, %vm945
        %vm3054 = vmand %vm1245, %vm946
        %v3055 = vsel %vm3053, 1, 0
        %v3056 = vsel %vm3054, 1, 0
        %v3057 = vlaneseq
        %v3058 = vshrl.u32 %v3057, 7
        %v3059 = vsub.s32 0, %v3058
        %v3060 = vrot.slane %v3055, %v3059
        %v3061 = vlaneseq
        %v3062 = vshrl.u32 %v3061, 7
        %v3063 = vsub.s32 0, %v3062
        %v3064 = vrot.slane %v3056, %v3063
        %vm3065 = vcmp.eq.s32.totalorder %v3060, 1
        %vm3066 = vcmp.eq.s32.totalorder %v3064, 1
        %v3067 = vsel %vm3065, %v3051, 0.0
        %v3068 = vsel %vm3066, %v3052, 0.0
        %s3069 = sld [smem:[#allocation16 + $0x4e]]
        %v3070 = vstv %s3069
        %v3071 = vmul.f32 %v3070, %v3067
        %v3072 = vmul.f32 %v3070, %v3068
        %s3073 = sld [smem:[#allocation16 + $0x4f]]
        %v3074 = vstv %s3073
        %v3075 = vmul.f32 %v3074, %v3067
        %v3076 = vmul.f32 %v3074, %v3068
        %v3079 = vrot.slane %v3075, 1
        %v3080 = vrot.slane %v3076, 1
        %v3083 = vadd.f32 %v3071, %v3079
        %v3084 = vadd.f32 %v3072, %v3080
        %v3085 = vadd.f32 %v3044, %v3083
        %v3086 = vadd.f32 %v3045, %v3084
        %3087 = vrot.lane.b32.xlu0 %v1703, 94
        %v3088 = vpop.permute.xlu0 %3087
        %3089 = vrot.lane.b32.xlu0 %v1704, 94
        %v3090 = vpop.permute.xlu0 %3089
        %v3091 = vsel %vm1279, %v3088, %v3090
        %v3092 = vsel %vm1279, %v3090, %v3088
        %v3093 = vsel %vm1294, %v3091, 0.0
        %v3094 = vsel %vm1295, %v3092, 0.0
        %s3095 = sld [smem:[#allocation16 + $0x50]]
        %v3096 = vstv %s3095
        %v3097 = vmul.f32 %v3096, %v3093
        %v3098 = vmul.f32 %v3096, %v3094
        %s3099 = sld [smem:[#allocation16 + $0x51]]
        %v3100 = vstv %s3099
        %v3101 = vmul.f32 %v3100, %v3093
        %v3102 = vmul.f32 %v3100, %v3094
        %v3105 = vrot.slane %v3101, 1
        %v3106 = vrot.slane %v3102, 1
        %v3109 = vadd.f32 %v3097, %v3105
        %v3110 = vadd.f32 %v3098, %v3106
        %v3111 = vadd.f32 %v3085, %v3109
        %v3112 = vadd.f32 %v3086, %v3110
        %3113 = vrot.lane.b32.xlu0 %v1703, 93
        %v3114 = vpop.permute.xlu0 %3113
        %3115 = vrot.lane.b32.xlu0 %v1704, 93
        %v3116 = vpop.permute.xlu0 %3115
        %vm3117 = vcmp.lt.s32.totalorder %v662, 93
        %v3118 = vsel %vm3117, %v3114, %v3116
        %v3119 = vsel %vm3117, %v3116, %v3114
        %vm3120 = vmand %vm1244, %vm1970
        %vm3121 = vmand %vm1245, %vm1971
        %v3122 = vsel %vm3120, 1, 0
        %v3123 = vsel %vm3121, 1, 0
        %v3124 = vlaneseq
        %v3125 = vshrl.u32 %v3124, 7
        %v3126 = vsub.s32 0, %v3125
        %v3127 = vrot.slane %v3122, %v3126
        %v3128 = vlaneseq
        %v3129 = vshrl.u32 %v3128, 7
        %v3130 = vsub.s32 0, %v3129
        %v3131 = vrot.slane %v3123, %v3130
        %vm3132 = vcmp.eq.s32.totalorder %v3127, 1
        %vm3133 = vcmp.eq.s32.totalorder %v3131, 1
        %v3134 = vsel %vm3132, %v3118, 0.0
        %v3135 = vsel %vm3133, %v3119, 0.0
        %s3136 = sld [smem:[#allocation16 + $0x52]]
        %v3137 = vstv %s3136
        %v3138 = vmul.f32 %v3137, %v3134
        %v3139 = vmul.f32 %v3137, %v3135
        %s3140 = sld [smem:[#allocation16 + $0x53]]
        %v3141 = vstv %s3140
        %v3142 = vmul.f32 %v3141, %v3134
        %v3143 = vmul.f32 %v3141, %v3135
        %v3146 = vrot.slane %v3142, 1
        %v3147 = vrot.slane %v3143, 1
        %v3150 = vadd.f32 %v3138, %v3146
        %v3151 = vadd.f32 %v3139, %v3147
        %v3152 = vadd.f32 %v3111, %v3150
        %v3153 = vadd.f32 %v3112, %v3151
        %3154 = vrot.lane.b32.xlu0 %v1703, 83
        %v3155 = vpop.permute.xlu0 %3154
        %3156 = vrot.lane.b32.xlu0 %v1704, 83
        %v3157 = vpop.permute.xlu0 %3156
        %vm3158 = vcmp.lt.s32.totalorder %v662, 83
        %v3159 = vsel %vm3158, %v3155, %v3157
        %v3160 = vsel %vm3158, %v3157, %v3155
        %vm3161 = vcmp.lt.s32.totalorder %v662, 208
        %vm3162 = vcmp.lt.s32.totalorder %v663, 208
        %vm3163 = vmand %vm3161, %vm1724
        %vm3164 = vmand %vm3162, %vm1725
        %v3165 = vsel %vm3163, 1, 0
        %v3166 = vsel %vm3164, 1, 0
        %v3167 = vlaneseq
        %v3168 = vshrl.u32 %v3167, 7
        %v3169 = vsub.s32 0, %v3168
        %v3170 = vrot.slane %v3165, %v3169
        %v3171 = vlaneseq
        %v3172 = vshrl.u32 %v3171, 7
        %v3173 = vsub.s32 0, %v3172
        %v3174 = vrot.slane %v3166, %v3173
        %vm3175 = vcmp.eq.s32.totalorder %v3170, 1
        %vm3176 = vcmp.eq.s32.totalorder %v3174, 1
        %v3177 = vsel %vm3175, %v3159, 0.0
        %v3178 = vsel %vm3176, %v3160, 0.0
        %s3179 = sld [smem:[#allocation16 + $0x54]]
        %v3180 = vstv %s3179
        %v3181 = vmul.f32 %v3180, %v3177
        %v3182 = vmul.f32 %v3180, %v3178
        %s3183 = sld [smem:[#allocation16 + $0x55]]
        %v3184 = vstv %s3183
        %v3185 = vmul.f32 %v3184, %v3177
        %v3186 = vmul.f32 %v3184, %v3178
        %v3189 = vrot.slane %v3185, 1
        %v3190 = vrot.slane %v3186, 1
        %v3193 = vadd.f32 %v3181, %v3189
        %v3194 = vadd.f32 %v3182, %v3190
        %v3195 = vadd.f32 %v3152, %v3193
        %v3196 = vadd.f32 %v3153, %v3194
        %3197 = vrot.lane.b32.xlu0 %v1703, 82
        %v3198 = vpop.permute.xlu0 %3197
        %3199 = vrot.lane.b32.xlu0 %v1704, 82
        %v3200 = vpop.permute.xlu0 %3199
        %vm3201 = vcmp.lt.s32.totalorder %v662, 82
        %v3202 = vsel %vm3201, %v3198, %v3200
        %v3203 = vsel %vm3201, %v3200, %v3198
        %vm3204 = vmand %vm3161, %vm1149
        %vm3205 = vmand %vm3162, %vm1150
        %v3206 = vsel %vm3204, 1, 0
        %v3207 = vsel %vm3205, 1, 0
        %v3208 = vlaneseq
        %v3209 = vshrl.u32 %v3208, 7
        %v3210 = vsub.s32 0, %v3209
        %v3211 = vrot.slane %v3206, %v3210
        %v3212 = vlaneseq
        %v3213 = vshrl.u32 %v3212, 7
        %v3214 = vsub.s32 0, %v3213
        %v3215 = vrot.slane %v3207, %v3214
        %vm3216 = vcmp.eq.s32.totalorder %v3211, 1
        %vm3217 = vcmp.eq.s32.totalorder %v3215, 1
        %v3218 = vsel %vm3216, %v3202, 0.0
        %v3219 = vsel %vm3217, %v3203, 0.0
        %s3220 = sld [smem:[#allocation16 + $0x56]]
        %v3221 = vstv %s3220
        %v3222 = vmul.f32 %v3221, %v3218
        %v3223 = vmul.f32 %v3221, %v3219
        %s3224 = sld [smem:[#allocation16 + $0x57]]
        %v3225 = vstv %s3224
        %v3226 = vmul.f32 %v3225, %v3218
        %v3227 = vmul.f32 %v3225, %v3219
        %v3230 = vrot.slane %v3226, 1
        %v3231 = vrot.slane %v3227, 1
        %v3234 = vadd.f32 %v3222, %v3230
        %v3235 = vadd.f32 %v3223, %v3231
        %v3236 = vadd.f32 %v3195, %v3234
        %v3237 = vadd.f32 %v3196, %v3235
        %3238 = vrot.lane.b32.xlu0 %v1703, 81
        %v3239 = vpop.permute.xlu0 %3238
        %3240 = vrot.lane.b32.xlu0 %v1704, 81
        %v3241 = vpop.permute.xlu0 %3240
        %vm3242 = vcmp.lt.s32.totalorder %v662, 81
        %v3243 = vsel %vm3242, %v3239, %v3241
        %v3244 = vsel %vm3242, %v3241, %v3239
        %vm3245 = vmand %vm3161, %vm897
        %vm3246 = vmand %vm3162, %vm898
        %v3247 = vsel %vm3245, 1, 0
        %v3248 = vsel %vm3246, 1, 0
        %v3249 = vlaneseq
        %v3250 = vshrl.u32 %v3249, 7
        %v3251 = vsub.s32 0, %v3250
        %v3252 = vrot.slane %v3247, %v3251
        %v3253 = vlaneseq
        %v3254 = vshrl.u32 %v3253, 7
        %v3255 = vsub.s32 0, %v3254
        %v3256 = vrot.slane %v3248, %v3255
        %vm3257 = vcmp.eq.s32.totalorder %v3252, 1
        %vm3258 = vcmp.eq.s32.totalorder %v3256, 1
        %v3259 = vsel %vm3257, %v3243, 0.0
        %v3260 = vsel %vm3258, %v3244, 0.0
        %s3261 = sld [smem:[#allocation16 + $0x58]]
        %v3262 = vstv %s3261
        %v3263 = vmul.f32 %v3262, %v3259
        %v3264 = vmul.f32 %v3262, %v3260
        %s3265 = sld [smem:[#allocation16 + $0x59]]
        %v3266 = vstv %s3265
        %v3267 = vmul.f32 %v3266, %v3259
        %v3268 = vmul.f32 %v3266, %v3260
        %v3271 = vrot.slane %v3267, 1
        %v3272 = vrot.slane %v3268, 1
        %v3275 = vadd.f32 %v3263, %v3271
        %v3276 = vadd.f32 %v3264, %v3272
        %v3277 = vadd.f32 %v3236, %v3275
        %v3278 = vadd.f32 %v3237, %v3276
        %3279 = vrot.lane.b32.xlu0 %v1703, 80
        %v3280 = vpop.permute.xlu0 %3279
        %3281 = vrot.lane.b32.xlu0 %v1704, 80
        %v3282 = vpop.permute.xlu0 %3281
        %vm3283 = vcmp.lt.s32.totalorder %v662, 80
        %v3284 = vsel %vm3283, %v3280, %v3282
        %v3285 = vsel %vm3283, %v3282, %v3280
        %v3286 = vsel %vm3161, 1, 0
        %v3287 = vsel %vm3162, 1, 0
        %vm3288 = vcmp.eq.s32.totalorder %v3286, 1
        %vm3289 = vcmp.eq.s32.totalorder %v3287, 1
        %v3290 = vsel %vm3288, %v3284, 0.0
        %v3291 = vsel %vm3289, %v3285, 0.0
        %s3292 = sld [smem:[#allocation16 + $0x5a]]
        %v3293 = vstv %s3292
        %v3294 = vmul.f32 %v3293, %v3290
        %v3295 = vmul.f32 %v3293, %v3291
        %s3296 = sld [smem:[#allocation16 + $0x5b]]
        %v3297 = vstv %s3296
        %v3298 = vmul.f32 %v3297, %v3290
        %v3299 = vmul.f32 %v3297, %v3291
        %v3302 = vrot.slane %v3298, 1
        %v3303 = vrot.slane %v3299, 1
        %v3306 = vadd.f32 %v3294, %v3302
        %v3307 = vadd.f32 %v3295, %v3303
        %v3308 = vadd.f32 %v3277, %v3306
        %v3309 = vadd.f32 %v3278, %v3307
        %3310 = vrot.lane.b32.xlu0 %v1703, 79
        %v3311 = vpop.permute.xlu0 %3310
        %3312 = vrot.lane.b32.xlu0 %v1704, 79
        %v3313 = vpop.permute.xlu0 %3312
        %vm3314 = vcmp.lt.s32.totalorder %v662, 79
        %v3315 = vsel %vm3314, %v3311, %v3313
        %v3316 = vsel %vm3314, %v3313, %v3311
        %vm3317 = vmand %vm3161, %vm945
        %vm3318 = vmand %vm3162, %vm946
        %v3319 = vsel %vm3317, 1, 0
        %v3320 = vsel %vm3318, 1, 0
        %v3321 = vlaneseq
        %v3322 = vshrl.u32 %v3321, 7
        %v3323 = vsub.s32 0, %v3322
        %v3324 = vrot.slane %v3319, %v3323
        %v3325 = vlaneseq
        %v3326 = vshrl.u32 %v3325, 7
        %v3327 = vsub.s32 0, %v3326
        %v3328 = vrot.slane %v3320, %v3327
        %vm3329 = vcmp.eq.s32.totalorder %v3324, 1
        %vm3330 = vcmp.eq.s32.totalorder %v3328, 1
        %v3331 = vsel %vm3329, %v3315, 0.0
        %v3332 = vsel %vm3330, %v3316, 0.0
        %s3333 = sld [smem:[#allocation16 + $0x5c]]
        %v3334 = vstv %s3333
        %v3335 = vmul.f32 %v3334, %v3331
        %v3336 = vmul.f32 %v3334, %v3332
        %s3337 = sld [smem:[#allocation16 + $0x5d]]
        %v3338 = vstv %s3337
        %v3339 = vmul.f32 %v3338, %v3331
        %v3340 = vmul.f32 %v3338, %v3332
        %v3343 = vrot.slane %v3339, 1
        %v3344 = vrot.slane %v3340, 1
        %v3347 = vadd.f32 %v3335, %v3343
        %v3348 = vadd.f32 %v3336, %v3344
        %v3349 = vadd.f32 %v3308, %v3347
        %v3350 = vadd.f32 %v3309, %v3348
        %3351 = vrot.lane.b32.xlu0 %v1703, 78
        %v3352 = vpop.permute.xlu0 %3351
        %3353 = vrot.lane.b32.xlu0 %v1704, 78
        %v3354 = vpop.permute.xlu0 %3353
        %vm3355 = vcmp.lt.s32.totalorder %v662, 78
        %v3356 = vsel %vm3355, %v3352, %v3354
        %v3357 = vsel %vm3355, %v3354, %v3352
        %vm3358 = vmand %vm3161, %vm1197
        %vm3359 = vmand %vm3162, %vm1198
        %v3360 = vsel %vm3358, 1, 0
        %v3361 = vsel %vm3359, 1, 0
        %v3362 = vlaneseq
        %v3363 = vshrl.u32 %v3362, 7
        %v3364 = vsub.s32 0, %v3363
        %v3365 = vrot.slane %v3360, %v3364
        %v3366 = vlaneseq
        %v3367 = vshrl.u32 %v3366, 7
        %v3368 = vsub.s32 0, %v3367
        %v3369 = vrot.slane %v3361, %v3368
        %vm3370 = vcmp.eq.s32.totalorder %v3365, 1
        %vm3371 = vcmp.eq.s32.totalorder %v3369, 1
        %v3372 = vsel %vm3370, %v3356, 0.0
        %v3373 = vsel %vm3371, %v3357, 0.0
        %s3374 = sld [smem:[#allocation16 + $0x5e]]
        %v3375 = vstv %s3374
        %v3376 = vmul.f32 %v3375, %v3372
        %v3377 = vmul.f32 %v3375, %v3373
        %s3378 = sld [smem:[#allocation16 + $0x5f]]
        %v3379 = vstv %s3378
        %v3380 = vmul.f32 %v3379, %v3372
        %v3381 = vmul.f32 %v3379, %v3373
        %v3384 = vrot.slane %v3380, 1
        %v3385 = vrot.slane %v3381, 1
        %v3388 = vadd.f32 %v3376, %v3384
        %v3389 = vadd.f32 %v3377, %v3385
        %v3390 = vadd.f32 %v3349, %v3388
        %v3391 = vadd.f32 %v3350, %v3389
        %3392 = vrot.lane.b32.xlu0 %v1703, 77
        %v3393 = vpop.permute.xlu0 %3392
        %3394 = vrot.lane.b32.xlu0 %v1704, 77
        %v3395 = vpop.permute.xlu0 %3394
        %vm3396 = vcmp.lt.s32.totalorder %v662, 77
        %v3397 = vsel %vm3396, %v3393, %v3395
        %v3398 = vsel %vm3396, %v3395, %v3393
        %vm3399 = vmand %vm3161, %vm1970
        %vm3400 = vmand %vm3162, %vm1971
        %v3401 = vsel %vm3399, 1, 0
        %v3402 = vsel %vm3400, 1, 0
        %v3403 = vlaneseq
        %v3404 = vshrl.u32 %v3403, 7
        %v3405 = vsub.s32 0, %v3404
        %v3406 = vrot.slane %v3401, %v3405
        %v3407 = vlaneseq
        %v3408 = vshrl.u32 %v3407, 7
        %v3409 = vsub.s32 0, %v3408
        %v3410 = vrot.slane %v3402, %v3409
        %vm3411 = vcmp.eq.s32.totalorder %v3406, 1
        %vm3412 = vcmp.eq.s32.totalorder %v3410, 1
        %v3413 = vsel %vm3411, %v3397, 0.0
        %v3414 = vsel %vm3412, %v3398, 0.0
        %s3415 = sld [smem:[#allocation16 + $0x60]]
        %v3416 = vstv %s3415
        %v3417 = vmul.f32 %v3416, %v3413
        %v3418 = vmul.f32 %v3416, %v3414
        %s3419 = sld [smem:[#allocation16 + $0x61]]
        %v3420 = vstv %s3419
        %v3421 = vmul.f32 %v3420, %v3413
        %v3422 = vmul.f32 %v3420, %v3414
        %v3425 = vrot.slane %v3421, 1
        %v3426 = vrot.slane %v3422, 1
        %v3429 = vadd.f32 %v3417, %v3425
        %v3430 = vadd.f32 %v3418, %v3426
        %v3431 = vadd.f32 %v3390, %v3429
        %v3432 = vadd.f32 %v3391, %v3430
        %v3433 = vxor.u32 %v3431, 2147483648
        %v3434 = vxor.u32 %v3432, 2147483648
        %v3435 = vmul.f32 %v3433, 1.442695
        %v3436 = vpow.pop %v3435
        %v3437 = vmul.f32 %v3434, 1.442695
        %v3438 = vpow.pop %v3437
        %v3439 = vadd.f32 %v3436, 1.0
        %v3440 = vadd.f32 %v3438, 1.0
        %v3441 = vrcp.pop %v3439
        %v3442 = vmul.f32 1.0, %v3441
        %v3443 = vrcp.pop %v3440
        %v3444 = vmul.f32 1.0, %v3443
        %v3445 = vlaneseq
        %v3446 = vshrl.u32 %v3445, 7
        %v3447 = vsub.s32 0, %v3446
        %v3448 = vrot.slane %v3442, %v3447
        %v3449 = vlaneseq
        %v3450 = vshrl.u32 %v3449, 7
        %v3451 = vsub.s32 0, %v3450
        %v3452 = vrot.slane %v3444, %v3451
        %v3453 = vmul.f32 %v876, %v3448
        %v3454 = vmul.f32 %v877, %v3452
        %v3455 = vadd.f32 %v693, %v3453
        %v3456 = vadd.f32 %v694, %v3454
        %v3457 = vadd.f32 %v3455, %v1673
        %v3458 = vadd.f32 %v3456, %v1674
        %v3459 = vmax.f32 %v3457, 0.0
        %v3460 = vmax.f32 %v3458, 0.0
        %v3461 = vld [vmem:[%s15] sm:$0xff]
        %v3462 = vld [vmem:[%s15 + $0x8] sm:$0xff]
        %v3463 = vld [vmem:[%s16] sm:$0xff]
        %v3464 = vld [vmem:[%s16 + $0x8] sm:$0xff]
        %3466 = vset.pattern.permute.xlu0 0
        %3467 = vperm.xlu0 %3466, %v3463
        %v3468 = vpop.permute.xlu0 %3467
        %3471 = vset.pattern.permute.xlu0 0
        %3472 = vperm.xlu0 %3471, %v3464
        %v3473 = vpop.permute.xlu0 %3472
        %v3476 = vsel %vm706, %v3461, 0
        %v3479 = vsel %vm706, %v3462, 0
        %3481 = vmatprep.subr.mxu0 0.0
        %3482 = vmatpush1.msra.mxu0 0.0
        %3483 = vmatprep.subr.mxu0 0.0
        %3484 = vmatpush1.msra.mxu0 0.0
        %3485 = vmatprep.subr.mxu0 0.0
        %3486 = vmatpush1.msra.mxu0 0.0
        %3487 = vmatprep.subr.mxu0 0.0
        %3488 = vmatpush1.msra.mxu0 0.0
        %3489 = vmatprep.subr.mxu0 0.0
        %3490 = vmatpush1.msra.mxu0 0.0
        %3491 = vmatprep.subr.mxu0 0.0
        %3492 = vmatpush1.msra.mxu0 0.0
        %3493 = vmatprep.subr.mxu0 0.0
        %3494 = vmatpush1.msra.mxu0 0.0
        %3495 = vmatprep.subr.mxu0 0.0
        %3496 = vmatpush1.msra.mxu0 0.0
        %3497 = vmatprep.subr.mxu0 0.0
        %3498 = vmatpush1.msra.mxu0 0.0
        %3499 = vmatprep.subr.mxu0 0.0
        %3500 = vmatpush1.msra.mxu0 0.0
        %3501 = vmatprep.subr.mxu0 0.0
        %3502 = vmatpush1.msra.mxu0 0.0
        %3503 = vmatprep.subr.mxu0 0.0
        %3504 = vmatpush1.msra.mxu0 0.0
        %3505 = vmatprep.subr.mxu0 0.0
        %3506 = vmatpush1.msra.mxu0 0.0
        %3507 = vmatprep.subr.mxu0 0.0
        %3508 = vmatpush1.msra.mxu0 0.0
        %3509 = vmatprep.subr.mxu0 0.0
        %3510 = vmatpush1.msra.mxu0 0.0
        %3511 = vmatprep.subr.mxu0 %v3460
        %3512 = vmatpush1.msra.mxu0 %v3459
        %3513 = vmatprep.subr.mxu0 0.0
        %3514 = vmatpush2.msra.mxu0 0.0
        %3515 = vmatprep.subr.mxu0 0.0
        %3516 = vmatpush2.msra.mxu0 0.0
        %3517 = vmatprep.subr.mxu0 0.0
        %3518 = vmatpush2.msra.mxu0 0.0
        %3519 = vmatprep.subr.mxu0 0.0
        %3520 = vmatpush2.msra.mxu0 0.0
        %3521 = vmatprep.subr.mxu0 0.0
        %3522 = vmatpush2.msra.mxu0 0.0
        %3523 = vmatprep.subr.mxu0 0.0
        %3524 = vmatpush2.msra.mxu0 0.0
        %3525 = vmatprep.subr.mxu0 0.0
        %3526 = vmatpush2.msra.mxu0 0.0
        %3527 = vmatprep.subr.mxu0 0.0
        %3528 = vmatpush2.msra.mxu0 0.0
        %3529 = vmatprep.subr.mxu0 0.0
        %3530 = vmatpush2.msra.mxu0 0.0
        %3531 = vmatprep.subr.mxu0 0.0
        %3532 = vmatpush2.msra.mxu0 0.0
        %3533 = vmatprep.subr.mxu0 0.0
        %3534 = vmatpush2.msra.mxu0 0.0
        %3535 = vmatprep.subr.mxu0 0.0
        %3536 = vmatpush2.msra.mxu0 0.0
        %3537 = vmatprep.subr.mxu0 0.0
        %3538 = vmatpush2.msra.mxu0 0.0
        %3539 = vmatprep.subr.mxu0 0.0
        %3540 = vmatpush2.msra.mxu0 0.0
        %3541 = vmatprep.subr.mxu0 0.0
        %3542 = vmatpush2.msra.mxu0 0.0
        %3543 = vmatprep.subr.mxu0 0.0
        %3544 = vmatpush2.msra.mxu0 0.0
        %3545 = vmatprep.mubr.f32.mxu0 0.0
        %3546 = vmatmul.mubr.f32.gmra.mxu0 %v3476
        %v3547 = vpop.f32.mrf.mxu0
        %v3548 = vadd.f32 %v3468, %v3547
        %v3549 = vpop.f32.mrf.mxu0
        %v3550 = vadd.f32 %v3468, %v3549
        %3551 = vmatprep.mubr.f32.mxu0 0.0
        %3552 = vmatmul.mubr.f32.gmra.mxu0 %v3479
        %v3553 = vpop.f32.mrf.mxu0
        %v3554 = vadd.f32 %v3473, %v3553
        %v3555 = vpop.f32.mrf.mxu0
        %v3556 = vadd.f32 %v3473, %v3555
        %3557 = vdwg.mxu0
        %v3558 = vmax.f32 %v3548, 0.0
        %v3559 = vmax.f32 %v3550, 0.0
        %v3560 = vmax.f32 %v3554, 0.0
        %v3561 = vmax.f32 %v3556, 0.0
        %3562 = vst [vmem:[%s660] sm:$0xff] %v3558
        %3563 = vst [vmem:[%s660 + $0x8] sm:$0xff] %v3559
        %3564 = vst [vmem:[%s660 + $0x10] sm:$0xff] %v3560
        %3565 = vst [vmem:[%s660 + $0x18] sm:$0xff] %v3561
        %p3566 = scmp.lt.s32.totalorder %s34, 1
        %s3567 = scalar_select %p3566, %s34, 1
        %s3568 = smul.addr %s3567, 4
        %s3569 = smul.addr %s3568, 8
        %s3570 = scalar_lea.vmem %s17, %s3569
        // Predicated region
        $region125: #{_lambda_.1} parent=87 // pred_check
          %p3571 = pneg %p414
        $region126: #{_lambda_.1} parent=87 // pred_check_branch
          %3573 = sbr.rel (%p3571) target = $region128
        $region127: #{_lambda_.1} parent=87 // pred_region
          _
        $region128: #{_lambda_.1} parent=87 // pred_fallthru
          _
      $region88: #{_lambda_.1} parent=5 // pred_fallthru
        _
      %p3574 = scmp.le.s32.totalorder 2, %s29
      // Predicated region
      $region129: #{_lambda_.1} parent=5 // pred_check
        %p3575 = pneg %p3574
      $region130: #{_lambda_.1} parent=5 // pred_check_branch
        %3577 = sbr.rel (%p3575) target = $region132
      $region131: #{_lambda_.1} parent=5 // pred_region
        %s3578 = ssub.s32 %s29, 2
        // Predicated region
        $region133: #{_lambda_.1} parent=131 // pred_check
          %p3579 = pneg %p420
        $region134: #{_lambda_.1} parent=131 // pred_check_branch
          %3581 = sbr.rel (%p3579) target = $region136
        $region135: #{_lambda_.1} parent=131 // pred_region
          %p3582 = scmp.lt.s32.totalorder %s35, 1
          %s3583 = scalar_select %p3582, %s35, 1
          %s3584 = smul.addr %s3583, 4
          %s3585 = smul.addr %s3584, 8
          %s3586 = scalar_lea.vmem %s17, %s3585
        $region136: #{_lambda_.1} parent=131 // pred_fallthru
          _
      $region132: #{_lambda_.1} parent=5 // pred_fallthru
        _
    $region6: #{_lambda_.1} parent=1 // loop_footer
      %s33 = sadd.s32 1, %s29
    $region7: #{_lambda_.1} parent=1 // loop_footer_branch
      %28 = sbr.rel target = $region3
    $region8: #{_lambda_.1} parent=1 // loop_exit
      _
    %3587 = vsyncpa [#allocation3], 1
    %s3588 = scalar_lea.sflag [#allocation3], 1
    %3589 = vsyncpa %s3588, 1
    %3590 = vsyncpa [#allocation6], 1
    %3591 = vsyncpa [#allocation9], 1
    %3592 = vsyncpa [#allocation12], 1
    %3593 = vsyncpa [#allocation15], 1
    %3594 = vsyncpa [#allocation4], 1
    %s3595 = scalar_lea.sflag [#allocation4], 1
    %3596 = vsyncpa %s3595, 1

</llo_original>
